<compile_context>
chip_gen: v7x
topology: tpu7x:2x2x1
jax: 0.10.0
libtpu: 0.0.40
codegen_flags: <defaults>
</compile_context>

<pallas_src>
import math
import functools

import jax
import jax.numpy as jnp
import numpy as np
from jax.experimental import pallas as pl
from jax.experimental.pallas import tpu as pltpu

# ----------------------------- config ---------------------------------------
B = 2          # batch
T = 8          # target sequence length
S = 8          # source sequence length
E = 32         # embed_dim
HEADS = 4
DH = E // HEADS
PF = 64        # pf_dim
EPS = 1e-5
SCALE = math.sqrt(float(DH))
INV_SCALE = 1.0 / SCALE
NEG_INF = -1e10

SLAB_LANES = 128               # every slab is padded lane-dense to 128

# weight-slab row offsets (all multiples of 8 -> aligned sublane slices)
RW_QKV_SA = 0                  # [E, 3E]  fused q|k|v, self-attn
RW_O_SA = RW_QKV_SA + E        # [E, E]
RW_Q_CA = RW_O_SA + E          # [E, E]
RW_KV_CA = RW_Q_CA + E         # [E, 2E]  fused k|v, cross-attn
RW_O_CA = RW_KV_CA + E         # [E, E]
RW_FF1 = RW_O_CA + E           # [E, PF]
RW_FF2 = RW_FF1 + E            # [PF, E]
W_SLAB_ROWS = RW_FF2 + PF      # 256

# bias-slab rows, 8 apart so every single-row slice is sublane aligned
BSTRIDE = 8
(RB_QKV_SA, RB_O_SA, RB_Q_CA, RB_KV_CA, RB_O_CA,
 RB_FF1, RB_FF2, RB_LN_G, RB_LN_B) = (i * BSTRIDE for i in range(9))
B_SLAB_ROWS = 9 * BSTRIDE      # 72


# ----------------------------- kernel ---------------------------------------
def decoder_layer_kernel(x_ref, w_ref, b_ref, mb_ref, out_ref):
    # x_ref  : [B*T + B*S, E]  rows 0..B*T-1 = trg, rest = src (flattened in wrapper)
    # w_ref  : [256, 128]      packed weight slab
    # b_ref  : [72, 128]       packed bias / LayerNorm slab
    # mb_ref : [B, T, T+S]     additive mask bias (0 / -1e10), precomputed
    f32 = jnp.float32
    trg = x_ref[0:B * T, :]                 # [B*T, E]
    src = x_ref[B * T:B * T + B * S, :]     # [B*S, E]

    gamma = b_ref[RB_LN_G:RB_LN_G + 1, 0:E]   # [1, E]
    beta = b_ref[RB_LN_B:RB_LN_B + 1, 0:E]    # [1, E]

    def layer_norm(x):
        mean = jnp.mean(x, axis=-1, keepdims=True)
        cen = x - mean
        var = jnp.mean(cen * cen, axis=-1, keepdims=True)
        return cen * jax.lax.rsqrt(var + EPS) * gamma + beta

    def attend(q_proj, kv_proj, k_off, v_off, lq, lk, bias, wo, bo):
        # q_proj : [B*lq, >=E] with head-h queries at cols h*DH:(h+1)*DH
        # kv_proj: [B*lk, *]   keys at k_off + h*DH, values at v_off + h*DH
        # bias   : [B, lq, lk] additive mask bias (head-invariant)
        ctx_heads = []
        for h in range(HEADS):              # static unroll over the 4 heads
            lo = h * DH
            qh = q_proj[:, lo:lo + DH].reshape(B, lq, DH)
            kh = kv_proj[:, k_off + lo:k_off + lo + DH].reshape(B, lk, DH)
            vh = kv_proj[:, v_off + lo:v_off + lo + DH].reshape(B, lk, DH)
            e = jnp.einsum('bqd,bkd->bqk', qh, kh,
                           preferred_element_type=f32) * INV_SCALE
            e = e + bias
            e = e - jnp.max(e, axis=-1, keepdims=True)
            p = jnp.exp(e)
            p = p * pl.reciprocal(jnp.sum(p, axis=-1, keepdims=True),
                                  approx=False)
            ctx = jnp.einsum('bqk,bkd->bqd', p, vh, preferred_element_type=f32)
            ctx_heads.append(ctx.reshape(B * lq, DH))
        # Fold the head concat into ONE output projection.
        ctx_full = jnp.concatenate(ctx_heads, axis=-1)          # [B*lq, E]
        return jnp.dot(ctx_full, wo, preferred_element_type=f32) + bo

    # ---- sublayer 1: self-attention (fused QKV) + residual + LN -------------
    qkv = jnp.dot(trg, w_ref[RW_QKV_SA:RW_QKV_SA + E, 0:3 * E],
                  preferred_element_type=f32) \
        + b_ref[RB_QKV_SA:RB_QKV_SA + 1, 0:3 * E]               # [B*T, 3E]
    sa = attend(qkv, qkv, E, 2 * E, T, T,
                mb_ref[:, :, 0:T],
                w_ref[RW_O_SA:RW_O_SA + E, 0:E],
                b_ref[RB_O_SA:RB_O_SA + 1, 0:E])
    x = layer_norm(trg + sa)

    # ---- sublayer 2: cross-attention (fused KV) + residual + LN -------------
    q_ca = jnp.dot(x, w_ref[RW_Q_CA:RW_Q_CA + E, 0:E],
                   preferred_element_type=f32) \
         + b_ref[RB_Q_CA:RB_Q_CA + 1, 0:E]                      # [B*T, E]
    kv_ca = jnp.dot(src, w_ref[RW_KV_CA:RW_KV_CA + E, 0:2 * E],
                    preferred_element_type=f32) \
          + b_ref[RB_KV_CA:RB_KV_CA + 1, 0:2 * E]               # [B*S, 2E]
    ca = attend(q_ca, kv_ca, 0, E, T, S,
                mb_ref[:, :, T:T + S],
                w_ref[RW_O_CA:RW_O_CA + E, 0:E],
                b_ref[RB_O_CA:RB_O_CA + 1, 0:E])
    x = layer_norm(x + ca)

    # ---- sublayer 3: position-wise feed-forward + residual + LN -------------
    h1 = jnp.maximum(
        jnp.dot(x, w_ref[RW_FF1:RW_FF1 + E, 0:PF],
                preferred_element_type=f32)
        + b_ref[RB_FF1:RB_FF1 + 1, 0:PF], 0.0)
    ffo = jnp.dot(h1, w_ref[RW_FF2:RW_FF2 + PF, 0:E],
                  preferred_element_type=f32) \
        + b_ref[RB_FF2:RB_FF2 + 1, 0:E]
    x = layer_norm(x + ffo)

    out_ref[...] = x.astype(out_ref.dtype)


# ----------------------------- packing (done once, at "module init") ---------
def _lane_pad(a):
    a = jnp.asarray(a, jnp.float32)
    return jnp.pad(a, ((0, 0), (0, SLAB_LANES - a.shape[1])))


def _bias_block(b):
    b = jnp.asarray(b, jnp.float32).reshape(1, -1)
    return jnp.pad(b, ((0, BSTRIDE - 1), (0, SLAB_LANES - b.shape[1])))


def pack_params(params):
    """Pack all weights/biases/LN params into two lane-dense f32 slabs."""
    (sa, ca, ff, ln) = params
    sa_wq, sa_bq, sa_wk, sa_bk, sa_wv, sa_bv, sa_wo, sa_bo = sa
    ca_wq, ca_bq, ca_wk, ca_bk, ca_wv, ca_bv, ca_wo, ca_bo = ca
    ff_w1, ff_b1, ff_w2, ff_b2 = ff
    ln_g, ln_b = ln

    w_slab = jnp.concatenate([
        _lane_pad(jnp.concatenate([sa_wq, sa_wk, sa_wv], axis=1)),  # RW_QKV_SA
        _lane_pad(sa_wo),                                           # RW_O_SA
        _lane_pad(ca_wq),                                           # RW_Q_CA
        _lane_pad(jnp.concatenate([ca_wk, ca_wv], axis=1)),         # RW_KV_CA
        _lane_pad(ca_wo),                                           # RW_O_CA
        _lane_pad(ff_w1),                                           # RW_FF1
        _lane_pad(ff_w2),                                           # RW_FF2
    ], axis=0)
    assert w_slab.shape == (W_SLAB_ROWS, SLAB_LANES)

    b_slab = jnp.concatenate([
        _bias_block(jnp.concatenate([sa_bq, sa_bk, sa_bv], axis=1)),  # RB_QKV_SA
        _bias_block(sa_bo),                                           # RB_O_SA
        _bias_block(ca_bq),                                           # RB_Q_CA
        _bias_block(jnp.concatenate([ca_bk, ca_bv], axis=1)),         # RB_KV_CA
        _bias_block(ca_bo),                                           # RB_O_CA
        _bias_block(ff_b1),                                           # RB_FF1
        _bias_block(ff_b2),                                           # RB_FF2
        _bias_block(ln_g),                                            # RB_LN_G
        _bias_block(ln_b),                                            # RB_LN_B
    ], axis=0)
    assert b_slab.shape == (B_SLAB_ROWS, SLAB_LANES)
    return w_slab, b_slab


# ----------------------------- wrapper ---------------------------------------
@jax.jit
def decoder_layer(embed_trg, embed_src, trg_mask, src_mask, packed_params):
    w_slab, b_slab = packed_params

    # Additive mask bias precomputed outside the kernel; packed into one slab.
    # (`mask == 0.0` mirrors PyTorch's `masked_fill(mask == 0, -1e10)`.)
    bias_sa = jnp.where(trg_mask == 0.0, jnp.float32(NEG_INF), jnp.float32(0.0))
    bias_ca = jnp.where(src_mask == 0.0, jnp.float32(NEG_INF), jnp.float32(0.0))
    mask_bias = jnp.concatenate([bias_sa, bias_ca], axis=-1)       # [B, T, T+S]

    # Flatten batch*seq in the wrapper; trg and src stacked into one slab.
    x_in = jnp.concatenate([embed_trg.reshape(B * T, E),
                            embed_src.reshape(B * S, E)], axis=0)  # [B*(T+S), E]

    vmem = functools.partial(pl.BlockSpec,
                             memory_space=pltpu.MemorySpace.VMEM)
    out_flat = pl.pallas_call(
        decoder_layer_kernel,
        out_shape=jax.ShapeDtypeStruct((B * T, E), jnp.float32),
        in_specs=[vmem(), vmem(), vmem(), vmem()],
        out_specs=vmem(),
    )(x_in, w_slab, b_slab, mask_bias)
    return out_flat.reshape(B, T, E)


# ----------------------------- reference (pure JAX) ---------------------------
def _mha_ref(q_in, kv_in, mask, wq, bq, wk, bk, wv, bv, wo, bo):
    b, t, e = q_in.shape
    Q = (q_in @ wq + bq).reshape(b, t, HEADS, DH).transpose(0, 2, 1, 3)
    K = (kv_in @ wk + bk).reshape(b, -1, HEADS, DH).transpose(0, 2, 1, 3)
    V = (kv_in @ wv + bv).reshape(b, -1, HEADS, DH).transpose(0, 2, 1, 3)
    energy = jnp.einsum('bhtd,bhsd->bhts', Q, K) / SCALE
    energy = jnp.where(mask[:, None] == 0.0, NEG_INF, energy)
    attn = jax.nn.softmax(energy, axis=-1)
    x = jnp.einsum('bhts,bhsd->bhtd', attn, V)
    x = x.transpose(0, 2, 1, 3).reshape(b, t, e)
    return x @ wo + bo


def _ln_ref(x, g, b):
    mean = jnp.mean(x, axis=-1, keepdims=True)
    var = jnp.mean((x - mean) ** 2, axis=-1, keepdims=True)
    return (x - mean) * jax.lax.rsqrt(var + EPS) * g + b


def decoder_layer_ref(embed_trg, embed_src, trg_mask, src_mask, params):
    (sa, ca, ff, ln) = params
    g, b = ln
    x = _ln_ref(embed_trg + _mha_ref(embed_trg, embed_trg, trg_mask, *sa), g, b)
    x = _ln_ref(x + _mha_ref(x, embed_src, src_mask, *ca), g, b)
    h = jnp.maximum(x @ ff[0] + ff[1], 0.0)
    x = _ln_ref(x + (h @ ff[2] + ff[3]), g, b)
    return x


# ----------------------------- setup / run -----------------------------------
def _init_params(key):
    def lin(k, din, dout, scale=0.08):
        kw, kb = jax.random.split(k)
        w = jax.random.normal(kw, (din, dout), jnp.float32) * scale   # [in,out]
        b = jax.random.normal(kb, (1, dout), jnp.float32) * scale
        return w, b

    keys = jax.random.split(key, 12)
    sa = []
    for i in range(4):                       # q, k, v, out projections
        w, b = lin(keys[i], E, E)
        sa += [w, b]
    ca = []
    for i in range(4):
        w, b = lin(keys[4 + i], E, E)
        ca += [w, b]
    w1, b1 = lin(keys[8], E, PF)
    w2, b2 = lin(keys[9], PF, E)
    ff = [w1, b1, w2, b2]
    ln_g = jnp.ones((1, E), jnp.float32)
    ln_b = jnp.zeros((1, E), jnp.float32)
    ln = [ln_g, ln_b]
    return (tuple(sa), tuple(ca), tuple(ff), tuple(ln))


if __name__ == "__main__":
    key = jax.random.PRNGKey(0)
    k_trg, k_src, k_par = jax.random.split(key, 3)

    embed_trg = jax.random.normal(k_trg, (B, T, E), jnp.float32)
    embed_src = jax.random.normal(k_src, (B, S, E), jnp.float32)

    # causal mask for self-attention, full-visibility mask for cross-attention
    trg_mask = jnp.broadcast_to(
        jnp.tril(jnp.ones((T, T), jnp.float32))[None], (B, T, T))
    src_mask = jnp.ones((B, T, S), jnp.float32)

    params = _init_params(k_par)
    packed = pack_params(params)             # packed once, at "module init"

    out = decoder_layer(embed_trg, embed_src, trg_mask, src_mask, packed)
    out = jax.block_until_ready(out)

    ref = decoder_layer_ref(embed_trg, embed_src, trg_mask, src_mask, params)
    # Tolerance covers MXU accumulation-order differences vs. the XLA reference.
    np.testing.assert_allclose(np.asarray(out), np.asarray(ref),
                               rtol=2e-3, atol=2e-3)

    # TODO(synk): dropout is a no-op here (module assumed in eval mode); a
    # training-mode variant would use pltpu.prng_seed / prng_random_bits.
    print("KERNEL_OK")
</pallas_src>

<mosaic_0001>
module attributes {stable_mosaic.version = 11 : i64} {
  func.func @decoder_layer_kernel(%arg0: memref<32x32xf32, #tpu.memory_space<vmem>>, %arg1: memref<256x128xf32, #tpu.memory_space<vmem>>, %arg2: memref<72x128xf32, #tpu.memory_space<vmem>>, %arg3: memref<2x8x16xf32, #tpu.memory_space<vmem>>, %arg4: memref<16x32xf32, #tpu.memory_space<vmem>>) attributes {dimension_semantics = [], scalar_prefetch = 0 : i64, scratch_operands = 0 : i64, tpu.core_type = #tpu.core_type<tc>} {
    %c0 = arith.constant 0 : index
    %c0_0 = arith.constant 0 : index
    %0 = vector.load %arg0[%c0, %c0_0] : memref<32x32xf32, #tpu.memory_space<vmem>>, vector<16x32xf32>
    %c16 = arith.constant 16 : index
    %c0_1 = arith.constant 0 : index
    %1 = vector.load %arg0[%c16, %c0_1] : memref<32x32xf32, #tpu.memory_space<vmem>>, vector<16x32xf32>
    %c56 = arith.constant 56 : index
    %c0_2 = arith.constant 0 : index
    %2 = vector.load %arg2[%c56, %c0_2] : memref<72x128xf32, #tpu.memory_space<vmem>>, vector<1x32xf32>
    %c64 = arith.constant 64 : index
    %c0_3 = arith.constant 0 : index
    %3 = vector.load %arg2[%c64, %c0_3] : memref<72x128xf32, #tpu.memory_space<vmem>>, vector<1x32xf32>
    %c0_4 = arith.constant 0 : index
    %c0_5 = arith.constant 0 : index
    %4 = vector.load %arg1[%c0_4, %c0_5] : memref<256x128xf32, #tpu.memory_space<vmem>>, vector<32x96xf32>
    %cst = arith.constant dense<0.000000e+00> : vector<16x96xf32>
    %5 = tpu.matmul %0, %4, %cst {dimension_numbers = #tpu.dot_dimension_numbers<[1], [0], [0], [1], [0, 0, 1, 1], [], []>} : vector<16x32xf32>, vector<32x96xf32>, vector<16x96xf32> -> vector<16x96xf32>
    %c0_6 = arith.constant 0 : index
    %c0_7 = arith.constant 0 : index
    %6 = vector.load %arg2[%c0_6, %c0_7] : memref<72x128xf32, #tpu.memory_space<vmem>>, vector<1x96xf32>
    %7 = vector.broadcast %6 : vector<1x96xf32> to vector<16x96xf32>
    %8 = arith.addf %5, %7 : vector<16x96xf32>
    %c0_8 = arith.constant 0 : index
    %c0_9 = arith.constant 0 : index
    %c0_10 = arith.constant 0 : index
    %9 = vector.load %arg3[%c0_8, %c0_9, %c0_10] : memref<2x8x16xf32, #tpu.memory_space<vmem>>, vector<2x8x8xf32>
    %c32 = arith.constant 32 : index
    %c0_11 = arith.constant 0 : index
    %10 = vector.load %arg1[%c32, %c0_11] : memref<256x128xf32, #tpu.memory_space<vmem>>, vector<32x32xf32>
    %c8 = arith.constant 8 : index
    %c0_12 = arith.constant 0 : index
    %11 = vector.load %arg2[%c8, %c0_12] : memref<72x128xf32, #tpu.memory_space<vmem>>, vector<1x32xf32>
    %12 = vector.extract_strided_slice %8 {offsets = [0, 0], sizes = [16, 8], strides = [1, 1]} : vector<16x96xf32> to vector<16x8xf32>
    %13 = vector.shape_cast %12 : vector<16x8xf32> to vector<2x8x8xf32>
    %14 = vector.extract_strided_slice %8 {offsets = [0, 32], sizes = [16, 8], strides = [1, 1]} : vector<16x96xf32> to vector<16x8xf32>
    %15 = vector.shape_cast %14 : vector<16x8xf32> to vector<2x8x8xf32>
    %16 = vector.extract_strided_slice %8 {offsets = [0, 64], sizes = [16, 8], strides = [1, 1]} : vector<16x96xf32> to vector<16x8xf32>
    %17 = vector.shape_cast %16 : vector<16x8xf32> to vector<2x8x8xf32>
    "tpu.trace_start"() <{level = 10 : i32, message = "bqd,bkd->bqk"}> : () -> ()
    %cst_13 = arith.constant dense<0.000000e+00> : vector<2x8x8xf32>
    %18 = tpu.matmul %13, %15, %cst_13 {dimension_numbers = #tpu.dot_dimension_numbers<[2], [2], [1], [1], [0, 0, 0, 1, 1, 1], [0], [0]>} : vector<2x8x8xf32>, vector<2x8x8xf32>, vector<2x8x8xf32> -> vector<2x8x8xf32>
    "tpu.trace_stop"() : () -> ()
    %cst_14 = arith.constant 0.353553385 : f32
    %19 = vector.broadcast %cst_14 : f32 to vector<2x8x8xf32>
    %20 = arith.mulf %18, %19 : vector<2x8x8xf32>
    %21 = arith.addf %20, %9 : vector<2x8x8xf32>
    %cst_15 = arith.constant dense<0xFF800000> : vector<2x8xf32>
    %22 = vector.multi_reduction <maximumf>, %21, %cst_15 [2] : vector<2x8x8xf32> to vector<2x8xf32>
    %23 = vector.shape_cast %22 : vector<2x8xf32> to vector<2x8x1xf32>
    %24 = vector.broadcast %23 : vector<2x8x1xf32> to vector<2x8x8xf32>
    %25 = arith.subf %21, %24 : vector<2x8x8xf32>
    %26 = math.exp %25 : vector<2x8x8xf32>
    %cst_16 = arith.constant dense<0.000000e+00> : vector<2x8xf32>
    %27 = vector.multi_reduction <add>, %26, %cst_16 [2] : vector<2x8x8xf32> to vector<2x8xf32>
    %28 = vector.shape_cast %27 : vector<2x8xf32> to vector<2x8x1xf32>
    %29 = tpu.reciprocal %28 : vector<2x8x1xf32> -> vector<2x8x1xf32>
    %30 = vector.broadcast %29 : vector<2x8x1xf32> to vector<2x8x8xf32>
    %31 = arith.mulf %26, %30 : vector<2x8x8xf32>
    "tpu.trace_start"() <{level = 10 : i32, message = "bqk,bkd->bqd"}> : () -> ()
    %cst_17 = arith.constant dense<0.000000e+00> : vector<2x8x8xf32>
    %32 = tpu.matmul %31, %17, %cst_17 {dimension_numbers = #tpu.dot_dimension_numbers<[2], [1], [1], [2], [0, 0, 0, 1, 1, 2], [0], [0]>} : vector<2x8x8xf32>, vector<2x8x8xf32>, vector<2x8x8xf32> -> vector<2x8x8xf32>
    "tpu.trace_stop"() : () -> ()
    %33 = vector.shape_cast %32 : vector<2x8x8xf32> to vector<16x8xf32>
    %34 = vector.extract_strided_slice %8 {offsets = [0, 8], sizes = [16, 8], strides = [1, 1]} : vector<16x96xf32> to vector<16x8xf32>
    %35 = vector.shape_cast %34 : vector<16x8xf32> to vector<2x8x8xf32>
    %36 = vector.extract_strided_slice %8 {offsets = [0, 40], sizes = [16, 8], strides = [1, 1]} : vector<16x96xf32> to vector<16x8xf32>
    %37 = vector.shape_cast %36 : vector<16x8xf32> to vector<2x8x8xf32>
    %38 = vector.extract_strided_slice %8 {offsets = [0, 72], sizes = [16, 8], strides = [1, 1]} : vector<16x96xf32> to vector<16x8xf32>
    %39 = vector.shape_cast %38 : vector<16x8xf32> to vector<2x8x8xf32>
    "tpu.trace_start"() <{level = 10 : i32, message = "bqd,bkd->bqk"}> : () -> ()
    %cst_18 = arith.constant dense<0.000000e+00> : vector<2x8x8xf32>
    %40 = tpu.matmul %35, %37, %cst_18 {dimension_numbers = #tpu.dot_dimension_numbers<[2], [2], [1], [1], [0, 0, 0, 1, 1, 1], [0], [0]>} : vector<2x8x8xf32>, vector<2x8x8xf32>, vector<2x8x8xf32> -> vector<2x8x8xf32>
    "tpu.trace_stop"() : () -> ()
    %cst_19 = arith.constant 0.353553385 : f32
    %41 = vector.broadcast %cst_19 : f32 to vector<2x8x8xf32>
    %42 = arith.mulf %40, %41 : vector<2x8x8xf32>
    %43 = arith.addf %42, %9 : vector<2x8x8xf32>
    %cst_20 = arith.constant dense<0xFF800000> : vector<2x8xf32>
    %44 = vector.multi_reduction <maximumf>, %43, %cst_20 [2] : vector<2x8x8xf32> to vector<2x8xf32>
    %45 = vector.shape_cast %44 : vector<2x8xf32> to vector<2x8x1xf32>
    %46 = vector.broadcast %45 : vector<2x8x1xf32> to vector<2x8x8xf32>
    %47 = arith.subf %43, %46 : vector<2x8x8xf32>
    %48 = math.exp %47 : vector<2x8x8xf32>
    %cst_21 = arith.constant dense<0.000000e+00> : vector<2x8xf32>
    %49 = vector.multi_reduction <add>, %48, %cst_21 [2] : vector<2x8x8xf32> to vector<2x8xf32>
    %50 = vector.shape_cast %49 : vector<2x8xf32> to vector<2x8x1xf32>
    %51 = tpu.reciprocal %50 : vector<2x8x1xf32> -> vector<2x8x1xf32>
    %52 = vector.broadcast %51 : vector<2x8x1xf32> to vector<2x8x8xf32>
    %53 = arith.mulf %48, %52 : vector<2x8x8xf32>
    "tpu.trace_start"() <{level = 10 : i32, message = "bqk,bkd->bqd"}> : () -> ()
    %cst_22 = arith.constant dense<0.000000e+00> : vector<2x8x8xf32>
    %54 = tpu.matmul %53, %39, %cst_22 {dimension_numbers = #tpu.dot_dimension_numbers<[2], [1], [1], [2], [0, 0, 0, 1, 1, 2], [0], [0]>} : vector<2x8x8xf32>, vector<2x8x8xf32>, vector<2x8x8xf32> -> vector<2x8x8xf32>
    "tpu.trace_stop"() : () -> ()
    %55 = vector.shape_cast %54 : vector<2x8x8xf32> to vector<16x8xf32>
    %56 = vector.extract_strided_slice %8 {offsets = [0, 16], sizes = [16, 8], strides = [1, 1]} : vector<16x96xf32> to vector<16x8xf32>
    %57 = vector.shape_cast %56 : vector<16x8xf32> to vector<2x8x8xf32>
    %58 = vector.extract_strided_slice %8 {offsets = [0, 48], sizes = [16, 8], strides = [1, 1]} : vector<16x96xf32> to vector<16x8xf32>
    %59 = vector.shape_cast %58 : vector<16x8xf32> to vector<2x8x8xf32>
    %60 = vector.extract_strided_slice %8 {offsets = [0, 80], sizes = [16, 8], strides = [1, 1]} : vector<16x96xf32> to vector<16x8xf32>
    %61 = vector.shape_cast %60 : vector<16x8xf32> to vector<2x8x8xf32>
    "tpu.trace_start"() <{level = 10 : i32, message = "bqd,bkd->bqk"}> : () -> ()
    %cst_23 = arith.constant dense<0.000000e+00> : vector<2x8x8xf32>
    %62 = tpu.matmul %57, %59, %cst_23 {dimension_numbers = #tpu.dot_dimension_numbers<[2], [2], [1], [1], [0, 0, 0, 1, 1, 1], [0], [0]>} : vector<2x8x8xf32>, vector<2x8x8xf32>, vector<2x8x8xf32> -> vector<2x8x8xf32>
    "tpu.trace_stop"() : () -> ()
    %cst_24 = arith.constant 0.353553385 : f32
    %63 = vector.broadcast %cst_24 : f32 to vector<2x8x8xf32>
    %64 = arith.mulf %62, %63 : vector<2x8x8xf32>
    %65 = arith.addf %64, %9 : vector<2x8x8xf32>
    %cst_25 = arith.constant dense<0xFF800000> : vector<2x8xf32>
    %66 = vector.multi_reduction <maximumf>, %65, %cst_25 [2] : vector<2x8x8xf32> to vector<2x8xf32>
    %67 = vector.shape_cast %66 : vector<2x8xf32> to vector<2x8x1xf32>
    %68 = vector.broadcast %67 : vector<2x8x1xf32> to vector<2x8x8xf32>
    %69 = arith.subf %65, %68 : vector<2x8x8xf32>
    %70 = math.exp %69 : vector<2x8x8xf32>
    %cst_26 = arith.constant dense<0.000000e+00> : vector<2x8xf32>
    %71 = vector.multi_reduction <add>, %70, %cst_26 [2] : vector<2x8x8xf32> to vector<2x8xf32>
    %72 = vector.shape_cast %71 : vector<2x8xf32> to vector<2x8x1xf32>
    %73 = tpu.reciprocal %72 : vector<2x8x1xf32> -> vector<2x8x1xf32>
    %74 = vector.broadcast %73 : vector<2x8x1xf32> to vector<2x8x8xf32>
    %75 = arith.mulf %70, %74 : vector<2x8x8xf32>
    "tpu.trace_start"() <{level = 10 : i32, message = "bqk,bkd->bqd"}> : () -> ()
    %cst_27 = arith.constant dense<0.000000e+00> : vector<2x8x8xf32>
    %76 = tpu.matmul %75, %61, %cst_27 {dimension_numbers = #tpu.dot_dimension_numbers<[2], [1], [1], [2], [0, 0, 0, 1, 1, 2], [0], [0]>} : vector<2x8x8xf32>, vector<2x8x8xf32>, vector<2x8x8xf32> -> vector<2x8x8xf32>
    "tpu.trace_stop"() : () -> ()
    %77 = vector.shape_cast %76 : vector<2x8x8xf32> to vector<16x8xf32>
    %78 = vector.extract_strided_slice %8 {offsets = [0, 24], sizes = [16, 8], strides = [1, 1]} : vector<16x96xf32> to vector<16x8xf32>
    %79 = vector.shape_cast %78 : vector<16x8xf32> to vector<2x8x8xf32>
    %80 = vector.extract_strided_slice %8 {offsets = [0, 56], sizes = [16, 8], strides = [1, 1]} : vector<16x96xf32> to vector<16x8xf32>
    %81 = vector.shape_cast %80 : vector<16x8xf32> to vector<2x8x8xf32>
    %82 = vector.extract_strided_slice %8 {offsets = [0, 88], sizes = [16, 8], strides = [1, 1]} : vector<16x96xf32> to vector<16x8xf32>
    %83 = vector.shape_cast %82 : vector<16x8xf32> to vector<2x8x8xf32>
    "tpu.trace_start"() <{level = 10 : i32, message = "bqd,bkd->bqk"}> : () -> ()
    %cst_28 = arith.constant dense<0.000000e+00> : vector<2x8x8xf32>
    %84 = tpu.matmul %79, %81, %cst_28 {dimension_numbers = #tpu.dot_dimension_numbers<[2], [2], [1], [1], [0, 0, 0, 1, 1, 1], [0], [0]>} : vector<2x8x8xf32>, vector<2x8x8xf32>, vector<2x8x8xf32> -> vector<2x8x8xf32>
    "tpu.trace_stop"() : () -> ()
    %cst_29 = arith.constant 0.353553385 : f32
    %85 = vector.broadcast %cst_29 : f32 to vector<2x8x8xf32>
    %86 = arith.mulf %84, %85 : vector<2x8x8xf32>
    %87 = arith.addf %86, %9 : vector<2x8x8xf32>
    %cst_30 = arith.constant dense<0xFF800000> : vector<2x8xf32>
    %88 = vector.multi_reduction <maximumf>, %87, %cst_30 [2] : vector<2x8x8xf32> to vector<2x8xf32>
    %89 = vector.shape_cast %88 : vector<2x8xf32> to vector<2x8x1xf32>
    %90 = vector.broadcast %89 : vector<2x8x1xf32> to vector<2x8x8xf32>
    %91 = arith.subf %87, %90 : vector<2x8x8xf32>
    %92 = math.exp %91 : vector<2x8x8xf32>
    %cst_31 = arith.constant dense<0.000000e+00> : vector<2x8xf32>
    %93 = vector.multi_reduction <add>, %92, %cst_31 [2] : vector<2x8x8xf32> to vector<2x8xf32>
    %94 = vector.shape_cast %93 : vector<2x8xf32> to vector<2x8x1xf32>
    %95 = tpu.reciprocal %94 : vector<2x8x1xf32> -> vector<2x8x1xf32>
    %96 = vector.broadcast %95 : vector<2x8x1xf32> to vector<2x8x8xf32>
    %97 = arith.mulf %92, %96 : vector<2x8x8xf32>
    "tpu.trace_start"() <{level = 10 : i32, message = "bqk,bkd->bqd"}> : () -> ()
    %cst_32 = arith.constant dense<0.000000e+00> : vector<2x8x8xf32>
    %98 = tpu.matmul %97, %83, %cst_32 {dimension_numbers = #tpu.dot_dimension_numbers<[2], [1], [1], [2], [0, 0, 0, 1, 1, 2], [0], [0]>} : vector<2x8x8xf32>, vector<2x8x8xf32>, vector<2x8x8xf32> -> vector<2x8x8xf32>
    "tpu.trace_stop"() : () -> ()
    %99 = vector.shape_cast %98 : vector<2x8x8xf32> to vector<16x8xf32>
    %100 = tpu.concatenate %33, %55, %77, %99 in 1 : vector<16x8xf32>, vector<16x8xf32>, vector<16x8xf32>, vector<16x8xf32> -> vector<16x32xf32>
    %cst_33 = arith.constant dense<0.000000e+00> : vector<16x32xf32>
    %101 = tpu.matmul %100, %10, %cst_33 {dimension_numbers = #tpu.dot_dimension_numbers<[1], [0], [0], [1], [0, 0, 1, 1], [], []>} : vector<16x32xf32>, vector<32x32xf32>, vector<16x32xf32> -> vector<16x32xf32>
    %102 = vector.broadcast %11 : vector<1x32xf32> to vector<16x32xf32>
    %103 = arith.addf %101, %102 : vector<16x32xf32>
    %104 = arith.addf %0, %103 : vector<16x32xf32>
    %cst_34 = arith.constant dense<0.000000e+00> : vector<16xf32>
    %105 = vector.multi_reduction <add>, %104, %cst_34 [1] : vector<16x32xf32> to vector<16xf32>
    %106 = vector.shape_cast %105 : vector<16xf32> to vector<16x1xf32>
    %cst_35 = arith.constant 3.200000e+01 : f32
    %107 = vector.broadcast %cst_35 : f32 to vector<16x1xf32>
    %108 = arith.divf %106, %107 : vector<16x1xf32>
    %109 = vector.broadcast %108 : vector<16x1xf32> to vector<16x32xf32>
    %110 = arith.subf %104, %109 : vector<16x32xf32>
    %111 = arith.mulf %110, %110 : vector<16x32xf32>
    %cst_36 = arith.constant dense<0.000000e+00> : vector<16xf32>
    %112 = vector.multi_reduction <add>, %111, %cst_36 [1] : vector<16x32xf32> to vector<16xf32>
    %113 = vector.shape_cast %112 : vector<16xf32> to vector<16x1xf32>
    %cst_37 = arith.constant 3.200000e+01 : f32
    %114 = vector.broadcast %cst_37 : f32 to vector<16x1xf32>
    %115 = arith.divf %113, %114 : vector<16x1xf32>
    %cst_38 = arith.constant 9.99999974E-6 : f32
    %116 = vector.broadcast %cst_38 : f32 to vector<16x1xf32>
    %117 = arith.addf %115, %116 : vector<16x1xf32>
    %118 = math.rsqrt %117 : vector<16x1xf32>
    %119 = vector.broadcast %118 : vector<16x1xf32> to vector<16x32xf32>
    %120 = arith.mulf %110, %119 : vector<16x32xf32>
    %121 = vector.broadcast %2 : vector<1x32xf32> to vector<16x32xf32>
    %122 = arith.mulf %120, %121 : vector<16x32xf32>
    %123 = vector.broadcast %3 : vector<1x32xf32> to vector<16x32xf32>
    %124 = arith.addf %122, %123 : vector<16x32xf32>
    %c64_39 = arith.constant 64 : index
    %c0_40 = arith.constant 0 : index
    %125 = vector.load %arg1[%c64_39, %c0_40] : memref<256x128xf32, #tpu.memory_space<vmem>>, vector<32x32xf32>
    %cst_41 = arith.constant dense<0.000000e+00> : vector<16x32xf32>
    %126 = tpu.matmul %124, %125, %cst_41 {dimension_numbers = #tpu.dot_dimension_numbers<[1], [0], [0], [1], [0, 0, 1, 1], [], []>} : vector<16x32xf32>, vector<32x32xf32>, vector<16x32xf32> -> vector<16x32xf32>
    %c16_42 = arith.constant 16 : index
    %c0_43 = arith.constant 0 : index
    %127 = vector.load %arg2[%c16_42, %c0_43] : memref<72x128xf32, #tpu.memory_space<vmem>>, vector<1x32xf32>
    %128 = vector.broadcast %127 : vector<1x32xf32> to vector<16x32xf32>
    %129 = arith.addf %126, %128 : vector<16x32xf32>
    %c96 = arith.constant 96 : index
    %c0_44 = arith.constant 0 : index
    %130 = vector.load %arg1[%c96, %c0_44] : memref<256x128xf32, #tpu.memory_space<vmem>>, vector<32x64xf32>
    %cst_45 = arith.constant dense<0.000000e+00> : vector<16x64xf32>
    %131 = tpu.matmul %1, %130, %cst_45 {dimension_numbers = #tpu.dot_dimension_numbers<[1], [0], [0], [1], [0, 0, 1, 1], [], []>} : vector<16x32xf32>, vector<32x64xf32>, vector<16x64xf32> -> vector<16x64xf32>
    %c24 = arith.constant 24 : index
    %c0_46 = arith.constant 0 : index
    %132 = vector.load %arg2[%c24, %c0_46] : memref<72x128xf32, #tpu.memory_space<vmem>>, vector<1x64xf32>
    %133 = vector.broadcast %132 : vector<1x64xf32> to vector<16x64xf32>
    %134 = arith.addf %131, %133 : vector<16x64xf32>
    %c0_47 = arith.constant 0 : index
    %c0_48 = arith.constant 0 : index
    %c8_49 = arith.constant 8 : index
    %135 = vector.load %arg3[%c0_47, %c0_48, %c8_49] : memref<2x8x16xf32, #tpu.memory_space<vmem>>, vector<2x8x8xf32>
    %c128 = arith.constant 128 : index
    %c0_50 = arith.constant 0 : index
    %136 = vector.load %arg1[%c128, %c0_50] : memref<256x128xf32, #tpu.memory_space<vmem>>, vector<32x32xf32>
    %c32_51 = arith.constant 32 : index
    %c0_52 = arith.constant 0 : index
    %137 = vector.load %arg2[%c32_51, %c0_52] : memref<72x128xf32, #tpu.memory_space<vmem>>, vector<1x32xf32>
    %138 = vector.extract_strided_slice %129 {offsets = [0, 0], sizes = [16, 8], strides = [1, 1]} : vector<16x32xf32> to vector<16x8xf32>
    %139 = vector.shape_cast %138 : vector<16x8xf32> to vector<2x8x8xf32>
    %140 = vector.extract_strided_slice %134 {offsets = [0, 0], sizes = [16, 8], strides = [1, 1]} : vector<16x64xf32> to vector<16x8xf32>
    %141 = vector.shape_cast %140 : vector<16x8xf32> to vector<2x8x8xf32>
    %142 = vector.extract_strided_slice %134 {offsets = [0, 32], sizes = [16, 8], strides = [1, 1]} : vector<16x64xf32> to vector<16x8xf32>
    %143 = vector.shape_cast %142 : vector<16x8xf32> to vector<2x8x8xf32>
    "tpu.trace_start"() <{level = 10 : i32, message = "bqd,bkd->bqk"}> : () -> ()
    %cst_53 = arith.constant dense<0.000000e+00> : vector<2x8x8xf32>
    %144 = tpu.matmul %139, %141, %cst_53 {dimension_numbers = #tpu.dot_dimension_numbers<[2], [2], [1], [1], [0, 0, 0, 1, 1, 1], [0], [0]>} : vector<2x8x8xf32>, vector<2x8x8xf32>, vector<2x8x8xf32> -> vector<2x8x8xf32>
    "tpu.trace_stop"() : () -> ()
    %cst_54 = arith.constant 0.353553385 : f32
    %145 = vector.broadcast %cst_54 : f32 to vector<2x8x8xf32>
    %146 = arith.mulf %144, %145 : vector<2x8x8xf32>
    %147 = arith.addf %146, %135 : vector<2x8x8xf32>
    %cst_55 = arith.constant dense<0xFF800000> : vector<2x8xf32>
    %148 = vector.multi_reduction <maximumf>, %147, %cst_55 [2] : vector<2x8x8xf32> to vector<2x8xf32>
    %149 = vector.shape_cast %148 : vector<2x8xf32> to vector<2x8x1xf32>
    %150 = vector.broadcast %149 : vector<2x8x1xf32> to vector<2x8x8xf32>
    %151 = arith.subf %147, %150 : vector<2x8x8xf32>
    %152 = math.exp %151 : vector<2x8x8xf32>
    %cst_56 = arith.constant dense<0.000000e+00> : vector<2x8xf32>
    %153 = vector.multi_reduction <add>, %152, %cst_56 [2] : vector<2x8x8xf32> to vector<2x8xf32>
    %154 = vector.shape_cast %153 : vector<2x8xf32> to vector<2x8x1xf32>
    %155 = tpu.reciprocal %154 : vector<2x8x1xf32> -> vector<2x8x1xf32>
    %156 = vector.broadcast %155 : vector<2x8x1xf32> to vector<2x8x8xf32>
    %157 = arith.mulf %152, %156 : vector<2x8x8xf32>
    "tpu.trace_start"() <{level = 10 : i32, message = "bqk,bkd->bqd"}> : () -> ()
    %cst_57 = arith.constant dense<0.000000e+00> : vector<2x8x8xf32>
    %158 = tpu.matmul %157, %143, %cst_57 {dimension_numbers = #tpu.dot_dimension_numbers<[2], [1], [1], [2], [0, 0, 0, 1, 1, 2], [0], [0]>} : vector<2x8x8xf32>, vector<2x8x8xf32>, vector<2x8x8xf32> -> vector<2x8x8xf32>
    "tpu.trace_stop"() : () -> ()
    %159 = vector.shape_cast %158 : vector<2x8x8xf32> to vector<16x8xf32>
    %160 = vector.extract_strided_slice %129 {offsets = [0, 8], sizes = [16, 8], strides = [1, 1]} : vector<16x32xf32> to vector<16x8xf32>
    %161 = vector.shape_cast %160 : vector<16x8xf32> to vector<2x8x8xf32>
    %162 = vector.extract_strided_slice %134 {offsets = [0, 8], sizes = [16, 8], strides = [1, 1]} : vector<16x64xf32> to vector<16x8xf32>
    %163 = vector.shape_cast %162 : vector<16x8xf32> to vector<2x8x8xf32>
    %164 = vector.extract_strided_slice %134 {offsets = [0, 40], sizes = [16, 8], strides = [1, 1]} : vector<16x64xf32> to vector<16x8xf32>
    %165 = vector.shape_cast %164 : vector<16x8xf32> to vector<2x8x8xf32>
    "tpu.trace_start"() <{level = 10 : i32, message = "bqd,bkd->bqk"}> : () -> ()
    %cst_58 = arith.constant dense<0.000000e+00> : vector<2x8x8xf32>
    %166 = tpu.matmul %161, %163, %cst_58 {dimension_numbers = #tpu.dot_dimension_numbers<[2], [2], [1], [1], [0, 0, 0, 1, 1, 1], [0], [0]>} : vector<2x8x8xf32>, vector<2x8x8xf32>, vector<2x8x8xf32> -> vector<2x8x8xf32>
    "tpu.trace_stop"() : () -> ()
    %cst_59 = arith.constant 0.353553385 : f32
    %167 = vector.broadcast %cst_59 : f32 to vector<2x8x8xf32>
    %168 = arith.mulf %166, %167 : vector<2x8x8xf32>
    %169 = arith.addf %168, %135 : vector<2x8x8xf32>
    %cst_60 = arith.constant dense<0xFF800000> : vector<2x8xf32>
    %170 = vector.multi_reduction <maximumf>, %169, %cst_60 [2] : vector<2x8x8xf32> to vector<2x8xf32>
    %171 = vector.shape_cast %170 : vector<2x8xf32> to vector<2x8x1xf32>
    %172 = vector.broadcast %171 : vector<2x8x1xf32> to vector<2x8x8xf32>
    %173 = arith.subf %169, %172 : vector<2x8x8xf32>
    %174 = math.exp %173 : vector<2x8x8xf32>
    %cst_61 = arith.constant dense<0.000000e+00> : vector<2x8xf32>
    %175 = vector.multi_reduction <add>, %174, %cst_61 [2] : vector<2x8x8xf32> to vector<2x8xf32>
    %176 = vector.shape_cast %175 : vector<2x8xf32> to vector<2x8x1xf32>
    %177 = tpu.reciprocal %176 : vector<2x8x1xf32> -> vector<2x8x1xf32>
    %178 = vector.broadcast %177 : vector<2x8x1xf32> to vector<2x8x8xf32>
    %179 = arith.mulf %174, %178 : vector<2x8x8xf32>
    "tpu.trace_start"() <{level = 10 : i32, message = "bqk,bkd->bqd"}> : () -> ()
    %cst_62 = arith.constant dense<0.000000e+00> : vector<2x8x8xf32>
    %180 = tpu.matmul %179, %165, %cst_62 {dimension_numbers = #tpu.dot_dimension_numbers<[2], [1], [1], [2], [0, 0, 0, 1, 1, 2], [0], [0]>} : vector<2x8x8xf32>, vector<2x8x8xf32>, vector<2x8x8xf32> -> vector<2x8x8xf32>
    "tpu.trace_stop"() : () -> ()
    %181 = vector.shape_cast %180 : vector<2x8x8xf32> to vector<16x8xf32>
    %182 = vector.extract_strided_slice %129 {offsets = [0, 16], sizes = [16, 8], strides = [1, 1]} : vector<16x32xf32> to vector<16x8xf32>
    %183 = vector.shape_cast %182 : vector<16x8xf32> to vector<2x8x8xf32>
    %184 = vector.extract_strided_slice %134 {offsets = [0, 16], sizes = [16, 8], strides = [1, 1]} : vector<16x64xf32> to vector<16x8xf32>
    %185 = vector.shape_cast %184 : vector<16x8xf32> to vector<2x8x8xf32>
    %186 = vector.extract_strided_slice %134 {offsets = [0, 48], sizes = [16, 8], strides = [1, 1]} : vector<16x64xf32> to vector<16x8xf32>
    %187 = vector.shape_cast %186 : vector<16x8xf32> to vector<2x8x8xf32>
    "tpu.trace_start"() <{level = 10 : i32, message = "bqd,bkd->bqk"}> : () -> ()
    %cst_63 = arith.constant dense<0.000000e+00> : vector<2x8x8xf32>
    %188 = tpu.matmul %183, %185, %cst_63 {dimension_numbers = #tpu.dot_dimension_numbers<[2], [2], [1], [1], [0, 0, 0, 1, 1, 1], [0], [0]>} : vector<2x8x8xf32>, vector<2x8x8xf32>, vector<2x8x8xf32> -> vector<2x8x8xf32>
    "tpu.trace_stop"() : () -> ()
    %cst_64 = arith.constant 0.353553385 : f32
    %189 = vector.broadcast %cst_64 : f32 to vector<2x8x8xf32>
    %190 = arith.mulf %188, %189 : vector<2x8x8xf32>
    %191 = arith.addf %190, %135 : vector<2x8x8xf32>
    %cst_65 = arith.constant dense<0xFF800000> : vector<2x8xf32>
    %192 = vector.multi_reduction <maximumf>, %191, %cst_65 [2] : vector<2x8x8xf32> to vector<2x8xf32>
    %193 = vector.shape_cast %192 : vector<2x8xf32> to vector<2x8x1xf32>
    %194 = vector.broadcast %193 : vector<2x8x1xf32> to vector<2x8x8xf32>
    %195 = arith.subf %191, %194 : vector<2x8x8xf32>
    %196 = math.exp %195 : vector<2x8x8xf32>
    %cst_66 = arith.constant dense<0.000000e+00> : vector<2x8xf32>
    %197 = vector.multi_reduction <add>, %196, %cst_66 [2] : vector<2x8x8xf32> to vector<2x8xf32>
    %198 = vector.shape_cast %197 : vector<2x8xf32> to vector<2x8x1xf32>
    %199 = tpu.reciprocal %198 : vector<2x8x1xf32> -> vector<2x8x1xf32>
    %200 = vector.broadcast %199 : vector<2x8x1xf32> to vector<2x8x8xf32>
    %201 = arith.mulf %196, %200 : vector<2x8x8xf32>
    "tpu.trace_start"() <{level = 10 : i32, message = "bqk,bkd->bqd"}> : () -> ()
    %cst_67 = arith.constant dense<0.000000e+00> : vector<2x8x8xf32>
    %202 = tpu.matmul %201, %187, %cst_67 {dimension_numbers = #tpu.dot_dimension_numbers<[2], [1], [1], [2], [0, 0, 0, 1, 1, 2], [0], [0]>} : vector<2x8x8xf32>, vector<2x8x8xf32>, vector<2x8x8xf32> -> vector<2x8x8xf32>
    "tpu.trace_stop"() : () -> ()
    %203 = vector.shape_cast %202 : vector<2x8x8xf32> to vector<16x8xf32>
    %204 = vector.extract_strided_slice %129 {offsets = [0, 24], sizes = [16, 8], strides = [1, 1]} : vector<16x32xf32> to vector<16x8xf32>
    %205 = vector.shape_cast %204 : vector<16x8xf32> to vector<2x8x8xf32>
    %206 = vector.extract_strided_slice %134 {offsets = [0, 24], sizes = [16, 8], strides = [1, 1]} : vector<16x64xf32> to vector<16x8xf32>
    %207 = vector.shape_cast %206 : vector<16x8xf32> to vector<2x8x8xf32>
    %208 = vector.extract_strided_slice %134 {offsets = [0, 56], sizes = [16, 8], strides = [1, 1]} : vector<16x64xf32> to vector<16x8xf32>
    %209 = vector.shape_cast %208 : vector<16x8xf32> to vector<2x8x8xf32>
    "tpu.trace_start"() <{level = 10 : i32, message = "bqd,bkd->bqk"}> : () -> ()
    %cst_68 = arith.constant dense<0.000000e+00> : vector<2x8x8xf32>
    %210 = tpu.matmul %205, %207, %cst_68 {dimension_numbers = #tpu.dot_dimension_numbers<[2], [2], [1], [1], [0, 0, 0, 1, 1, 1], [0], [0]>} : vector<2x8x8xf32>, vector<2x8x8xf32>, vector<2x8x8xf32> -> vector<2x8x8xf32>
    "tpu.trace_stop"() : () -> ()
    %cst_69 = arith.constant 0.353553385 : f32
    %211 = vector.broadcast %cst_69 : f32 to vector<2x8x8xf32>
    %212 = arith.mulf %210, %211 : vector<2x8x8xf32>
    %213 = arith.addf %212, %135 : vector<2x8x8xf32>
    %cst_70 = arith.constant dense<0xFF800000> : vector<2x8xf32>
    %214 = vector.multi_reduction <maximumf>, %213, %cst_70 [2] : vector<2x8x8xf32> to vector<2x8xf32>
    %215 = vector.shape_cast %214 : vector<2x8xf32> to vector<2x8x1xf32>
    %216 = vector.broadcast %215 : vector<2x8x1xf32> to vector<2x8x8xf32>
    %217 = arith.subf %213, %216 : vector<2x8x8xf32>
    %218 = math.exp %217 : vector<2x8x8xf32>
    %cst_71 = arith.constant dense<0.000000e+00> : vector<2x8xf32>
    %219 = vector.multi_reduction <add>, %218, %cst_71 [2] : vector<2x8x8xf32> to vector<2x8xf32>
    %220 = vector.shape_cast %219 : vector<2x8xf32> to vector<2x8x1xf32>
    %221 = tpu.reciprocal %220 : vector<2x8x1xf32> -> vector<2x8x1xf32>
    %222 = vector.broadcast %221 : vector<2x8x1xf32> to vector<2x8x8xf32>
    %223 = arith.mulf %218, %222 : vector<2x8x8xf32>
    "tpu.trace_start"() <{level = 10 : i32, message = "bqk,bkd->bqd"}> : () -> ()
    %cst_72 = arith.constant dense<0.000000e+00> : vector<2x8x8xf32>
    %224 = tpu.matmul %223, %209, %cst_72 {dimension_numbers = #tpu.dot_dimension_numbers<[2], [1], [1], [2], [0, 0, 0, 1, 1, 2], [0], [0]>} : vector<2x8x8xf32>, vector<2x8x8xf32>, vector<2x8x8xf32> -> vector<2x8x8xf32>
    "tpu.trace_stop"() : () -> ()
    %225 = vector.shape_cast %224 : vector<2x8x8xf32> to vector<16x8xf32>
    %226 = tpu.concatenate %159, %181, %203, %225 in 1 : vector<16x8xf32>, vector<16x8xf32>, vector<16x8xf32>, vector<16x8xf32> -> vector<16x32xf32>
    %cst_73 = arith.constant dense<0.000000e+00> : vector<16x32xf32>
    %227 = tpu.matmul %226, %136, %cst_73 {dimension_numbers = #tpu.dot_dimension_numbers<[1], [0], [0], [1], [0, 0, 1, 1], [], []>} : vector<16x32xf32>, vector<32x32xf32>, vector<16x32xf32> -> vector<16x32xf32>
    %228 = vector.broadcast %137 : vector<1x32xf32> to vector<16x32xf32>
    %229 = arith.addf %227, %228 : vector<16x32xf32>
    %230 = arith.addf %124, %229 : vector<16x32xf32>
    %cst_74 = arith.constant dense<0.000000e+00> : vector<16xf32>
    %231 = vector.multi_reduction <add>, %230, %cst_74 [1] : vector<16x32xf32> to vector<16xf32>
    %232 = vector.shape_cast %231 : vector<16xf32> to vector<16x1xf32>
    %cst_75 = arith.constant 3.200000e+01 : f32
    %233 = vector.broadcast %cst_75 : f32 to vector<16x1xf32>
    %234 = arith.divf %232, %233 : vector<16x1xf32>
    %235 = vector.broadcast %234 : vector<16x1xf32> to vector<16x32xf32>
    %236 = arith.subf %230, %235 : vector<16x32xf32>
    %237 = arith.mulf %236, %236 : vector<16x32xf32>
    %cst_76 = arith.constant dense<0.000000e+00> : vector<16xf32>
    %238 = vector.multi_reduction <add>, %237, %cst_76 [1] : vector<16x32xf32> to vector<16xf32>
    %239 = vector.shape_cast %238 : vector<16xf32> to vector<16x1xf32>
    %cst_77 = arith.constant 3.200000e+01 : f32
    %240 = vector.broadcast %cst_77 : f32 to vector<16x1xf32>
    %241 = arith.divf %239, %240 : vector<16x1xf32>
    %cst_78 = arith.constant 9.99999974E-6 : f32
    %242 = vector.broadcast %cst_78 : f32 to vector<16x1xf32>
    %243 = arith.addf %241, %242 : vector<16x1xf32>
    %244 = math.rsqrt %243 : vector<16x1xf32>
    %245 = vector.broadcast %244 : vector<16x1xf32> to vector<16x32xf32>
    %246 = arith.mulf %236, %245 : vector<16x32xf32>
    %247 = vector.broadcast %2 : vector<1x32xf32> to vector<16x32xf32>
    %248 = arith.mulf %246, %247 : vector<16x32xf32>
    %249 = vector.broadcast %3 : vector<1x32xf32> to vector<16x32xf32>
    %250 = arith.addf %248, %249 : vector<16x32xf32>
    %c160 = arith.constant 160 : index
    %c0_79 = arith.constant 0 : index
    %251 = vector.load %arg1[%c160, %c0_79] : memref<256x128xf32, #tpu.memory_space<vmem>>, vector<32x64xf32>
    %cst_80 = arith.constant dense<0.000000e+00> : vector<16x64xf32>
    %252 = tpu.matmul %250, %251, %cst_80 {dimension_numbers = #tpu.dot_dimension_numbers<[1], [0], [0], [1], [0, 0, 1, 1], [], []>} : vector<16x32xf32>, vector<32x64xf32>, vector<16x64xf32> -> vector<16x64xf32>
    %c40 = arith.constant 40 : index
    %c0_81 = arith.constant 0 : index
    %253 = vector.load %arg2[%c40, %c0_81] : memref<72x128xf32, #tpu.memory_space<vmem>>, vector<1x64xf32>
    %254 = vector.broadcast %253 : vector<1x64xf32> to vector<16x64xf32>
    %255 = arith.addf %252, %254 : vector<16x64xf32>
    %cst_82 = arith.constant 0.000000e+00 : f32
    %256 = vector.broadcast %cst_82 : f32 to vector<16x64xf32>
    %257 = arith.maximumf %255, %256 : vector<16x64xf32>
    %c192 = arith.constant 192 : index
    %c0_83 = arith.constant 0 : index
    %258 = vector.load %arg1[%c192, %c0_83] : memref<256x128xf32, #tpu.memory_space<vmem>>, vector<64x32xf32>
    %cst_84 = arith.constant dense<0.000000e+00> : vector<16x32xf32>
    %259 = tpu.matmul %257, %258, %cst_84 {dimension_numbers = #tpu.dot_dimension_numbers<[1], [0], [0], [1], [0, 0, 1, 1], [], []>} : vector<16x64xf32>, vector<64x32xf32>, vector<16x32xf32> -> vector<16x32xf32>
    %c48 = arith.constant 48 : index
    %c0_85 = arith.constant 0 : index
    %260 = vector.load %arg2[%c48, %c0_85] : memref<72x128xf32, #tpu.memory_space<vmem>>, vector<1x32xf32>
    %261 = vector.broadcast %260 : vector<1x32xf32> to vector<16x32xf32>
    %262 = arith.addf %259, %261 : vector<16x32xf32>
    %263 = arith.addf %250, %262 : vector<16x32xf32>
    %cst_86 = arith.constant dense<0.000000e+00> : vector<16xf32>
    %264 = vector.multi_reduction <add>, %263, %cst_86 [1] : vector<16x32xf32> to vector<16xf32>
    %265 = vector.shape_cast %264 : vector<16xf32> to vector<16x1xf32>
    %cst_87 = arith.constant 3.200000e+01 : f32
    %266 = vector.broadcast %cst_87 : f32 to vector<16x1xf32>
    %267 = arith.divf %265, %266 : vector<16x1xf32>
    %268 = vector.broadcast %267 : vector<16x1xf32> to vector<16x32xf32>
    %269 = arith.subf %263, %268 : vector<16x32xf32>
    %270 = arith.mulf %269, %269 : vector<16x32xf32>
    %cst_88 = arith.constant dense<0.000000e+00> : vector<16xf32>
    %271 = vector.multi_reduction <add>, %270, %cst_88 [1] : vector<16x32xf32> to vector<16xf32>
    %272 = vector.shape_cast %271 : vector<16xf32> to vector<16x1xf32>
    %cst_89 = arith.constant 3.200000e+01 : f32
    %273 = vector.broadcast %cst_89 : f32 to vector<16x1xf32>
    %274 = arith.divf %272, %273 : vector<16x1xf32>
    %cst_90 = arith.constant 9.99999974E-6 : f32
    %275 = vector.broadcast %cst_90 : f32 to vector<16x1xf32>
    %276 = arith.addf %274, %275 : vector<16x1xf32>
    %277 = math.rsqrt %276 : vector<16x1xf32>
    %278 = vector.broadcast %277 : vector<16x1xf32> to vector<16x32xf32>
    %279 = arith.mulf %269, %278 : vector<16x32xf32>
    %280 = vector.broadcast %2 : vector<1x32xf32> to vector<16x32xf32>
    %281 = arith.mulf %279, %280 : vector<16x32xf32>
    %282 = vector.broadcast %3 : vector<1x32xf32> to vector<16x32xf32>
    %283 = arith.addf %281, %282 : vector<16x32xf32>
    %c0_91 = arith.constant 0 : index
    %c0_92 = arith.constant 0 : index
    %284 = vector.load %arg4[%c0_91, %c0_92] : memref<16x32xf32, #tpu.memory_space<vmem>>, vector<16x32xf32>
    tpu.vector_store %arg4[%c0_91, %c0_92], %283 {strides = array<i32>} : memref<16x32xf32, #tpu.memory_space<vmem>>, vector<16x32xf32>,
    return
  }
}

</mosaic_0001>

<llo_original>
// kernel: decoder_layer.1
$region0: #{decoder_layer.1}
  #allocation0 [shape = 'u32[]', space=smem, size = 0x4, offset = 0x4, fixed_abs, tag = 'smem constant byte address 0x4 - core index']
  #allocation1 [shape = 'u32[144,128]{1,0:T(1,128)}', space=vmem, size = 0x12000, scoped, tag = 'internal scratch']
  %s0 = inlined_call_operand.vmem [shape: f32[32,32], index: 0, kind: input, shape index: {}]
  %s1 = inlined_call_operand.hbm [shape: f32[256,128], index: 1, kind: input, shape index: {}]
  %s2 = inlined_call_operand.vmem [shape: f32[72,128], index: 2, kind: input, shape index: {}]
  %s3 = inlined_call_operand.vmem [shape: f32[2,8,16], index: 3, kind: input, shape index: {}]
  %s4 = inlined_call_operand.hbm [shape: f32[16,32], index: 4, kind: output, shape index: {}]
  %s5 = sld [smem:[#allocation0]]
  $region30: #{decoder_layer.1} parent=0
    _
  %s7 = ssub.s32 1, %s5
  %s8 = scalar_select 0, %s7, %s5
  $region1: #{decoder_layer.1} parent=0
    #allocation2 [shape = 'u8[131072]{0}', space=vmem, size = 0x20000, scoped, tag = 'input window, operand 1, single buffered']
    #allocation3 [shape = 's32[1]{0}', space=sflag, size = 0x4, scoped, tag = 'scoped memory for decoder_layer.1']
    #allocation4 [shape = 's32[1]{0}', space=sflag, size = 0x4, scoped, tag = 'scoped memory for decoder_layer.1']
    #allocation5 [shape = 'u8[8192]{0}', space=vmem, size = 0x2000, scoped, tag = 'output window, operand 0, single buffered']
    %9 = vsyncpa [#allocation3], 0
    %10 = vsyncpa [#allocation4], 0
    // Predicated region
    $region2: #{decoder_layer.1} parent=1 // pred_check
      _
    $region3: #{decoder_layer.1} parent=1 // pred_check_branch
      %12 = sbr.rel (0) target = $region5
    $region4: #{decoder_layer.1} parent=1 // pred_region
      _
    $region5: #{decoder_layer.1} parent=1 // pred_fallthru
      _
    // Predicated region
    $region6: #{decoder_layer.1} parent=1 // pred_check
      _
    $region7: #{decoder_layer.1} parent=1 // pred_check_branch
      %14 = sbr.rel (0) target = $region9
    $region8: #{decoder_layer.1} parent=1 // pred_region
      %s16 = ssub.s32 4096, 4096
      %17 = vsyncadd [#allocation3], %s16
      %s18 = sshll.u32 [#allocation2], 4
      %s19 = int_to_ptr.vmem [resolvable:$true] %s18
      %24 = dma.hbm_to_vmem [thread:$0]  %s1, 4096, %s19, [#allocation3], 128, 128, 8
    $region9: #{decoder_layer.1} parent=1 // pred_fallthru
      _
    // Predicated region
    $region10: #{decoder_layer.1} parent=1 // pred_check
      _
    $region11: #{decoder_layer.1} parent=1 // pred_check_branch
      %26 = sbr.rel (0) target = $region13
    $region12: #{decoder_layer.1} parent=1 // pred_region
      _
    $region13: #{decoder_layer.1} parent=1 // pred_fallthru
      _
    // Predicated region
    $region14: #{decoder_layer.1} parent=1 // pred_check
      _
    $region15: #{decoder_layer.1} parent=1 // pred_check_branch
      %28 = sbr.rel (0) target = $region17
    $region16: #{decoder_layer.1} parent=1 // pred_region
      _
    $region17: #{decoder_layer.1} parent=1 // pred_fallthru
      _
    // Predicated region
    $region18: #{decoder_layer.1} parent=1 // pred_check
      _
    $region19: #{decoder_layer.1} parent=1 // pred_check_branch
      %30 = sbr.rel (0) target = $region21
    $region20: #{decoder_layer.1} parent=1 // pred_region
      %31 = dma.done [#allocation3], 4096
    $region21: #{decoder_layer.1} parent=1 // pred_fallthru
      _
    %v32 = vld [vmem:[%s0] sm:$0xff]
    %v33 = vld [vmem:[%s0 + $0x8] sm:$0xff]
    %v34 = vld [vmem:[%s0 + $0x10] sm:$0xff]
    %v35 = vld [vmem:[%s0 + $0x18] sm:$0xff]
    %v36 = vld [vmem:[%s2 + $0x38] sm:$0x1]
    %v37 = vld [vmem:[%s2 + $0x40] sm:$0x1]
    %v38 = vld [vmem:[#allocation2] sm:$0xff]
    %v39 = vld [vmem:[#allocation2 + $0x8] sm:$0xff]
    %v40 = vld [vmem:[#allocation2 + $0x10] sm:$0xff]
    %v41 = vld [vmem:[#allocation2 + $0x18] sm:$0xff]
    %v42 = vld [vmem:[%s2] sm:$0x1]
    %v43 = vlaneseq
    %v44 = vshrl.u32 %v43, 7
    %v45 = vsub.s32 0, %v44
    %v46 = vrot.slane %v42, %v45
    %vm47 = vcmask 261120
    %v49 = vsel %vm47, %v32, 0
    %v52 = vsel %vm47, %v33, 0
    %54 = vmatprep.subr.mxu0 0.0
    %55 = vmatpush1.msra.mxu0 %v38
    %56 = vmatprep.subr.mxu0 0.0
    %57 = vmatpush1.msra.mxu0 %v39
    %58 = vmatprep.subr.mxu0 0.0
    %59 = vmatpush1.msra.mxu0 %v40
    %60 = vmatprep.subr.mxu0 0.0
    %61 = vmatpush1.msra.mxu0 %v41
    %62 = vmatprep.subr.mxu0 0.0
    %63 = vmatpush1.msra.mxu0 0.0
    %64 = vmatprep.subr.mxu0 0.0
    %65 = vmatpush1.msra.mxu0 0.0
    %66 = vmatprep.subr.mxu0 0.0
    %67 = vmatpush1.msra.mxu0 0.0
    %68 = vmatprep.subr.mxu0 0.0
    %69 = vmatpush1.msra.mxu0 0.0
    %70 = vmatprep.subr.mxu0 0.0
    %71 = vmatpush1.msra.mxu0 0.0
    %72 = vmatprep.subr.mxu0 0.0
    %73 = vmatpush1.msra.mxu0 0.0
    %74 = vmatprep.subr.mxu0 0.0
    %75 = vmatpush1.msra.mxu0 0.0
    %76 = vmatprep.subr.mxu0 0.0
    %77 = vmatpush1.msra.mxu0 0.0
    %78 = vmatprep.subr.mxu0 0.0
    %79 = vmatpush1.msra.mxu0 0.0
    %80 = vmatprep.subr.mxu0 0.0
    %81 = vmatpush1.msra.mxu0 0.0
    %82 = vmatprep.subr.mxu0 0.0
    %83 = vmatpush1.msra.mxu0 0.0
    %84 = vmatprep.subr.mxu0 0.0
    %85 = vmatpush1.msra.mxu0 0.0
    %86 = vmatprep.subr.mxu0 0.0
    %87 = vmatpush1.msra.mxu0 0.0
    %88 = vmatprep.subr.mxu0 0.0
    %89 = vmatpush1.msra.mxu0 0.0
    %90 = vmatprep.subr.mxu0 0.0
    %91 = vmatpush1.msra.mxu0 0.0
    %92 = vmatprep.subr.mxu0 0.0
    %93 = vmatpush1.msra.mxu0 0.0
    %94 = vmatprep.subr.mxu0 0.0
    %95 = vmatpush1.msra.mxu0 0.0
    %96 = vmatprep.subr.mxu0 0.0
    %97 = vmatpush1.msra.mxu0 0.0
    %98 = vmatprep.subr.mxu0 0.0
    %99 = vmatpush1.msra.mxu0 0.0
    %100 = vmatprep.subr.mxu0 0.0
    %101 = vmatpush1.msra.mxu0 0.0
    %102 = vmatprep.subr.mxu0 0.0
    %103 = vmatpush1.msra.mxu0 0.0
    %104 = vmatprep.subr.mxu0 0.0
    %105 = vmatpush1.msra.mxu0 0.0
    %106 = vmatprep.subr.mxu0 0.0
    %107 = vmatpush1.msra.mxu0 0.0
    %108 = vmatprep.subr.mxu0 0.0
    %109 = vmatpush1.msra.mxu0 0.0
    %110 = vmatprep.subr.mxu0 0.0
    %111 = vmatpush1.msra.mxu0 0.0
    %112 = vmatprep.subr.mxu0 0.0
    %113 = vmatpush1.msra.mxu0 0.0
    %114 = vmatprep.subr.mxu0 0.0
    %115 = vmatpush1.msra.mxu0 0.0
    %116 = vmatprep.subr.mxu0 0.0
    %117 = vmatpush1.msra.mxu0 0.0
    %118 = vmatprep.mubr.f32.mxu0 0.0
    %119 = vmatmul.mubr.f32.gmra.mrb[0].mxu0 %v49
    %v120 = vpop.f32.mrb[0].mxu0
    %v121 = vadd.f32 %v46, %v120
    %v122 = vpop.f32.mrb[0].mxu0
    %123 = vmatprep.mubr.f32.mxu0 0.0
    %124 = vmatmul.mubr.f32.gmra.mrb[0].mxu0 %v52
    %v125 = vpop.f32.mrb[0].mxu0
    %v126 = vadd.f32 %v46, %v125
    %v127 = vpop.f32.mrb[0].mxu0
    %128 = vdwg.mxu0
    %v129 = vld [vmem:[%s3] sm:$0xff]
    %v130 = vld [vmem:[%s3 + $0x8] sm:$0xff]
    %v131 = vld [vmem:[#allocation2 + $0x20] sm:$0xff]
    %v132 = vld [vmem:[#allocation2 + $0x28] sm:$0xff]
    %v133 = vld [vmem:[#allocation2 + $0x30] sm:$0xff]
    %v134 = vld [vmem:[#allocation2 + $0x38] sm:$0xff]
    %v135 = vld [vmem:[%s2 + $0x8] sm:$0x1]
    %137 = vrot.lane.b32.xlu0 %v121, 96
    %v138 = vpop.permute.xlu0 %137
    %vm139 = vcmask 64512
    %v140 = vsel %vm139, %v121, 0
    %v142 = vsel %vm139, %v138, 0
    %144 = vmatprep.subr.mxu0 0.0
    %145 = vmatpush1.xpose.msra.mxu0 %v142
    %146 = vmatprep.subr.mxu0 0.0
    %147 = vmatpush1.xpose.msra.mxu0 0.0
    %148 = vmatprep.subr.mxu0 0.0
    %149 = vmatpush1.xpose.msra.mxu0 0.0
    %150 = vmatprep.subr.mxu0 0.0
    %151 = vmatpush1.xpose.msra.mxu0 0.0
    %152 = vmatprep.subr.mxu0 0.0
    %153 = vmatpush1.xpose.msra.mxu0 0.0
    %154 = vmatprep.subr.mxu0 0.0
    %155 = vmatpush1.xpose.msra.mxu0 0.0
    %156 = vmatprep.subr.mxu0 0.0
    %157 = vmatpush1.xpose.msra.mxu0 0.0
    %158 = vmatprep.subr.mxu0 0.0
    %159 = vmatpush1.xpose.msra.mxu0 0.0
    %160 = vmatprep.subr.mxu0 0.0
    %161 = vmatpush1.xpose.msra.mxu0 0.0
    %162 = vmatprep.subr.mxu0 0.0
    %163 = vmatpush1.xpose.msra.mxu0 0.0
    %164 = vmatprep.subr.mxu0 0.0
    %165 = vmatpush1.xpose.msra.mxu0 0.0
    %166 = vmatprep.subr.mxu0 0.0
    %167 = vmatpush1.xpose.msra.mxu0 0.0
    %168 = vmatprep.subr.mxu0 0.0
    %169 = vmatpush1.xpose.msra.mxu0 0.0
    %170 = vmatprep.subr.mxu0 0.0
    %171 = vmatpush1.xpose.msra.mxu0 0.0
    %172 = vmatprep.subr.mxu0 0.0
    %173 = vmatpush1.xpose.msra.mxu0 0.0
    %174 = vmatprep.subr.mxu0 0.0
    %175 = vmatpush1.xpose.msra.mxu0 0.0
    %176 = vmatprep.subr.mxu0 0.0
    %177 = vmatpush1.xpose.msra.mxu0 0.0
    %178 = vmatprep.subr.mxu0 0.0
    %179 = vmatpush1.xpose.msra.mxu0 0.0
    %180 = vmatprep.subr.mxu0 0.0
    %181 = vmatpush1.xpose.msra.mxu0 0.0
    %182 = vmatprep.subr.mxu0 0.0
    %183 = vmatpush1.xpose.msra.mxu0 0.0
    %184 = vmatprep.subr.mxu0 0.0
    %185 = vmatpush1.xpose.msra.mxu0 0.0
    %186 = vmatprep.subr.mxu0 0.0
    %187 = vmatpush1.xpose.msra.mxu0 0.0
    %188 = vmatprep.subr.mxu0 0.0
    %189 = vmatpush1.xpose.msra.mxu0 0.0
    %190 = vmatprep.subr.mxu0 0.0
    %191 = vmatpush1.xpose.msra.mxu0 0.0
    %192 = vmatprep.subr.mxu0 0.0
    %193 = vmatpush1.xpose.msra.mxu0 0.0
    %194 = vmatprep.subr.mxu0 0.0
    %195 = vmatpush1.xpose.msra.mxu0 0.0
    %196 = vmatprep.subr.mxu0 0.0
    %197 = vmatpush1.xpose.msra.mxu0 0.0
    %198 = vmatprep.subr.mxu0 0.0
    %199 = vmatpush1.xpose.msra.mxu0 0.0
    %200 = vmatprep.subr.mxu0 0.0
    %201 = vmatpush1.xpose.msra.mxu0 0.0
    %202 = vmatprep.subr.mxu0 0.0
    %203 = vmatpush1.xpose.msra.mxu0 0.0
    %204 = vmatprep.subr.mxu0 0.0
    %205 = vmatpush1.xpose.msra.mxu0 0.0
    %206 = vmatprep.subr.mxu0 0.0
    %207 = vmatpush1.xpose.msra.mxu0 0.0
    %208 = vmatprep.mubr.f32.mxu0 0.0
    %209 = vmatmul.mubr.f32.gmra.mrb[0].mxu0 %v140
    %v210 = vpop.f32.mrb[0].mxu0
    %v211 = vadd.f32 0.0, %v210
    %v212 = vpop.f32.mrb[0].mxu0
    %213 = vdwg.mxu0
    %215 = vrot.lane.b32.xlu0 %v126, 96
    %v216 = vpop.permute.xlu0 %215
    %v217 = vsel %vm139, %v126, 0
    %v219 = vsel %vm139, %v216, 0
    %221 = vmatprep.subr.mxu0 0.0
    %222 = vmatpush1.xpose.msra.mxu0 %v219
    %223 = vmatprep.subr.mxu0 0.0
    %224 = vmatpush1.xpose.msra.mxu0 0.0
    %225 = vmatprep.subr.mxu0 0.0
    %226 = vmatpush1.xpose.msra.mxu0 0.0
    %227 = vmatprep.subr.mxu0 0.0
    %228 = vmatpush1.xpose.msra.mxu0 0.0
    %229 = vmatprep.subr.mxu0 0.0
    %230 = vmatpush1.xpose.msra.mxu0 0.0
    %231 = vmatprep.subr.mxu0 0.0
    %232 = vmatpush1.xpose.msra.mxu0 0.0
    %233 = vmatprep.subr.mxu0 0.0
    %234 = vmatpush1.xpose.msra.mxu0 0.0
    %235 = vmatprep.subr.mxu0 0.0
    %236 = vmatpush1.xpose.msra.mxu0 0.0
    %237 = vmatprep.subr.mxu0 0.0
    %238 = vmatpush1.xpose.msra.mxu0 0.0
    %239 = vmatprep.subr.mxu0 0.0
    %240 = vmatpush1.xpose.msra.mxu0 0.0
    %241 = vmatprep.subr.mxu0 0.0
    %242 = vmatpush1.xpose.msra.mxu0 0.0
    %243 = vmatprep.subr.mxu0 0.0
    %244 = vmatpush1.xpose.msra.mxu0 0.0
    %245 = vmatprep.subr.mxu0 0.0
    %246 = vmatpush1.xpose.msra.mxu0 0.0
    %247 = vmatprep.subr.mxu0 0.0
    %248 = vmatpush1.xpose.msra.mxu0 0.0
    %249 = vmatprep.subr.mxu0 0.0
    %250 = vmatpush1.xpose.msra.mxu0 0.0
    %251 = vmatprep.subr.mxu0 0.0
    %252 = vmatpush1.xpose.msra.mxu0 0.0
    %253 = vmatprep.subr.mxu0 0.0
    %254 = vmatpush1.xpose.msra.mxu0 0.0
    %255 = vmatprep.subr.mxu0 0.0
    %256 = vmatpush1.xpose.msra.mxu0 0.0
    %257 = vmatprep.subr.mxu0 0.0
    %258 = vmatpush1.xpose.msra.mxu0 0.0
    %259 = vmatprep.subr.mxu0 0.0
    %260 = vmatpush1.xpose.msra.mxu0 0.0
    %261 = vmatprep.subr.mxu0 0.0
    %262 = vmatpush1.xpose.msra.mxu0 0.0
    %263 = vmatprep.subr.mxu0 0.0
    %264 = vmatpush1.xpose.msra.mxu0 0.0
    %265 = vmatprep.subr.mxu0 0.0
    %266 = vmatpush1.xpose.msra.mxu0 0.0
    %267 = vmatprep.subr.mxu0 0.0
    %268 = vmatpush1.xpose.msra.mxu0 0.0
    %269 = vmatprep.subr.mxu0 0.0
    %270 = vmatpush1.xpose.msra.mxu0 0.0
    %271 = vmatprep.subr.mxu0 0.0
    %272 = vmatpush1.xpose.msra.mxu0 0.0
    %273 = vmatprep.subr.mxu0 0.0
    %274 = vmatpush1.xpose.msra.mxu0 0.0
    %275 = vmatprep.subr.mxu0 0.0
    %276 = vmatpush1.xpose.msra.mxu0 0.0
    %277 = vmatprep.subr.mxu0 0.0
    %278 = vmatpush1.xpose.msra.mxu0 0.0
    %279 = vmatprep.subr.mxu0 0.0
    %280 = vmatpush1.xpose.msra.mxu0 0.0
    %281 = vmatprep.subr.mxu0 0.0
    %282 = vmatpush1.xpose.msra.mxu0 0.0
    %283 = vmatprep.subr.mxu0 0.0
    %284 = vmatpush1.xpose.msra.mxu0 0.0
    %285 = vmatprep.mubr.f32.mxu0 0.0
    %286 = vmatmul.mubr.f32.gmra.mrb[0].mxu0 %v217
    %v287 = vpop.f32.mrb[0].mxu0
    %v288 = vadd.f32 0.0, %v287
    %v289 = vpop.f32.mrb[0].mxu0
    %290 = vdwg.mxu0
    %v291 = vmul.f32 %v211, 0.35355338
    %v292 = vmul.f32 %v288, 0.35355338
    %v293 = vadd.f32 %v291, %v129
    %v294 = vadd.f32 %v292, %v130
    %v295 = vsel %vm139, %v293, -inf
    %296 = vmax.xlane.f32.xlu0 %v295
    %v297 = vpop.xlane.xlu0 %296
    %v298 = vsel %vm139, %v294, -inf
    %299 = vmax.xlane.f32.xlu0 %v298
    %v300 = vpop.xlane.xlu0 %299
    %v301 = vsub.f32 %v293, %v297
    %v302 = vsub.f32 %v294, %v300
    %v303 = vmul.f32 %v301, 1.442695
    %v304 = vpow.pop %v303
    %v305 = vmul.f32 %v302, 1.442695
    %v306 = vpow.pop %v305
    %v307 = vsel %vm139, %v304, 0.0
    %308 = vadd.xlane.f32.xlu0 %v307
    %v309 = vpop.xlane.xlu0 %308
    %v310 = vsel %vm139, %v306, 0.0
    %311 = vadd.xlane.f32.xlu0 %v310
    %v312 = vpop.xlane.xlu0 %311
    %v313 = vrcp.pop %v309
    %v314 = vrcp.pop %v312
    %v315 = vmul.f32 %v304, %v313
    %v316 = vmul.f32 %v306, %v314
    %317 = vrot.lane.b32.xlu0 %v121, 64
    %v318 = vpop.permute.xlu0 %317
    %v321 = vsel %vm139, %v315, 0
    %323 = vmatprep.subr.mxu0 0.0
    %324 = vmatpush1.msra.mxu0 %v318
    %325 = vmatprep.subr.mxu0 0.0
    %326 = vmatpush1.msra.mxu0 0.0
    %327 = vmatprep.subr.mxu0 0.0
    %328 = vmatpush1.msra.mxu0 0.0
    %329 = vmatprep.subr.mxu0 0.0
    %330 = vmatpush1.msra.mxu0 0.0
    %331 = vmatprep.subr.mxu0 0.0
    %332 = vmatpush1.msra.mxu0 0.0
    %333 = vmatprep.subr.mxu0 0.0
    %334 = vmatpush1.msra.mxu0 0.0
    %335 = vmatprep.subr.mxu0 0.0
    %336 = vmatpush1.msra.mxu0 0.0
    %337 = vmatprep.subr.mxu0 0.0
    %338 = vmatpush1.msra.mxu0 0.0
    %339 = vmatprep.subr.mxu0 0.0
    %340 = vmatpush1.msra.mxu0 0.0
    %341 = vmatprep.subr.mxu0 0.0
    %342 = vmatpush1.msra.mxu0 0.0
    %343 = vmatprep.subr.mxu0 0.0
    %344 = vmatpush1.msra.mxu0 0.0
    %345 = vmatprep.subr.mxu0 0.0
    %346 = vmatpush1.msra.mxu0 0.0
    %347 = vmatprep.subr.mxu0 0.0
    %348 = vmatpush1.msra.mxu0 0.0
    %349 = vmatprep.subr.mxu0 0.0
    %350 = vmatpush1.msra.mxu0 0.0
    %351 = vmatprep.subr.mxu0 0.0
    %352 = vmatpush1.msra.mxu0 0.0
    %353 = vmatprep.subr.mxu0 0.0
    %354 = vmatpush1.msra.mxu0 0.0
    %355 = vmatprep.subr.mxu0 0.0
    %356 = vmatpush1.msra.mxu0 0.0
    %357 = vmatprep.subr.mxu0 0.0
    %358 = vmatpush1.msra.mxu0 0.0
    %359 = vmatprep.subr.mxu0 0.0
    %360 = vmatpush1.msra.mxu0 0.0
    %361 = vmatprep.subr.mxu0 0.0
    %362 = vmatpush1.msra.mxu0 0.0
    %363 = vmatprep.subr.mxu0 0.0
    %364 = vmatpush1.msra.mxu0 0.0
    %365 = vmatprep.subr.mxu0 0.0
    %366 = vmatpush1.msra.mxu0 0.0
    %367 = vmatprep.subr.mxu0 0.0
    %368 = vmatpush1.msra.mxu0 0.0
    %369 = vmatprep.subr.mxu0 0.0
    %370 = vmatpush1.msra.mxu0 0.0
    %371 = vmatprep.subr.mxu0 0.0
    %372 = vmatpush1.msra.mxu0 0.0
    %373 = vmatprep.subr.mxu0 0.0
    %374 = vmatpush1.msra.mxu0 0.0
    %375 = vmatprep.subr.mxu0 0.0
    %376 = vmatpush1.msra.mxu0 0.0
    %377 = vmatprep.subr.mxu0 0.0
    %378 = vmatpush1.msra.mxu0 0.0
    %379 = vmatprep.subr.mxu0 0.0
    %380 = vmatpush1.msra.mxu0 0.0
    %381 = vmatprep.subr.mxu0 0.0
    %382 = vmatpush1.msra.mxu0 0.0
    %383 = vmatprep.subr.mxu0 0.0
    %384 = vmatpush1.msra.mxu0 0.0
    %385 = vmatprep.subr.mxu0 0.0
    %386 = vmatpush1.msra.mxu0 0.0
    %387 = vmatprep.mubr.f32.mxu0 0.0
    %388 = vmatmul.mubr.f32.gmra.mrb[0].mxu0 %v321
    %v389 = vpop.f32.mrb[0].mxu0
    %v390 = vadd.f32 0.0, %v389
    %v391 = vpop.f32.mrb[0].mxu0
    %392 = vdwg.mxu0
    %393 = vrot.lane.b32.xlu0 %v126, 64
    %v394 = vpop.permute.xlu0 %393
    %v397 = vsel %vm139, %v316, 0
    %399 = vmatprep.subr.mxu0 0.0
    %400 = vmatpush1.msra.mxu0 %v394
    %401 = vmatprep.subr.mxu0 0.0
    %402 = vmatpush1.msra.mxu0 0.0
    %403 = vmatprep.subr.mxu0 0.0
    %404 = vmatpush1.msra.mxu0 0.0
    %405 = vmatprep.subr.mxu0 0.0
    %406 = vmatpush1.msra.mxu0 0.0
    %407 = vmatprep.subr.mxu0 0.0
    %408 = vmatpush1.msra.mxu0 0.0
    %409 = vmatprep.subr.mxu0 0.0
    %410 = vmatpush1.msra.mxu0 0.0
    %411 = vmatprep.subr.mxu0 0.0
    %412 = vmatpush1.msra.mxu0 0.0
    %413 = vmatprep.subr.mxu0 0.0
    %414 = vmatpush1.msra.mxu0 0.0
    %415 = vmatprep.subr.mxu0 0.0
    %416 = vmatpush1.msra.mxu0 0.0
    %417 = vmatprep.subr.mxu0 0.0
    %418 = vmatpush1.msra.mxu0 0.0
    %419 = vmatprep.subr.mxu0 0.0
    %420 = vmatpush1.msra.mxu0 0.0
    %421 = vmatprep.subr.mxu0 0.0
    %422 = vmatpush1.msra.mxu0 0.0
    %423 = vmatprep.subr.mxu0 0.0
    %424 = vmatpush1.msra.mxu0 0.0
    %425 = vmatprep.subr.mxu0 0.0
    %426 = vmatpush1.msra.mxu0 0.0
    %427 = vmatprep.subr.mxu0 0.0
    %428 = vmatpush1.msra.mxu0 0.0
    %429 = vmatprep.subr.mxu0 0.0
    %430 = vmatpush1.msra.mxu0 0.0
    %431 = vmatprep.subr.mxu0 0.0
    %432 = vmatpush1.msra.mxu0 0.0
    %433 = vmatprep.subr.mxu0 0.0
    %434 = vmatpush1.msra.mxu0 0.0
    %435 = vmatprep.subr.mxu0 0.0
    %436 = vmatpush1.msra.mxu0 0.0
    %437 = vmatprep.subr.mxu0 0.0
    %438 = vmatpush1.msra.mxu0 0.0
    %439 = vmatprep.subr.mxu0 0.0
    %440 = vmatpush1.msra.mxu0 0.0
    %441 = vmatprep.subr.mxu0 0.0
    %442 = vmatpush1.msra.mxu0 0.0
    %443 = vmatprep.subr.mxu0 0.0
    %444 = vmatpush1.msra.mxu0 0.0
    %445 = vmatprep.subr.mxu0 0.0
    %446 = vmatpush1.msra.mxu0 0.0
    %447 = vmatprep.subr.mxu0 0.0
    %448 = vmatpush1.msra.mxu0 0.0
    %449 = vmatprep.subr.mxu0 0.0
    %450 = vmatpush1.msra.mxu0 0.0
    %451 = vmatprep.subr.mxu0 0.0
    %452 = vmatpush1.msra.mxu0 0.0
    %453 = vmatprep.subr.mxu0 0.0
    %454 = vmatpush1.msra.mxu0 0.0
    %455 = vmatprep.subr.mxu0 0.0
    %456 = vmatpush1.msra.mxu0 0.0
    %457 = vmatprep.subr.mxu0 0.0
    %458 = vmatpush1.msra.mxu0 0.0
    %459 = vmatprep.subr.mxu0 0.0
    %460 = vmatpush1.msra.mxu0 0.0
    %461 = vmatprep.subr.mxu0 0.0
    %462 = vmatpush1.msra.mxu0 0.0
    %463 = vmatprep.mubr.f32.mxu0 0.0
    %464 = vmatmul.mubr.f32.gmra.mrb[0].mxu0 %v397
    %v465 = vpop.f32.mrb[0].mxu0
    %v466 = vadd.f32 0.0, %v465
    %v467 = vpop.f32.mrb[0].mxu0
    %468 = vdwg.mxu0
    %469 = vrot.lane.b32.xlu0 %v121, 120
    %v470 = vpop.permute.xlu0 %469
    %471 = vrot.lane.b32.xlu0 %v121, 88
    %v472 = vpop.permute.xlu0 %471
    %v473 = vsel %vm139, %v470, 0
    %v475 = vsel %vm139, %v472, 0
    %477 = vmatprep.subr.mxu0 0.0
    %478 = vmatpush1.xpose.msra.mxu0 %v475
    %479 = vmatprep.subr.mxu0 0.0
    %480 = vmatpush1.xpose.msra.mxu0 0.0
    %481 = vmatprep.subr.mxu0 0.0
    %482 = vmatpush1.xpose.msra.mxu0 0.0
    %483 = vmatprep.subr.mxu0 0.0
    %484 = vmatpush1.xpose.msra.mxu0 0.0
    %485 = vmatprep.subr.mxu0 0.0
    %486 = vmatpush1.xpose.msra.mxu0 0.0
    %487 = vmatprep.subr.mxu0 0.0
    %488 = vmatpush1.xpose.msra.mxu0 0.0
    %489 = vmatprep.subr.mxu0 0.0
    %490 = vmatpush1.xpose.msra.mxu0 0.0
    %491 = vmatprep.subr.mxu0 0.0
    %492 = vmatpush1.xpose.msra.mxu0 0.0
    %493 = vmatprep.subr.mxu0 0.0
    %494 = vmatpush1.xpose.msra.mxu0 0.0
    %495 = vmatprep.subr.mxu0 0.0
    %496 = vmatpush1.xpose.msra.mxu0 0.0
    %497 = vmatprep.subr.mxu0 0.0
    %498 = vmatpush1.xpose.msra.mxu0 0.0
    %499 = vmatprep.subr.mxu0 0.0
    %500 = vmatpush1.xpose.msra.mxu0 0.0
    %501 = vmatprep.subr.mxu0 0.0
    %502 = vmatpush1.xpose.msra.mxu0 0.0
    %503 = vmatprep.subr.mxu0 0.0
    %504 = vmatpush1.xpose.msra.mxu0 0.0
    %505 = vmatprep.subr.mxu0 0.0
    %506 = vmatpush1.xpose.msra.mxu0 0.0
    %507 = vmatprep.subr.mxu0 0.0
    %508 = vmatpush1.xpose.msra.mxu0 0.0
    %509 = vmatprep.subr.mxu0 0.0
    %510 = vmatpush1.xpose.msra.mxu0 0.0
    %511 = vmatprep.subr.mxu0 0.0
    %512 = vmatpush1.xpose.msra.mxu0 0.0
    %513 = vmatprep.subr.mxu0 0.0
    %514 = vmatpush1.xpose.msra.mxu0 0.0
    %515 = vmatprep.subr.mxu0 0.0
    %516 = vmatpush1.xpose.msra.mxu0 0.0
    %517 = vmatprep.subr.mxu0 0.0
    %518 = vmatpush1.xpose.msra.mxu0 0.0
    %519 = vmatprep.subr.mxu0 0.0
    %520 = vmatpush1.xpose.msra.mxu0 0.0
    %521 = vmatprep.subr.mxu0 0.0
    %522 = vmatpush1.xpose.msra.mxu0 0.0
    %523 = vmatprep.subr.mxu0 0.0
    %524 = vmatpush1.xpose.msra.mxu0 0.0
    %525 = vmatprep.subr.mxu0 0.0
    %526 = vmatpush1.xpose.msra.mxu0 0.0
    %527 = vmatprep.subr.mxu0 0.0
    %528 = vmatpush1.xpose.msra.mxu0 0.0
    %529 = vmatprep.subr.mxu0 0.0
    %530 = vmatpush1.xpose.msra.mxu0 0.0
    %531 = vmatprep.subr.mxu0 0.0
    %532 = vmatpush1.xpose.msra.mxu0 0.0
    %533 = vmatprep.subr.mxu0 0.0
    %534 = vmatpush1.xpose.msra.mxu0 0.0
    %535 = vmatprep.subr.mxu0 0.0
    %536 = vmatpush1.xpose.msra.mxu0 0.0
    %537 = vmatprep.subr.mxu0 0.0
    %538 = vmatpush1.xpose.msra.mxu0 0.0
    %539 = vmatprep.subr.mxu0 0.0
    %540 = vmatpush1.xpose.msra.mxu0 0.0
    %541 = vmatprep.mubr.f32.mxu0 0.0
    %542 = vmatmul.mubr.f32.gmra.mrb[0].mxu0 %v473
    %v543 = vpop.f32.mrb[0].mxu0
    %v544 = vadd.f32 0.0, %v543
    %v545 = vpop.f32.mrb[0].mxu0
    %546 = vdwg.mxu0
    %547 = vrot.lane.b32.xlu0 %v126, 120
    %v548 = vpop.permute.xlu0 %547
    %549 = vrot.lane.b32.xlu0 %v126, 88
    %v550 = vpop.permute.xlu0 %549
    %v551 = vsel %vm139, %v548, 0
    %v553 = vsel %vm139, %v550, 0
    %555 = vmatprep.subr.mxu0 0.0
    %556 = vmatpush1.xpose.msra.mxu0 %v553
    %557 = vmatprep.subr.mxu0 0.0
    %558 = vmatpush1.xpose.msra.mxu0 0.0
    %559 = vmatprep.subr.mxu0 0.0
    %560 = vmatpush1.xpose.msra.mxu0 0.0
    %561 = vmatprep.subr.mxu0 0.0
    %562 = vmatpush1.xpose.msra.mxu0 0.0
    %563 = vmatprep.subr.mxu0 0.0
    %564 = vmatpush1.xpose.msra.mxu0 0.0
    %565 = vmatprep.subr.mxu0 0.0
    %566 = vmatpush1.xpose.msra.mxu0 0.0
    %567 = vmatprep.subr.mxu0 0.0
    %568 = vmatpush1.xpose.msra.mxu0 0.0
    %569 = vmatprep.subr.mxu0 0.0
    %570 = vmatpush1.xpose.msra.mxu0 0.0
    %571 = vmatprep.subr.mxu0 0.0
    %572 = vmatpush1.xpose.msra.mxu0 0.0
    %573 = vmatprep.subr.mxu0 0.0
    %574 = vmatpush1.xpose.msra.mxu0 0.0
    %575 = vmatprep.subr.mxu0 0.0
    %576 = vmatpush1.xpose.msra.mxu0 0.0
    %577 = vmatprep.subr.mxu0 0.0
    %578 = vmatpush1.xpose.msra.mxu0 0.0
    %579 = vmatprep.subr.mxu0 0.0
    %580 = vmatpush1.xpose.msra.mxu0 0.0
    %581 = vmatprep.subr.mxu0 0.0
    %582 = vmatpush1.xpose.msra.mxu0 0.0
    %583 = vmatprep.subr.mxu0 0.0
    %584 = vmatpush1.xpose.msra.mxu0 0.0
    %585 = vmatprep.subr.mxu0 0.0
    %586 = vmatpush1.xpose.msra.mxu0 0.0
    %587 = vmatprep.subr.mxu0 0.0
    %588 = vmatpush1.xpose.msra.mxu0 0.0
    %589 = vmatprep.subr.mxu0 0.0
    %590 = vmatpush1.xpose.msra.mxu0 0.0
    %591 = vmatprep.subr.mxu0 0.0
    %592 = vmatpush1.xpose.msra.mxu0 0.0
    %593 = vmatprep.subr.mxu0 0.0
    %594 = vmatpush1.xpose.msra.mxu0 0.0
    %595 = vmatprep.subr.mxu0 0.0
    %596 = vmatpush1.xpose.msra.mxu0 0.0
    %597 = vmatprep.subr.mxu0 0.0
    %598 = vmatpush1.xpose.msra.mxu0 0.0
    %599 = vmatprep.subr.mxu0 0.0
    %600 = vmatpush1.xpose.msra.mxu0 0.0
    %601 = vmatprep.subr.mxu0 0.0
    %602 = vmatpush1.xpose.msra.mxu0 0.0
    %603 = vmatprep.subr.mxu0 0.0
    %604 = vmatpush1.xpose.msra.mxu0 0.0
    %605 = vmatprep.subr.mxu0 0.0
    %606 = vmatpush1.xpose.msra.mxu0 0.0
    %607 = vmatprep.subr.mxu0 0.0
    %608 = vmatpush1.xpose.msra.mxu0 0.0
    %609 = vmatprep.subr.mxu0 0.0
    %610 = vmatpush1.xpose.msra.mxu0 0.0
    %611 = vmatprep.subr.mxu0 0.0
    %612 = vmatpush1.xpose.msra.mxu0 0.0
    %613 = vmatprep.subr.mxu0 0.0
    %614 = vmatpush1.xpose.msra.mxu0 0.0
    %615 = vmatprep.subr.mxu0 0.0
    %616 = vmatpush1.xpose.msra.mxu0 0.0
    %617 = vmatprep.subr.mxu0 0.0
    %618 = vmatpush1.xpose.msra.mxu0 0.0
    %619 = vmatprep.mubr.f32.mxu0 0.0
    %620 = vmatmul.mubr.f32.gmra.mrb[0].mxu0 %v551
    %v621 = vpop.f32.mrb[0].mxu0
    %v622 = vadd.f32 0.0, %v621
    %v623 = vpop.f32.mrb[0].mxu0
    %624 = vdwg.mxu0
    %v625 = vmul.f32 %v544, 0.35355338
    %v626 = vmul.f32 %v622, 0.35355338
    %v627 = vadd.f32 %v625, %v129
    %v628 = vadd.f32 %v626, %v130
    %v629 = vsel %vm139, %v627, -inf
    %630 = vmax.xlane.f32.xlu0 %v629
    %v631 = vpop.xlane.xlu0 %630
    %v632 = vsel %vm139, %v628, -inf
    %633 = vmax.xlane.f32.xlu0 %v632
    %v634 = vpop.xlane.xlu0 %633
    %v635 = vsub.f32 %v627, %v631
    %v636 = vsub.f32 %v628, %v634
    %v637 = vmul.f32 %v635, 1.442695
    %v638 = vpow.pop %v637
    %v639 = vmul.f32 %v636, 1.442695
    %v640 = vpow.pop %v639
    %v641 = vsel %vm139, %v638, 0.0
    %642 = vadd.xlane.f32.xlu0 %v641
    %v643 = vpop.xlane.xlu0 %642
    %v644 = vsel %vm139, %v640, 0.0
    %645 = vadd.xlane.f32.xlu0 %v644
    %v646 = vpop.xlane.xlu0 %645
    %v647 = vrcp.pop %v643
    %v648 = vrcp.pop %v646
    %v649 = vmul.f32 %v638, %v647
    %v650 = vmul.f32 %v640, %v648
    %651 = vrot.lane.b32.xlu0 %v121, 56
    %v652 = vpop.permute.xlu0 %651
    %v655 = vsel %vm139, %v649, 0
    %657 = vmatprep.subr.mxu0 0.0
    %658 = vmatpush1.msra.mxu0 %v652
    %659 = vmatprep.subr.mxu0 0.0
    %660 = vmatpush1.msra.mxu0 0.0
    %661 = vmatprep.subr.mxu0 0.0
    %662 = vmatpush1.msra.mxu0 0.0
    %663 = vmatprep.subr.mxu0 0.0
    %664 = vmatpush1.msra.mxu0 0.0
    %665 = vmatprep.subr.mxu0 0.0
    %666 = vmatpush1.msra.mxu0 0.0
    %667 = vmatprep.subr.mxu0 0.0
    %668 = vmatpush1.msra.mxu0 0.0
    %669 = vmatprep.subr.mxu0 0.0
    %670 = vmatpush1.msra.mxu0 0.0
    %671 = vmatprep.subr.mxu0 0.0
    %672 = vmatpush1.msra.mxu0 0.0
    %673 = vmatprep.subr.mxu0 0.0
    %674 = vmatpush1.msra.mxu0 0.0
    %675 = vmatprep.subr.mxu0 0.0
    %676 = vmatpush1.msra.mxu0 0.0
    %677 = vmatprep.subr.mxu0 0.0
    %678 = vmatpush1.msra.mxu0 0.0
    %679 = vmatprep.subr.mxu0 0.0
    %680 = vmatpush1.msra.mxu0 0.0
    %681 = vmatprep.subr.mxu0 0.0
    %682 = vmatpush1.msra.mxu0 0.0
    %683 = vmatprep.subr.mxu0 0.0
    %684 = vmatpush1.msra.mxu0 0.0
    %685 = vmatprep.subr.mxu0 0.0
    %686 = vmatpush1.msra.mxu0 0.0
    %687 = vmatprep.subr.mxu0 0.0
    %688 = vmatpush1.msra.mxu0 0.0
    %689 = vmatprep.subr.mxu0 0.0
    %690 = vmatpush1.msra.mxu0 0.0
    %691 = vmatprep.subr.mxu0 0.0
    %692 = vmatpush1.msra.mxu0 0.0
    %693 = vmatprep.subr.mxu0 0.0
    %694 = vmatpush1.msra.mxu0 0.0
    %695 = vmatprep.subr.mxu0 0.0
    %696 = vmatpush1.msra.mxu0 0.0
    %697 = vmatprep.subr.mxu0 0.0
    %698 = vmatpush1.msra.mxu0 0.0
    %699 = vmatprep.subr.mxu0 0.0
    %700 = vmatpush1.msra.mxu0 0.0
    %701 = vmatprep.subr.mxu0 0.0
    %702 = vmatpush1.msra.mxu0 0.0
    %703 = vmatprep.subr.mxu0 0.0
    %704 = vmatpush1.msra.mxu0 0.0
    %705 = vmatprep.subr.mxu0 0.0
    %706 = vmatpush1.msra.mxu0 0.0
    %707 = vmatprep.subr.mxu0 0.0
    %708 = vmatpush1.msra.mxu0 0.0
    %709 = vmatprep.subr.mxu0 0.0
    %710 = vmatpush1.msra.mxu0 0.0
    %711 = vmatprep.subr.mxu0 0.0
    %712 = vmatpush1.msra.mxu0 0.0
    %713 = vmatprep.subr.mxu0 0.0
    %714 = vmatpush1.msra.mxu0 0.0
    %715 = vmatprep.subr.mxu0 0.0
    %716 = vmatpush1.msra.mxu0 0.0
    %717 = vmatprep.subr.mxu0 0.0
    %718 = vmatpush1.msra.mxu0 0.0
    %719 = vmatprep.subr.mxu0 0.0
    %720 = vmatpush1.msra.mxu0 0.0
    %721 = vmatprep.mubr.f32.mxu0 0.0
    %722 = vmatmul.mubr.f32.gmra.mrb[0].mxu0 %v655
    %v723 = vpop.f32.mrb[0].mxu0
    %v724 = vadd.f32 0.0, %v723
    %v725 = vpop.f32.mrb[0].mxu0
    %726 = vdwg.mxu0
    %727 = vrot.lane.b32.xlu0 %v126, 56
    %v728 = vpop.permute.xlu0 %727
    %v731 = vsel %vm139, %v650, 0
    %733 = vmatprep.subr.mxu0 0.0
    %734 = vmatpush1.msra.mxu0 %v728
    %735 = vmatprep.subr.mxu0 0.0
    %736 = vmatpush1.msra.mxu0 0.0
    %737 = vmatprep.subr.mxu0 0.0
    %738 = vmatpush1.msra.mxu0 0.0
    %739 = vmatprep.subr.mxu0 0.0
    %740 = vmatpush1.msra.mxu0 0.0
    %741 = vmatprep.subr.mxu0 0.0
    %742 = vmatpush1.msra.mxu0 0.0
    %743 = vmatprep.subr.mxu0 0.0
    %744 = vmatpush1.msra.mxu0 0.0
    %745 = vmatprep.subr.mxu0 0.0
    %746 = vmatpush1.msra.mxu0 0.0
    %747 = vmatprep.subr.mxu0 0.0
    %748 = vmatpush1.msra.mxu0 0.0
    %749 = vmatprep.subr.mxu0 0.0
    %750 = vmatpush1.msra.mxu0 0.0
    %751 = vmatprep.subr.mxu0 0.0
    %752 = vmatpush1.msra.mxu0 0.0
    %753 = vmatprep.subr.mxu0 0.0
    %754 = vmatpush1.msra.mxu0 0.0
    %755 = vmatprep.subr.mxu0 0.0
    %756 = vmatpush1.msra.mxu0 0.0
    %757 = vmatprep.subr.mxu0 0.0
    %758 = vmatpush1.msra.mxu0 0.0
    %759 = vmatprep.subr.mxu0 0.0
    %760 = vmatpush1.msra.mxu0 0.0
    %761 = vmatprep.subr.mxu0 0.0
    %762 = vmatpush1.msra.mxu0 0.0
    %763 = vmatprep.subr.mxu0 0.0
    %764 = vmatpush1.msra.mxu0 0.0
    %765 = vmatprep.subr.mxu0 0.0
    %766 = vmatpush1.msra.mxu0 0.0
    %767 = vmatprep.subr.mxu0 0.0
    %768 = vmatpush1.msra.mxu0 0.0
    %769 = vmatprep.subr.mxu0 0.0
    %770 = vmatpush1.msra.mxu0 0.0
    %771 = vmatprep.subr.mxu0 0.0
    %772 = vmatpush1.msra.mxu0 0.0
    %773 = vmatprep.subr.mxu0 0.0
    %774 = vmatpush1.msra.mxu0 0.0
    %775 = vmatprep.subr.mxu0 0.0
    %776 = vmatpush1.msra.mxu0 0.0
    %777 = vmatprep.subr.mxu0 0.0
    %778 = vmatpush1.msra.mxu0 0.0
    %779 = vmatprep.subr.mxu0 0.0
    %780 = vmatpush1.msra.mxu0 0.0
    %781 = vmatprep.subr.mxu0 0.0
    %782 = vmatpush1.msra.mxu0 0.0
    %783 = vmatprep.subr.mxu0 0.0
    %784 = vmatpush1.msra.mxu0 0.0
    %785 = vmatprep.subr.mxu0 0.0
    %786 = vmatpush1.msra.mxu0 0.0
    %787 = vmatprep.subr.mxu0 0.0
    %788 = vmatpush1.msra.mxu0 0.0
    %789 = vmatprep.subr.mxu0 0.0
    %790 = vmatpush1.msra.mxu0 0.0
    %791 = vmatprep.subr.mxu0 0.0
    %792 = vmatpush1.msra.mxu0 0.0
    %793 = vmatprep.subr.mxu0 0.0
    %794 = vmatpush1.msra.mxu0 0.0
    %795 = vmatprep.subr.mxu0 0.0
    %796 = vmatpush1.msra.mxu0 0.0
    %797 = vmatprep.mubr.f32.mxu0 0.0
    %798 = vmatmul.mubr.f32.gmra.mrb[0].mxu0 %v731
    %v799 = vpop.f32.mrb[0].mxu0
    %v800 = vadd.f32 0.0, %v799
    %v801 = vpop.f32.mrb[0].mxu0
    %802 = vdwg.mxu0
    %803 = vrot.lane.b32.xlu0 %v121, 112
    %v804 = vpop.permute.xlu0 %803
    %805 = vrot.lane.b32.xlu0 %v121, 80
    %v806 = vpop.permute.xlu0 %805
    %v807 = vsel %vm139, %v804, 0
    %v809 = vsel %vm139, %v806, 0
    %811 = vmatprep.subr.mxu0 0.0
    %812 = vmatpush1.xpose.msra.mxu0 %v809
    %813 = vmatprep.subr.mxu0 0.0
    %814 = vmatpush1.xpose.msra.mxu0 0.0
    %815 = vmatprep.subr.mxu0 0.0
    %816 = vmatpush1.xpose.msra.mxu0 0.0
    %817 = vmatprep.subr.mxu0 0.0
    %818 = vmatpush1.xpose.msra.mxu0 0.0
    %819 = vmatprep.subr.mxu0 0.0
    %820 = vmatpush1.xpose.msra.mxu0 0.0
    %821 = vmatprep.subr.mxu0 0.0
    %822 = vmatpush1.xpose.msra.mxu0 0.0
    %823 = vmatprep.subr.mxu0 0.0
    %824 = vmatpush1.xpose.msra.mxu0 0.0
    %825 = vmatprep.subr.mxu0 0.0
    %826 = vmatpush1.xpose.msra.mxu0 0.0
    %827 = vmatprep.subr.mxu0 0.0
    %828 = vmatpush1.xpose.msra.mxu0 0.0
    %829 = vmatprep.subr.mxu0 0.0
    %830 = vmatpush1.xpose.msra.mxu0 0.0
    %831 = vmatprep.subr.mxu0 0.0
    %832 = vmatpush1.xpose.msra.mxu0 0.0
    %833 = vmatprep.subr.mxu0 0.0
    %834 = vmatpush1.xpose.msra.mxu0 0.0
    %835 = vmatprep.subr.mxu0 0.0
    %836 = vmatpush1.xpose.msra.mxu0 0.0
    %837 = vmatprep.subr.mxu0 0.0
    %838 = vmatpush1.xpose.msra.mxu0 0.0
    %839 = vmatprep.subr.mxu0 0.0
    %840 = vmatpush1.xpose.msra.mxu0 0.0
    %841 = vmatprep.subr.mxu0 0.0
    %842 = vmatpush1.xpose.msra.mxu0 0.0
    %843 = vmatprep.subr.mxu0 0.0
    %844 = vmatpush1.xpose.msra.mxu0 0.0
    %845 = vmatprep.subr.mxu0 0.0
    %846 = vmatpush1.xpose.msra.mxu0 0.0
    %847 = vmatprep.subr.mxu0 0.0
    %848 = vmatpush1.xpose.msra.mxu0 0.0
    %849 = vmatprep.subr.mxu0 0.0
    %850 = vmatpush1.xpose.msra.mxu0 0.0
    %851 = vmatprep.subr.mxu0 0.0
    %852 = vmatpush1.xpose.msra.mxu0 0.0
    %853 = vmatprep.subr.mxu0 0.0
    %854 = vmatpush1.xpose.msra.mxu0 0.0
    %855 = vmatprep.subr.mxu0 0.0
    %856 = vmatpush1.xpose.msra.mxu0 0.0
    %857 = vmatprep.subr.mxu0 0.0
    %858 = vmatpush1.xpose.msra.mxu0 0.0
    %859 = vmatprep.subr.mxu0 0.0
    %860 = vmatpush1.xpose.msra.mxu0 0.0
    %861 = vmatprep.subr.mxu0 0.0
    %862 = vmatpush1.xpose.msra.mxu0 0.0
    %863 = vmatprep.subr.mxu0 0.0
    %864 = vmatpush1.xpose.msra.mxu0 0.0
    %865 = vmatprep.subr.mxu0 0.0
    %866 = vmatpush1.xpose.msra.mxu0 0.0
    %867 = vmatprep.subr.mxu0 0.0
    %868 = vmatpush1.xpose.msra.mxu0 0.0
    %869 = vmatprep.subr.mxu0 0.0
    %870 = vmatpush1.xpose.msra.mxu0 0.0
    %871 = vmatprep.subr.mxu0 0.0
    %872 = vmatpush1.xpose.msra.mxu0 0.0
    %873 = vmatprep.subr.mxu0 0.0
    %874 = vmatpush1.xpose.msra.mxu0 0.0
    %875 = vmatprep.mubr.f32.mxu0 0.0
    %876 = vmatmul.mubr.f32.gmra.mrb[0].mxu0 %v807
    %v877 = vpop.f32.mrb[0].mxu0
    %v878 = vadd.f32 0.0, %v877
    %v879 = vpop.f32.mrb[0].mxu0
    %880 = vdwg.mxu0
    %881 = vrot.lane.b32.xlu0 %v126, 112
    %v882 = vpop.permute.xlu0 %881
    %883 = vrot.lane.b32.xlu0 %v126, 80
    %v884 = vpop.permute.xlu0 %883
    %v885 = vsel %vm139, %v882, 0
    %v887 = vsel %vm139, %v884, 0
    %889 = vmatprep.subr.mxu0 0.0
    %890 = vmatpush1.xpose.msra.mxu0 %v887
    %891 = vmatprep.subr.mxu0 0.0
    %892 = vmatpush1.xpose.msra.mxu0 0.0
    %893 = vmatprep.subr.mxu0 0.0
    %894 = vmatpush1.xpose.msra.mxu0 0.0
    %895 = vmatprep.subr.mxu0 0.0
    %896 = vmatpush1.xpose.msra.mxu0 0.0
    %897 = vmatprep.subr.mxu0 0.0
    %898 = vmatpush1.xpose.msra.mxu0 0.0
    %899 = vmatprep.subr.mxu0 0.0
    %900 = vmatpush1.xpose.msra.mxu0 0.0
    %901 = vmatprep.subr.mxu0 0.0
    %902 = vmatpush1.xpose.msra.mxu0 0.0
    %903 = vmatprep.subr.mxu0 0.0
    %904 = vmatpush1.xpose.msra.mxu0 0.0
    %905 = vmatprep.subr.mxu0 0.0
    %906 = vmatpush1.xpose.msra.mxu0 0.0
    %907 = vmatprep.subr.mxu0 0.0
    %908 = vmatpush1.xpose.msra.mxu0 0.0
    %909 = vmatprep.subr.mxu0 0.0
    %910 = vmatpush1.xpose.msra.mxu0 0.0
    %911 = vmatprep.subr.mxu0 0.0
    %912 = vmatpush1.xpose.msra.mxu0 0.0
    %913 = vmatprep.subr.mxu0 0.0
    %914 = vmatpush1.xpose.msra.mxu0 0.0
    %915 = vmatprep.subr.mxu0 0.0
    %916 = vmatpush1.xpose.msra.mxu0 0.0
    %917 = vmatprep.subr.mxu0 0.0
    %918 = vmatpush1.xpose.msra.mxu0 0.0
    %919 = vmatprep.subr.mxu0 0.0
    %920 = vmatpush1.xpose.msra.mxu0 0.0
    %921 = vmatprep.subr.mxu0 0.0
    %922 = vmatpush1.xpose.msra.mxu0 0.0
    %923 = vmatprep.subr.mxu0 0.0
    %924 = vmatpush1.xpose.msra.mxu0 0.0
    %925 = vmatprep.subr.mxu0 0.0
    %926 = vmatpush1.xpose.msra.mxu0 0.0
    %927 = vmatprep.subr.mxu0 0.0
    %928 = vmatpush1.xpose.msra.mxu0 0.0
    %929 = vmatprep.subr.mxu0 0.0
    %930 = vmatpush1.xpose.msra.mxu0 0.0
    %931 = vmatprep.subr.mxu0 0.0
    %932 = vmatpush1.xpose.msra.mxu0 0.0
    %933 = vmatprep.subr.mxu0 0.0
    %934 = vmatpush1.xpose.msra.mxu0 0.0
    %935 = vmatprep.subr.mxu0 0.0
    %936 = vmatpush1.xpose.msra.mxu0 0.0
    %937 = vmatprep.subr.mxu0 0.0
    %938 = vmatpush1.xpose.msra.mxu0 0.0
    %939 = vmatprep.subr.mxu0 0.0
    %940 = vmatpush1.xpose.msra.mxu0 0.0
    %941 = vmatprep.subr.mxu0 0.0
    %942 = vmatpush1.xpose.msra.mxu0 0.0
    %943 = vmatprep.subr.mxu0 0.0
    %944 = vmatpush1.xpose.msra.mxu0 0.0
    %945 = vmatprep.subr.mxu0 0.0
    %946 = vmatpush1.xpose.msra.mxu0 0.0
    %947 = vmatprep.subr.mxu0 0.0
    %948 = vmatpush1.xpose.msra.mxu0 0.0
    %949 = vmatprep.subr.mxu0 0.0
    %950 = vmatpush1.xpose.msra.mxu0 0.0
    %951 = vmatprep.subr.mxu0 0.0
    %952 = vmatpush1.xpose.msra.mxu0 0.0
    %953 = vmatprep.mubr.f32.mxu0 0.0
    %954 = vmatmul.mubr.f32.gmra.mrb[0].mxu0 %v885
    %v955 = vpop.f32.mrb[0].mxu0
    %v956 = vadd.f32 0.0, %v955
    %v957 = vpop.f32.mrb[0].mxu0
    %958 = vdwg.mxu0
    %v959 = vmul.f32 %v878, 0.35355338
    %v960 = vmul.f32 %v956, 0.35355338
    %v961 = vadd.f32 %v959, %v129
    %v962 = vadd.f32 %v960, %v130
    %v963 = vsel %vm139, %v961, -inf
    %964 = vmax.xlane.f32.xlu0 %v963
    %v965 = vpop.xlane.xlu0 %964
    %v966 = vsel %vm139, %v962, -inf
    %967 = vmax.xlane.f32.xlu0 %v966
    %v968 = vpop.xlane.xlu0 %967
    %v969 = vsub.f32 %v961, %v965
    %v970 = vsub.f32 %v962, %v968
    %v971 = vmul.f32 %v969, 1.442695
    %v972 = vpow.pop %v971
    %v973 = vmul.f32 %v970, 1.442695
    %v974 = vpow.pop %v973
    %v975 = vsel %vm139, %v972, 0.0
    %976 = vadd.xlane.f32.xlu0 %v975
    %v977 = vpop.xlane.xlu0 %976
    %v978 = vsel %vm139, %v974, 0.0
    %979 = vadd.xlane.f32.xlu0 %v978
    %v980 = vpop.xlane.xlu0 %979
    %v981 = vrcp.pop %v977
    %v982 = vrcp.pop %v980
    %v983 = vmul.f32 %v972, %v981
    %v984 = vmul.f32 %v974, %v982
    %985 = vrot.lane.b32.xlu0 %v121, 48
    %v986 = vpop.permute.xlu0 %985
    %v989 = vsel %vm139, %v983, 0
    %991 = vmatprep.subr.mxu0 0.0
    %992 = vmatpush1.msra.mxu0 %v986
    %993 = vmatprep.subr.mxu0 0.0
    %994 = vmatpush1.msra.mxu0 0.0
    %995 = vmatprep.subr.mxu0 0.0
    %996 = vmatpush1.msra.mxu0 0.0
    %997 = vmatprep.subr.mxu0 0.0
    %998 = vmatpush1.msra.mxu0 0.0
    %999 = vmatprep.subr.mxu0 0.0
    %1000 = vmatpush1.msra.mxu0 0.0
    %1001 = vmatprep.subr.mxu0 0.0
    %1002 = vmatpush1.msra.mxu0 0.0
    %1003 = vmatprep.subr.mxu0 0.0
    %1004 = vmatpush1.msra.mxu0 0.0
    %1005 = vmatprep.subr.mxu0 0.0
    %1006 = vmatpush1.msra.mxu0 0.0
    %1007 = vmatprep.subr.mxu0 0.0
    %1008 = vmatpush1.msra.mxu0 0.0
    %1009 = vmatprep.subr.mxu0 0.0
    %1010 = vmatpush1.msra.mxu0 0.0
    %1011 = vmatprep.subr.mxu0 0.0
    %1012 = vmatpush1.msra.mxu0 0.0
    %1013 = vmatprep.subr.mxu0 0.0
    %1014 = vmatpush1.msra.mxu0 0.0
    %1015 = vmatprep.subr.mxu0 0.0
    %1016 = vmatpush1.msra.mxu0 0.0
    %1017 = vmatprep.subr.mxu0 0.0
    %1018 = vmatpush1.msra.mxu0 0.0
    %1019 = vmatprep.subr.mxu0 0.0
    %1020 = vmatpush1.msra.mxu0 0.0
    %1021 = vmatprep.subr.mxu0 0.0
    %1022 = vmatpush1.msra.mxu0 0.0
    %1023 = vmatprep.subr.mxu0 0.0
    %1024 = vmatpush1.msra.mxu0 0.0
    %1025 = vmatprep.subr.mxu0 0.0
    %1026 = vmatpush1.msra.mxu0 0.0
    %1027 = vmatprep.subr.mxu0 0.0
    %1028 = vmatpush1.msra.mxu0 0.0
    %1029 = vmatprep.subr.mxu0 0.0
    %1030 = vmatpush1.msra.mxu0 0.0
    %1031 = vmatprep.subr.mxu0 0.0
    %1032 = vmatpush1.msra.mxu0 0.0
    %1033 = vmatprep.subr.mxu0 0.0
    %1034 = vmatpush1.msra.mxu0 0.0
    %1035 = vmatprep.subr.mxu0 0.0
    %1036 = vmatpush1.msra.mxu0 0.0
    %1037 = vmatprep.subr.mxu0 0.0
    %1038 = vmatpush1.msra.mxu0 0.0
    %1039 = vmatprep.subr.mxu0 0.0
    %1040 = vmatpush1.msra.mxu0 0.0
    %1041 = vmatprep.subr.mxu0 0.0
    %1042 = vmatpush1.msra.mxu0 0.0
    %1043 = vmatprep.subr.mxu0 0.0
    %1044 = vmatpush1.msra.mxu0 0.0
    %1045 = vmatprep.subr.mxu0 0.0
    %1046 = vmatpush1.msra.mxu0 0.0
    %1047 = vmatprep.subr.mxu0 0.0
    %1048 = vmatpush1.msra.mxu0 0.0
    %1049 = vmatprep.subr.mxu0 0.0
    %1050 = vmatpush1.msra.mxu0 0.0
    %1051 = vmatprep.subr.mxu0 0.0
    %1052 = vmatpush1.msra.mxu0 0.0
    %1053 = vmatprep.subr.mxu0 0.0
    %1054 = vmatpush1.msra.mxu0 0.0
    %1055 = vmatprep.mubr.f32.mxu0 0.0
    %1056 = vmatmul.mubr.f32.gmra.mrb[0].mxu0 %v989
    %v1057 = vpop.f32.mrb[0].mxu0
    %v1058 = vadd.f32 0.0, %v1057
    %v1059 = vpop.f32.mrb[0].mxu0
    %1060 = vdwg.mxu0
    %1061 = vrot.lane.b32.xlu0 %v126, 48
    %v1062 = vpop.permute.xlu0 %1061
    %v1065 = vsel %vm139, %v984, 0
    %1067 = vmatprep.subr.mxu0 0.0
    %1068 = vmatpush1.msra.mxu0 %v1062
    %1069 = vmatprep.subr.mxu0 0.0
    %1070 = vmatpush1.msra.mxu0 0.0
    %1071 = vmatprep.subr.mxu0 0.0
    %1072 = vmatpush1.msra.mxu0 0.0
    %1073 = vmatprep.subr.mxu0 0.0
    %1074 = vmatpush1.msra.mxu0 0.0
    %1075 = vmatprep.subr.mxu0 0.0
    %1076 = vmatpush1.msra.mxu0 0.0
    %1077 = vmatprep.subr.mxu0 0.0
    %1078 = vmatpush1.msra.mxu0 0.0
    %1079 = vmatprep.subr.mxu0 0.0
    %1080 = vmatpush1.msra.mxu0 0.0
    %1081 = vmatprep.subr.mxu0 0.0
    %1082 = vmatpush1.msra.mxu0 0.0
    %1083 = vmatprep.subr.mxu0 0.0
    %1084 = vmatpush1.msra.mxu0 0.0
    %1085 = vmatprep.subr.mxu0 0.0
    %1086 = vmatpush1.msra.mxu0 0.0
    %1087 = vmatprep.subr.mxu0 0.0
    %1088 = vmatpush1.msra.mxu0 0.0
    %1089 = vmatprep.subr.mxu0 0.0
    %1090 = vmatpush1.msra.mxu0 0.0
    %1091 = vmatprep.subr.mxu0 0.0
    %1092 = vmatpush1.msra.mxu0 0.0
    %1093 = vmatprep.subr.mxu0 0.0
    %1094 = vmatpush1.msra.mxu0 0.0
    %1095 = vmatprep.subr.mxu0 0.0
    %1096 = vmatpush1.msra.mxu0 0.0
    %1097 = vmatprep.subr.mxu0 0.0
    %1098 = vmatpush1.msra.mxu0 0.0
    %1099 = vmatprep.subr.mxu0 0.0
    %1100 = vmatpush1.msra.mxu0 0.0
    %1101 = vmatprep.subr.mxu0 0.0
    %1102 = vmatpush1.msra.mxu0 0.0
    %1103 = vmatprep.subr.mxu0 0.0
    %1104 = vmatpush1.msra.mxu0 0.0
    %1105 = vmatprep.subr.mxu0 0.0
    %1106 = vmatpush1.msra.mxu0 0.0
    %1107 = vmatprep.subr.mxu0 0.0
    %1108 = vmatpush1.msra.mxu0 0.0
    %1109 = vmatprep.subr.mxu0 0.0
    %1110 = vmatpush1.msra.mxu0 0.0
    %1111 = vmatprep.subr.mxu0 0.0
    %1112 = vmatpush1.msra.mxu0 0.0
    %1113 = vmatprep.subr.mxu0 0.0
    %1114 = vmatpush1.msra.mxu0 0.0
    %1115 = vmatprep.subr.mxu0 0.0
    %1116 = vmatpush1.msra.mxu0 0.0
    %1117 = vmatprep.subr.mxu0 0.0
    %1118 = vmatpush1.msra.mxu0 0.0
    %1119 = vmatprep.subr.mxu0 0.0
    %1120 = vmatpush1.msra.mxu0 0.0
    %1121 = vmatprep.subr.mxu0 0.0
    %1122 = vmatpush1.msra.mxu0 0.0
    %1123 = vmatprep.subr.mxu0 0.0
    %1124 = vmatpush1.msra.mxu0 0.0
    %1125 = vmatprep.subr.mxu0 0.0
    %1126 = vmatpush1.msra.mxu0 0.0
    %1127 = vmatprep.subr.mxu0 0.0
    %1128 = vmatpush1.msra.mxu0 0.0
    %1129 = vmatprep.subr.mxu0 0.0
    %1130 = vmatpush1.msra.mxu0 0.0
    %1131 = vmatprep.mubr.f32.mxu0 0.0
    %1132 = vmatmul.mubr.f32.gmra.mrb[0].mxu0 %v1065
    %v1133 = vpop.f32.mrb[0].mxu0
    %v1134 = vadd.f32 0.0, %v1133
    %v1135 = vpop.f32.mrb[0].mxu0
    %1136 = vdwg.mxu0
    %1137 = vrot.lane.b32.xlu0 %v121, 104
    %v1138 = vpop.permute.xlu0 %1137
    %1139 = vrot.lane.b32.xlu0 %v121, 72
    %v1140 = vpop.permute.xlu0 %1139
    %v1141 = vsel %vm139, %v1138, 0
    %v1143 = vsel %vm139, %v1140, 0
    %1145 = vmatprep.subr.mxu0 0.0
    %1146 = vmatpush1.xpose.msra.mxu0 %v1143
    %1147 = vmatprep.subr.mxu0 0.0
    %1148 = vmatpush1.xpose.msra.mxu0 0.0
    %1149 = vmatprep.subr.mxu0 0.0
    %1150 = vmatpush1.xpose.msra.mxu0 0.0
    %1151 = vmatprep.subr.mxu0 0.0
    %1152 = vmatpush1.xpose.msra.mxu0 0.0
    %1153 = vmatprep.subr.mxu0 0.0
    %1154 = vmatpush1.xpose.msra.mxu0 0.0
    %1155 = vmatprep.subr.mxu0 0.0
    %1156 = vmatpush1.xpose.msra.mxu0 0.0
    %1157 = vmatprep.subr.mxu0 0.0
    %1158 = vmatpush1.xpose.msra.mxu0 0.0
    %1159 = vmatprep.subr.mxu0 0.0
    %1160 = vmatpush1.xpose.msra.mxu0 0.0
    %1161 = vmatprep.subr.mxu0 0.0
    %1162 = vmatpush1.xpose.msra.mxu0 0.0
    %1163 = vmatprep.subr.mxu0 0.0
    %1164 = vmatpush1.xpose.msra.mxu0 0.0
    %1165 = vmatprep.subr.mxu0 0.0
    %1166 = vmatpush1.xpose.msra.mxu0 0.0
    %1167 = vmatprep.subr.mxu0 0.0
    %1168 = vmatpush1.xpose.msra.mxu0 0.0
    %1169 = vmatprep.subr.mxu0 0.0
    %1170 = vmatpush1.xpose.msra.mxu0 0.0
    %1171 = vmatprep.subr.mxu0 0.0
    %1172 = vmatpush1.xpose.msra.mxu0 0.0
    %1173 = vmatprep.subr.mxu0 0.0
    %1174 = vmatpush1.xpose.msra.mxu0 0.0
    %1175 = vmatprep.subr.mxu0 0.0
    %1176 = vmatpush1.xpose.msra.mxu0 0.0
    %1177 = vmatprep.subr.mxu0 0.0
    %1178 = vmatpush1.xpose.msra.mxu0 0.0
    %1179 = vmatprep.subr.mxu0 0.0
    %1180 = vmatpush1.xpose.msra.mxu0 0.0
    %1181 = vmatprep.subr.mxu0 0.0
    %1182 = vmatpush1.xpose.msra.mxu0 0.0
    %1183 = vmatprep.subr.mxu0 0.0
    %1184 = vmatpush1.xpose.msra.mxu0 0.0
    %1185 = vmatprep.subr.mxu0 0.0
    %1186 = vmatpush1.xpose.msra.mxu0 0.0
    %1187 = vmatprep.subr.mxu0 0.0
    %1188 = vmatpush1.xpose.msra.mxu0 0.0
    %1189 = vmatprep.subr.mxu0 0.0
    %1190 = vmatpush1.xpose.msra.mxu0 0.0
    %1191 = vmatprep.subr.mxu0 0.0
    %1192 = vmatpush1.xpose.msra.mxu0 0.0
    %1193 = vmatprep.subr.mxu0 0.0
    %1194 = vmatpush1.xpose.msra.mxu0 0.0
    %1195 = vmatprep.subr.mxu0 0.0
    %1196 = vmatpush1.xpose.msra.mxu0 0.0
    %1197 = vmatprep.subr.mxu0 0.0
    %1198 = vmatpush1.xpose.msra.mxu0 0.0
    %1199 = vmatprep.subr.mxu0 0.0
    %1200 = vmatpush1.xpose.msra.mxu0 0.0
    %1201 = vmatprep.subr.mxu0 0.0
    %1202 = vmatpush1.xpose.msra.mxu0 0.0
    %1203 = vmatprep.subr.mxu0 0.0
    %1204 = vmatpush1.xpose.msra.mxu0 0.0
    %1205 = vmatprep.subr.mxu0 0.0
    %1206 = vmatpush1.xpose.msra.mxu0 0.0
    %1207 = vmatprep.subr.mxu0 0.0
    %1208 = vmatpush1.xpose.msra.mxu0 0.0
    %1209 = vmatprep.mubr.f32.mxu0 0.0
    %1210 = vmatmul.mubr.f32.gmra.mrb[0].mxu0 %v1141
    %v1211 = vpop.f32.mrb[0].mxu0
    %v1212 = vadd.f32 0.0, %v1211
    %v1213 = vpop.f32.mrb[0].mxu0
    %1214 = vdwg.mxu0
    %1215 = vrot.lane.b32.xlu0 %v126, 104
    %v1216 = vpop.permute.xlu0 %1215
    %1217 = vrot.lane.b32.xlu0 %v126, 72
    %v1218 = vpop.permute.xlu0 %1217
    %v1219 = vsel %vm139, %v1216, 0
    %v1221 = vsel %vm139, %v1218, 0
    %1223 = vmatprep.subr.mxu0 0.0
    %1224 = vmatpush1.xpose.msra.mxu0 %v1221
    %1225 = vmatprep.subr.mxu0 0.0
    %1226 = vmatpush1.xpose.msra.mxu0 0.0
    %1227 = vmatprep.subr.mxu0 0.0
    %1228 = vmatpush1.xpose.msra.mxu0 0.0
    %1229 = vmatprep.subr.mxu0 0.0
    %1230 = vmatpush1.xpose.msra.mxu0 0.0
    %1231 = vmatprep.subr.mxu0 0.0
    %1232 = vmatpush1.xpose.msra.mxu0 0.0
    %1233 = vmatprep.subr.mxu0 0.0
    %1234 = vmatpush1.xpose.msra.mxu0 0.0
    %1235 = vmatprep.subr.mxu0 0.0
    %1236 = vmatpush1.xpose.msra.mxu0 0.0
    %1237 = vmatprep.subr.mxu0 0.0
    %1238 = vmatpush1.xpose.msra.mxu0 0.0
    %1239 = vmatprep.subr.mxu0 0.0
    %1240 = vmatpush1.xpose.msra.mxu0 0.0
    %1241 = vmatprep.subr.mxu0 0.0
    %1242 = vmatpush1.xpose.msra.mxu0 0.0
    %1243 = vmatprep.subr.mxu0 0.0
    %1244 = vmatpush1.xpose.msra.mxu0 0.0
    %1245 = vmatprep.subr.mxu0 0.0
    %1246 = vmatpush1.xpose.msra.mxu0 0.0
    %1247 = vmatprep.subr.mxu0 0.0
    %1248 = vmatpush1.xpose.msra.mxu0 0.0
    %1249 = vmatprep.subr.mxu0 0.0
    %1250 = vmatpush1.xpose.msra.mxu0 0.0
    %1251 = vmatprep.subr.mxu0 0.0
    %1252 = vmatpush1.xpose.msra.mxu0 0.0
    %1253 = vmatprep.subr.mxu0 0.0
    %1254 = vmatpush1.xpose.msra.mxu0 0.0
    %1255 = vmatprep.subr.mxu0 0.0
    %1256 = vmatpush1.xpose.msra.mxu0 0.0
    %1257 = vmatprep.subr.mxu0 0.0
    %1258 = vmatpush1.xpose.msra.mxu0 0.0
    %1259 = vmatprep.subr.mxu0 0.0
    %1260 = vmatpush1.xpose.msra.mxu0 0.0
    %1261 = vmatprep.subr.mxu0 0.0
    %1262 = vmatpush1.xpose.msra.mxu0 0.0
    %1263 = vmatprep.subr.mxu0 0.0
    %1264 = vmatpush1.xpose.msra.mxu0 0.0
    %1265 = vmatprep.subr.mxu0 0.0
    %1266 = vmatpush1.xpose.msra.mxu0 0.0
    %1267 = vmatprep.subr.mxu0 0.0
    %1268 = vmatpush1.xpose.msra.mxu0 0.0
    %1269 = vmatprep.subr.mxu0 0.0
    %1270 = vmatpush1.xpose.msra.mxu0 0.0
    %1271 = vmatprep.subr.mxu0 0.0
    %1272 = vmatpush1.xpose.msra.mxu0 0.0
    %1273 = vmatprep.subr.mxu0 0.0
    %1274 = vmatpush1.xpose.msra.mxu0 0.0
    %1275 = vmatprep.subr.mxu0 0.0
    %1276 = vmatpush1.xpose.msra.mxu0 0.0
    %1277 = vmatprep.subr.mxu0 0.0
    %1278 = vmatpush1.xpose.msra.mxu0 0.0
    %1279 = vmatprep.subr.mxu0 0.0
    %1280 = vmatpush1.xpose.msra.mxu0 0.0
    %1281 = vmatprep.subr.mxu0 0.0
    %1282 = vmatpush1.xpose.msra.mxu0 0.0
    %1283 = vmatprep.subr.mxu0 0.0
    %1284 = vmatpush1.xpose.msra.mxu0 0.0
    %1285 = vmatprep.subr.mxu0 0.0
    %1286 = vmatpush1.xpose.msra.mxu0 0.0
    %1287 = vmatprep.mubr.f32.mxu0 0.0
    %1288 = vmatmul.mubr.f32.gmra.mrb[0].mxu0 %v1219
    %v1289 = vpop.f32.mrb[0].mxu0
    %v1290 = vadd.f32 0.0, %v1289
    %v1291 = vpop.f32.mrb[0].mxu0
    %1292 = vdwg.mxu0
    %v1293 = vmul.f32 %v1212, 0.35355338
    %v1294 = vmul.f32 %v1290, 0.35355338
    %v1295 = vadd.f32 %v1293, %v129
    %v1296 = vadd.f32 %v1294, %v130
    %v1297 = vsel %vm139, %v1295, -inf
    %1298 = vmax.xlane.f32.xlu0 %v1297
    %v1299 = vpop.xlane.xlu0 %1298
    %v1300 = vsel %vm139, %v1296, -inf
    %1301 = vmax.xlane.f32.xlu0 %v1300
    %v1302 = vpop.xlane.xlu0 %1301
    %v1303 = vsub.f32 %v1295, %v1299
    %v1304 = vsub.f32 %v1296, %v1302
    %v1305 = vmul.f32 %v1303, 1.442695
    %v1306 = vpow.pop %v1305
    %v1307 = vmul.f32 %v1304, 1.442695
    %v1308 = vpow.pop %v1307
    %v1309 = vsel %vm139, %v1306, 0.0
    %1310 = vadd.xlane.f32.xlu0 %v1309
    %v1311 = vpop.xlane.xlu0 %1310
    %v1312 = vsel %vm139, %v1308, 0.0
    %1313 = vadd.xlane.f32.xlu0 %v1312
    %v1314 = vpop.xlane.xlu0 %1313
    %v1315 = vrcp.pop %v1311
    %v1316 = vrcp.pop %v1314
    %v1317 = vmul.f32 %v1306, %v1315
    %v1318 = vmul.f32 %v1308, %v1316
    %1319 = vrot.lane.b32.xlu0 %v121, 40
    %v1320 = vpop.permute.xlu0 %1319
    %v1323 = vsel %vm139, %v1317, 0
    %1325 = vmatprep.subr.mxu0 0.0
    %1326 = vmatpush1.msra.mxu0 %v1320
    %1327 = vmatprep.subr.mxu0 0.0
    %1328 = vmatpush1.msra.mxu0 0.0
    %1329 = vmatprep.subr.mxu0 0.0
    %1330 = vmatpush1.msra.mxu0 0.0
    %1331 = vmatprep.subr.mxu0 0.0
    %1332 = vmatpush1.msra.mxu0 0.0
    %1333 = vmatprep.subr.mxu0 0.0
    %1334 = vmatpush1.msra.mxu0 0.0
    %1335 = vmatprep.subr.mxu0 0.0
    %1336 = vmatpush1.msra.mxu0 0.0
    %1337 = vmatprep.subr.mxu0 0.0
    %1338 = vmatpush1.msra.mxu0 0.0
    %1339 = vmatprep.subr.mxu0 0.0
    %1340 = vmatpush1.msra.mxu0 0.0
    %1341 = vmatprep.subr.mxu0 0.0
    %1342 = vmatpush1.msra.mxu0 0.0
    %1343 = vmatprep.subr.mxu0 0.0
    %1344 = vmatpush1.msra.mxu0 0.0
    %1345 = vmatprep.subr.mxu0 0.0
    %1346 = vmatpush1.msra.mxu0 0.0
    %1347 = vmatprep.subr.mxu0 0.0
    %1348 = vmatpush1.msra.mxu0 0.0
    %1349 = vmatprep.subr.mxu0 0.0
    %1350 = vmatpush1.msra.mxu0 0.0
    %1351 = vmatprep.subr.mxu0 0.0
    %1352 = vmatpush1.msra.mxu0 0.0
    %1353 = vmatprep.subr.mxu0 0.0
    %1354 = vmatpush1.msra.mxu0 0.0
    %1355 = vmatprep.subr.mxu0 0.0
    %1356 = vmatpush1.msra.mxu0 0.0
    %1357 = vmatprep.subr.mxu0 0.0
    %1358 = vmatpush1.msra.mxu0 0.0
    %1359 = vmatprep.subr.mxu0 0.0
    %1360 = vmatpush1.msra.mxu0 0.0
    %1361 = vmatprep.subr.mxu0 0.0
    %1362 = vmatpush1.msra.mxu0 0.0
    %1363 = vmatprep.subr.mxu0 0.0
    %1364 = vmatpush1.msra.mxu0 0.0
    %1365 = vmatprep.subr.mxu0 0.0
    %1366 = vmatpush1.msra.mxu0 0.0
    %1367 = vmatprep.subr.mxu0 0.0
    %1368 = vmatpush1.msra.mxu0 0.0
    %1369 = vmatprep.subr.mxu0 0.0
    %1370 = vmatpush1.msra.mxu0 0.0
    %1371 = vmatprep.subr.mxu0 0.0
    %1372 = vmatpush1.msra.mxu0 0.0
    %1373 = vmatprep.subr.mxu0 0.0
    %1374 = vmatpush1.msra.mxu0 0.0
    %1375 = vmatprep.subr.mxu0 0.0
    %1376 = vmatpush1.msra.mxu0 0.0
    %1377 = vmatprep.subr.mxu0 0.0
    %1378 = vmatpush1.msra.mxu0 0.0
    %1379 = vmatprep.subr.mxu0 0.0
    %1380 = vmatpush1.msra.mxu0 0.0
    %1381 = vmatprep.subr.mxu0 0.0
    %1382 = vmatpush1.msra.mxu0 0.0
    %1383 = vmatprep.subr.mxu0 0.0
    %1384 = vmatpush1.msra.mxu0 0.0
    %1385 = vmatprep.subr.mxu0 0.0
    %1386 = vmatpush1.msra.mxu0 0.0
    %1387 = vmatprep.subr.mxu0 0.0
    %1388 = vmatpush1.msra.mxu0 0.0
    %1389 = vmatprep.mubr.f32.mxu0 0.0
    %1390 = vmatmul.mubr.f32.gmra.mrb[0].mxu0 %v1323
    %v1391 = vpop.f32.mrb[0].mxu0
    %v1392 = vadd.f32 0.0, %v1391
    %v1393 = vpop.f32.mrb[0].mxu0
    %1394 = vdwg.mxu0
    %1395 = vrot.lane.b32.xlu0 %v126, 40
    %v1396 = vpop.permute.xlu0 %1395
    %v1399 = vsel %vm139, %v1318, 0
    %1401 = vmatprep.subr.mxu0 0.0
    %1402 = vmatpush1.msra.mxu0 %v1396
    %1403 = vmatprep.subr.mxu0 0.0
    %1404 = vmatpush1.msra.mxu0 0.0
    %1405 = vmatprep.subr.mxu0 0.0
    %1406 = vmatpush1.msra.mxu0 0.0
    %1407 = vmatprep.subr.mxu0 0.0
    %1408 = vmatpush1.msra.mxu0 0.0
    %1409 = vmatprep.subr.mxu0 0.0
    %1410 = vmatpush1.msra.mxu0 0.0
    %1411 = vmatprep.subr.mxu0 0.0
    %1412 = vmatpush1.msra.mxu0 0.0
    %1413 = vmatprep.subr.mxu0 0.0
    %1414 = vmatpush1.msra.mxu0 0.0
    %1415 = vmatprep.subr.mxu0 0.0
    %1416 = vmatpush1.msra.mxu0 0.0
    %1417 = vmatprep.subr.mxu0 0.0
    %1418 = vmatpush1.msra.mxu0 0.0
    %1419 = vmatprep.subr.mxu0 0.0
    %1420 = vmatpush1.msra.mxu0 0.0
    %1421 = vmatprep.subr.mxu0 0.0
    %1422 = vmatpush1.msra.mxu0 0.0
    %1423 = vmatprep.subr.mxu0 0.0
    %1424 = vmatpush1.msra.mxu0 0.0
    %1425 = vmatprep.subr.mxu0 0.0
    %1426 = vmatpush1.msra.mxu0 0.0
    %1427 = vmatprep.subr.mxu0 0.0
    %1428 = vmatpush1.msra.mxu0 0.0
    %1429 = vmatprep.subr.mxu0 0.0
    %1430 = vmatpush1.msra.mxu0 0.0
    %1431 = vmatprep.subr.mxu0 0.0
    %1432 = vmatpush1.msra.mxu0 0.0
    %1433 = vmatprep.subr.mxu0 0.0
    %1434 = vmatpush1.msra.mxu0 0.0
    %1435 = vmatprep.subr.mxu0 0.0
    %1436 = vmatpush1.msra.mxu0 0.0
    %1437 = vmatprep.subr.mxu0 0.0
    %1438 = vmatpush1.msra.mxu0 0.0
    %1439 = vmatprep.subr.mxu0 0.0
    %1440 = vmatpush1.msra.mxu0 0.0
    %1441 = vmatprep.subr.mxu0 0.0
    %1442 = vmatpush1.msra.mxu0 0.0
    %1443 = vmatprep.subr.mxu0 0.0
    %1444 = vmatpush1.msra.mxu0 0.0
    %1445 = vmatprep.subr.mxu0 0.0
    %1446 = vmatpush1.msra.mxu0 0.0
    %1447 = vmatprep.subr.mxu0 0.0
    %1448 = vmatpush1.msra.mxu0 0.0
    %1449 = vmatprep.subr.mxu0 0.0
    %1450 = vmatpush1.msra.mxu0 0.0
    %1451 = vmatprep.subr.mxu0 0.0
    %1452 = vmatpush1.msra.mxu0 0.0
    %1453 = vmatprep.subr.mxu0 0.0
    %1454 = vmatpush1.msra.mxu0 0.0
    %1455 = vmatprep.subr.mxu0 0.0
    %1456 = vmatpush1.msra.mxu0 0.0
    %1457 = vmatprep.subr.mxu0 0.0
    %1458 = vmatpush1.msra.mxu0 0.0
    %1459 = vmatprep.subr.mxu0 0.0
    %1460 = vmatpush1.msra.mxu0 0.0
    %1461 = vmatprep.subr.mxu0 0.0
    %1462 = vmatpush1.msra.mxu0 0.0
    %1463 = vmatprep.subr.mxu0 0.0
    %1464 = vmatpush1.msra.mxu0 0.0
    %1465 = vmatprep.mubr.f32.mxu0 0.0
    %1466 = vmatmul.mubr.f32.gmra.mrb[0].mxu0 %v1399
    %v1467 = vpop.f32.mrb[0].mxu0
    %v1468 = vadd.f32 0.0, %v1467
    %v1469 = vpop.f32.mrb[0].mxu0
    %1470 = vdwg.mxu0
    %1473 = vrot.lane.b32.xlu0 %v724, 8
    %v1474 = vpop.permute.xlu0 %1473
    %1475 = vrot.lane.b32.xlu0 %v800, 8
    %v1476 = vpop.permute.xlu0 %1475
    %1481 = vrot.lane.b32.xlu0 %v1058, 16
    %v1482 = vpop.permute.xlu0 %1481
    %1483 = vrot.lane.b32.xlu0 %v1134, 16
    %v1484 = vpop.permute.xlu0 %1483
    %1489 = vrot.lane.b32.xlu0 %v1392, 24
    %v1490 = vpop.permute.xlu0 %1489
    %1491 = vrot.lane.b32.xlu0 %v1468, 24
    %v1492 = vpop.permute.xlu0 %1491
    %v1495 = vsel %vm139, %v390, %v1474
    %v1496 = vsel %vm139, %v466, %v1476
    %vm1497 = vcmask 130048
    %v1498 = vsel %vm1497, %v1495, %v1482
    %v1499 = vsel %vm1497, %v1496, %v1484
    %vm1500 = vcmask 195584
    %v1501 = vsel %vm1500, %v1498, %v1490
    %v1502 = vsel %vm1500, %v1499, %v1492
    %v1503 = vlaneseq
    %v1504 = vshrl.u32 %v1503, 7
    %v1505 = vsub.s32 0, %v1504
    %v1506 = vrot.slane %v135, %v1505
    %v1508 = vsel %vm47, %v1501, 0
    %v1511 = vsel %vm47, %v1502, 0
    %1513 = vmatprep.subr.mxu0 0.0
    %1514 = vmatpush1.msra.mxu0 %v131
    %1515 = vmatprep.subr.mxu0 0.0
    %1516 = vmatpush1.msra.mxu0 %v132
    %1517 = vmatprep.subr.mxu0 0.0
    %1518 = vmatpush1.msra.mxu0 %v133
    %1519 = vmatprep.subr.mxu0 0.0
    %1520 = vmatpush1.msra.mxu0 %v134
    %1521 = vmatprep.subr.mxu0 0.0
    %1522 = vmatpush1.msra.mxu0 0.0
    %1523 = vmatprep.subr.mxu0 0.0
    %1524 = vmatpush1.msra.mxu0 0.0
    %1525 = vmatprep.subr.mxu0 0.0
    %1526 = vmatpush1.msra.mxu0 0.0
    %1527 = vmatprep.subr.mxu0 0.0
    %1528 = vmatpush1.msra.mxu0 0.0
    %1529 = vmatprep.subr.mxu0 0.0
    %1530 = vmatpush1.msra.mxu0 0.0
    %1531 = vmatprep.subr.mxu0 0.0
    %1532 = vmatpush1.msra.mxu0 0.0
    %1533 = vmatprep.subr.mxu0 0.0
    %1534 = vmatpush1.msra.mxu0 0.0
    %1535 = vmatprep.subr.mxu0 0.0
    %1536 = vmatpush1.msra.mxu0 0.0
    %1537 = vmatprep.subr.mxu0 0.0
    %1538 = vmatpush1.msra.mxu0 0.0
    %1539 = vmatprep.subr.mxu0 0.0
    %1540 = vmatpush1.msra.mxu0 0.0
    %1541 = vmatprep.subr.mxu0 0.0
    %1542 = vmatpush1.msra.mxu0 0.0
    %1543 = vmatprep.subr.mxu0 0.0
    %1544 = vmatpush1.msra.mxu0 0.0
    %1545 = vmatprep.subr.mxu0 0.0
    %1546 = vmatpush1.msra.mxu0 0.0
    %1547 = vmatprep.subr.mxu0 0.0
    %1548 = vmatpush1.msra.mxu0 0.0
    %1549 = vmatprep.subr.mxu0 0.0
    %1550 = vmatpush1.msra.mxu0 0.0
    %1551 = vmatprep.subr.mxu0 0.0
    %1552 = vmatpush1.msra.mxu0 0.0
    %1553 = vmatprep.subr.mxu0 0.0
    %1554 = vmatpush1.msra.mxu0 0.0
    %1555 = vmatprep.subr.mxu0 0.0
    %1556 = vmatpush1.msra.mxu0 0.0
    %1557 = vmatprep.subr.mxu0 0.0
    %1558 = vmatpush1.msra.mxu0 0.0
    %1559 = vmatprep.subr.mxu0 0.0
    %1560 = vmatpush1.msra.mxu0 0.0
    %1561 = vmatprep.subr.mxu0 0.0
    %1562 = vmatpush1.msra.mxu0 0.0
    %1563 = vmatprep.subr.mxu0 0.0
    %1564 = vmatpush1.msra.mxu0 0.0
    %1565 = vmatprep.subr.mxu0 0.0
    %1566 = vmatpush1.msra.mxu0 0.0
    %1567 = vmatprep.subr.mxu0 0.0
    %1568 = vmatpush1.msra.mxu0 0.0
    %1569 = vmatprep.subr.mxu0 0.0
    %1570 = vmatpush1.msra.mxu0 0.0
    %1571 = vmatprep.subr.mxu0 0.0
    %1572 = vmatpush1.msra.mxu0 0.0
    %1573 = vmatprep.subr.mxu0 0.0
    %1574 = vmatpush1.msra.mxu0 0.0
    %1575 = vmatprep.subr.mxu0 0.0
    %1576 = vmatpush1.msra.mxu0 0.0
    %1577 = vmatprep.mubr.f32.mxu0 0.0
    %1578 = vmatmul.mubr.f32.gmra.mrb[0].mxu0 %v1508
    %v1579 = vpop.f32.mrb[0].mxu0
    %v1580 = vadd.f32 %v1506, %v1579
    %v1581 = vpop.f32.mrb[0].mxu0
    %1582 = vmatprep.mubr.f32.mxu0 0.0
    %1583 = vmatmul.mubr.f32.gmra.mrb[0].mxu0 %v1511
    %v1584 = vpop.f32.mrb[0].mxu0
    %v1585 = vadd.f32 %v1506, %v1584
    %v1586 = vpop.f32.mrb[0].mxu0
    %1587 = vdwg.mxu0
    %v1588 = vadd.f32 %v32, %v1580
    %v1589 = vadd.f32 %v33, %v1585
    %v1590 = vsel %vm47, %v1588, 0.0
    %1591 = vadd.xlane.f32.xlu0 %v1590
    %v1592 = vpop.xlane.xlu0 %1591
    %v1593 = vsel %vm47, %v1589, 0.0
    %1594 = vadd.xlane.f32.xlu0 %v1593
    %v1595 = vpop.xlane.xlu0 %1594
    %v1596 = vrcp.pop 32.0
    %v1597 = vmul.f32 %v1592, %v1596
    %v1598 = vmul.f32 %v1595, %v1596
    %v1599 = vsub.f32 %v1588, %v1597
    %v1600 = vsub.f32 %v1589, %v1598
    %v1601 = vmul.f32 %v1599, %v1599
    %v1602 = vmul.f32 %v1600, %v1600
    %v1603 = vsel %vm47, %v1601, 0.0
    %1604 = vadd.xlane.f32.xlu0 %v1603
    %v1605 = vpop.xlane.xlu0 %1604
    %v1606 = vsel %vm47, %v1602, 0.0
    %1607 = vadd.xlane.f32.xlu0 %v1606
    %v1608 = vpop.xlane.xlu0 %1607
    %v1609 = vmul.f32 %v1605, %v1596
    %v1610 = vmul.f32 %v1608, %v1596
    %v1611 = vadd.f32 %v1609, 1e-05
    %v1612 = vadd.f32 %v1610, 1e-05
    %v1613 = vrsqrt.pop %v1611
    %v1614 = vrsqrt.pop %v1612
    %v1615 = vmul.f32 %v1599, %v1613
    %v1616 = vmul.f32 %v1600, %v1614
    %v1617 = vlaneseq
    %v1618 = vshrl.u32 %v1617, 7
    %v1619 = vsub.s32 0, %v1618
    %v1620 = vrot.slane %v36, %v1619
    %v1621 = vmul.f32 %v1615, %v1620
    %v1622 = vmul.f32 %v1616, %v1620
    %v1623 = vlaneseq
    %v1624 = vshrl.u32 %v1623, 7
    %v1625 = vsub.s32 0, %v1624
    %v1626 = vrot.slane %v37, %v1625
    %v1627 = vadd.f32 %v1621, %v1626
    %v1628 = vadd.f32 %v1622, %v1626
    %v1629 = vld [vmem:[#allocation2 + $0x40] sm:$0xff]
    %v1630 = vld [vmem:[#allocation2 + $0x48] sm:$0xff]
    %v1631 = vld [vmem:[#allocation2 + $0x50] sm:$0xff]
    %v1632 = vld [vmem:[#allocation2 + $0x58] sm:$0xff]
    %v1633 = vld [vmem:[%s2 + $0x10] sm:$0x1]
    %v1634 = vlaneseq
    %v1635 = vshrl.u32 %v1634, 7
    %v1636 = vsub.s32 0, %v1635
    %v1637 = vrot.slane %v1633, %v1636
    %v1639 = vsel %vm47, %v1627, 0
    %v1642 = vsel %vm47, %v1628, 0
    %1644 = vmatprep.subr.mxu0 0.0
    %1645 = vmatpush1.msra.mxu0 %v1629
    %1646 = vmatprep.subr.mxu0 0.0
    %1647 = vmatpush1.msra.mxu0 %v1630
    %1648 = vmatprep.subr.mxu0 0.0
    %1649 = vmatpush1.msra.mxu0 %v1631
    %1650 = vmatprep.subr.mxu0 0.0
    %1651 = vmatpush1.msra.mxu0 %v1632
    %1652 = vmatprep.subr.mxu0 0.0
    %1653 = vmatpush1.msra.mxu0 0.0
    %1654 = vmatprep.subr.mxu0 0.0
    %1655 = vmatpush1.msra.mxu0 0.0
    %1656 = vmatprep.subr.mxu0 0.0
    %1657 = vmatpush1.msra.mxu0 0.0
    %1658 = vmatprep.subr.mxu0 0.0
    %1659 = vmatpush1.msra.mxu0 0.0
    %1660 = vmatprep.subr.mxu0 0.0
    %1661 = vmatpush1.msra.mxu0 0.0
    %1662 = vmatprep.subr.mxu0 0.0
    %1663 = vmatpush1.msra.mxu0 0.0
    %1664 = vmatprep.subr.mxu0 0.0
    %1665 = vmatpush1.msra.mxu0 0.0
    %1666 = vmatprep.subr.mxu0 0.0
    %1667 = vmatpush1.msra.mxu0 0.0
    %1668 = vmatprep.subr.mxu0 0.0
    %1669 = vmatpush1.msra.mxu0 0.0
    %1670 = vmatprep.subr.mxu0 0.0
    %1671 = vmatpush1.msra.mxu0 0.0
    %1672 = vmatprep.subr.mxu0 0.0
    %1673 = vmatpush1.msra.mxu0 0.0
    %1674 = vmatprep.subr.mxu0 0.0
    %1675 = vmatpush1.msra.mxu0 0.0
    %1676 = vmatprep.subr.mxu0 0.0
    %1677 = vmatpush1.msra.mxu0 0.0
    %1678 = vmatprep.subr.mxu0 0.0
    %1679 = vmatpush1.msra.mxu0 0.0
    %1680 = vmatprep.subr.mxu0 0.0
    %1681 = vmatpush1.msra.mxu0 0.0
    %1682 = vmatprep.subr.mxu0 0.0
    %1683 = vmatpush1.msra.mxu0 0.0
    %1684 = vmatprep.subr.mxu0 0.0
    %1685 = vmatpush1.msra.mxu0 0.0
    %1686 = vmatprep.subr.mxu0 0.0
    %1687 = vmatpush1.msra.mxu0 0.0
    %1688 = vmatprep.subr.mxu0 0.0
    %1689 = vmatpush1.msra.mxu0 0.0
    %1690 = vmatprep.subr.mxu0 0.0
    %1691 = vmatpush1.msra.mxu0 0.0
    %1692 = vmatprep.subr.mxu0 0.0
    %1693 = vmatpush1.msra.mxu0 0.0
    %1694 = vmatprep.subr.mxu0 0.0
    %1695 = vmatpush1.msra.mxu0 0.0
    %1696 = vmatprep.subr.mxu0 0.0
    %1697 = vmatpush1.msra.mxu0 0.0
    %1698 = vmatprep.subr.mxu0 0.0
    %1699 = vmatpush1.msra.mxu0 0.0
    %1700 = vmatprep.subr.mxu0 0.0
    %1701 = vmatpush1.msra.mxu0 0.0
    %1702 = vmatprep.subr.mxu0 0.0
    %1703 = vmatpush1.msra.mxu0 0.0
    %1704 = vmatprep.subr.mxu0 0.0
    %1705 = vmatpush1.msra.mxu0 0.0
    %1706 = vmatprep.subr.mxu0 0.0
    %1707 = vmatpush1.msra.mxu0 0.0
    %1708 = vmatprep.mubr.f32.mxu0 0.0
    %1709 = vmatmul.mubr.f32.gmra.mrb[0].mxu0 %v1639
    %v1710 = vpop.f32.mrb[0].mxu0
    %v1711 = vadd.f32 %v1637, %v1710
    %v1712 = vpop.f32.mrb[0].mxu0
    %1713 = vmatprep.mubr.f32.mxu0 0.0
    %1714 = vmatmul.mubr.f32.gmra.mrb[0].mxu0 %v1642
    %v1715 = vpop.f32.mrb[0].mxu0
    %v1716 = vadd.f32 %v1637, %v1715
    %v1717 = vpop.f32.mrb[0].mxu0
    %1718 = vdwg.mxu0
    %v1719 = vld [vmem:[#allocation2 + $0x60] sm:$0xff]
    %v1720 = vld [vmem:[#allocation2 + $0x68] sm:$0xff]
    %v1721 = vld [vmem:[#allocation2 + $0x70] sm:$0xff]
    %v1722 = vld [vmem:[#allocation2 + $0x78] sm:$0xff]
    %v1723 = vld [vmem:[%s2 + $0x18] sm:$0x1]
    %v1724 = vlaneseq
    %v1725 = vshrl.u32 %v1724, 7
    %v1726 = vsub.s32 0, %v1725
    %v1727 = vrot.slane %v1723, %v1726
    %v1729 = vsel %vm47, %v34, 0
    %v1732 = vsel %vm47, %v35, 0
    %1734 = vmatprep.subr.mxu0 0.0
    %1735 = vmatpush1.msra.mxu0 %v1719
    %1736 = vmatprep.subr.mxu0 0.0
    %1737 = vmatpush1.msra.mxu0 %v1720
    %1738 = vmatprep.subr.mxu0 0.0
    %1739 = vmatpush1.msra.mxu0 %v1721
    %1740 = vmatprep.subr.mxu0 0.0
    %1741 = vmatpush1.msra.mxu0 %v1722
    %1742 = vmatprep.subr.mxu0 0.0
    %1743 = vmatpush1.msra.mxu0 0.0
    %1744 = vmatprep.subr.mxu0 0.0
    %1745 = vmatpush1.msra.mxu0 0.0
    %1746 = vmatprep.subr.mxu0 0.0
    %1747 = vmatpush1.msra.mxu0 0.0
    %1748 = vmatprep.subr.mxu0 0.0
    %1749 = vmatpush1.msra.mxu0 0.0
    %1750 = vmatprep.subr.mxu0 0.0
    %1751 = vmatpush1.msra.mxu0 0.0
    %1752 = vmatprep.subr.mxu0 0.0
    %1753 = vmatpush1.msra.mxu0 0.0
    %1754 = vmatprep.subr.mxu0 0.0
    %1755 = vmatpush1.msra.mxu0 0.0
    %1756 = vmatprep.subr.mxu0 0.0
    %1757 = vmatpush1.msra.mxu0 0.0
    %1758 = vmatprep.subr.mxu0 0.0
    %1759 = vmatpush1.msra.mxu0 0.0
    %1760 = vmatprep.subr.mxu0 0.0
    %1761 = vmatpush1.msra.mxu0 0.0
    %1762 = vmatprep.subr.mxu0 0.0
    %1763 = vmatpush1.msra.mxu0 0.0
    %1764 = vmatprep.subr.mxu0 0.0
    %1765 = vmatpush1.msra.mxu0 0.0
    %1766 = vmatprep.subr.mxu0 0.0
    %1767 = vmatpush1.msra.mxu0 0.0
    %1768 = vmatprep.subr.mxu0 0.0
    %1769 = vmatpush1.msra.mxu0 0.0
    %1770 = vmatprep.subr.mxu0 0.0
    %1771 = vmatpush1.msra.mxu0 0.0
    %1772 = vmatprep.subr.mxu0 0.0
    %1773 = vmatpush1.msra.mxu0 0.0
    %1774 = vmatprep.subr.mxu0 0.0
    %1775 = vmatpush1.msra.mxu0 0.0
    %1776 = vmatprep.subr.mxu0 0.0
    %1777 = vmatpush1.msra.mxu0 0.0
    %1778 = vmatprep.subr.mxu0 0.0
    %1779 = vmatpush1.msra.mxu0 0.0
    %1780 = vmatprep.subr.mxu0 0.0
    %1781 = vmatpush1.msra.mxu0 0.0
    %1782 = vmatprep.subr.mxu0 0.0
    %1783 = vmatpush1.msra.mxu0 0.0
    %1784 = vmatprep.subr.mxu0 0.0
    %1785 = vmatpush1.msra.mxu0 0.0
    %1786 = vmatprep.subr.mxu0 0.0
    %1787 = vmatpush1.msra.mxu0 0.0
    %1788 = vmatprep.subr.mxu0 0.0
    %1789 = vmatpush1.msra.mxu0 0.0
    %1790 = vmatprep.subr.mxu0 0.0
    %1791 = vmatpush1.msra.mxu0 0.0
    %1792 = vmatprep.subr.mxu0 0.0
    %1793 = vmatpush1.msra.mxu0 0.0
    %1794 = vmatprep.subr.mxu0 0.0
    %1795 = vmatpush1.msra.mxu0 0.0
    %1796 = vmatprep.subr.mxu0 0.0
    %1797 = vmatpush1.msra.mxu0 0.0
    %1798 = vmatprep.mubr.f32.mxu0 0.0
    %1799 = vmatmul.mubr.f32.gmra.mrb[0].mxu0 %v1729
    %v1800 = vpop.f32.mrb[0].mxu0
    %v1801 = vadd.f32 %v1727, %v1800
    %v1802 = vpop.f32.mrb[0].mxu0
    %1803 = vmatprep.mubr.f32.mxu0 0.0
    %1804 = vmatmul.mubr.f32.gmra.mrb[0].mxu0 %v1732
    %v1805 = vpop.f32.mrb[0].mxu0
    %v1806 = vadd.f32 %v1727, %v1805
    %v1807 = vpop.f32.mrb[0].mxu0
    %1808 = vdwg.mxu0
    %v1809 = vld [vmem:[%s3] sm:$0xff]
    %v1810 = vld [vmem:[%s3 + $0x8] sm:$0xff]
    %v1811 = vld [vmem:[#allocation2 + $0x80] sm:$0xff]
    %v1812 = vld [vmem:[#allocation2 + $0x88] sm:$0xff]
    %v1813 = vld [vmem:[#allocation2 + $0x90] sm:$0xff]
    %v1814 = vld [vmem:[#allocation2 + $0x98] sm:$0xff]
    %v1815 = vld [vmem:[%s2 + $0x20] sm:$0x1]
    %v1817 = vsel %vm139, %v1711, 0
    %v1820 = vsel %vm139, %v1801, 0
    %1822 = vmatprep.subr.mxu0 0.0
    %1823 = vmatpush1.xpose.msra.mxu0 %v1820
    %1824 = vmatprep.subr.mxu0 0.0
    %1825 = vmatpush1.xpose.msra.mxu0 0.0
    %1826 = vmatprep.subr.mxu0 0.0
    %1827 = vmatpush1.xpose.msra.mxu0 0.0
    %1828 = vmatprep.subr.mxu0 0.0
    %1829 = vmatpush1.xpose.msra.mxu0 0.0
    %1830 = vmatprep.subr.mxu0 0.0
    %1831 = vmatpush1.xpose.msra.mxu0 0.0
    %1832 = vmatprep.subr.mxu0 0.0
    %1833 = vmatpush1.xpose.msra.mxu0 0.0
    %1834 = vmatprep.subr.mxu0 0.0
    %1835 = vmatpush1.xpose.msra.mxu0 0.0
    %1836 = vmatprep.subr.mxu0 0.0
    %1837 = vmatpush1.xpose.msra.mxu0 0.0
    %1838 = vmatprep.subr.mxu0 0.0
    %1839 = vmatpush1.xpose.msra.mxu0 0.0
    %1840 = vmatprep.subr.mxu0 0.0
    %1841 = vmatpush1.xpose.msra.mxu0 0.0
    %1842 = vmatprep.subr.mxu0 0.0
    %1843 = vmatpush1.xpose.msra.mxu0 0.0
    %1844 = vmatprep.subr.mxu0 0.0
    %1845 = vmatpush1.xpose.msra.mxu0 0.0
    %1846 = vmatprep.subr.mxu0 0.0
    %1847 = vmatpush1.xpose.msra.mxu0 0.0
    %1848 = vmatprep.subr.mxu0 0.0
    %1849 = vmatpush1.xpose.msra.mxu0 0.0
    %1850 = vmatprep.subr.mxu0 0.0
    %1851 = vmatpush1.xpose.msra.mxu0 0.0
    %1852 = vmatprep.subr.mxu0 0.0
    %1853 = vmatpush1.xpose.msra.mxu0 0.0
    %1854 = vmatprep.subr.mxu0 0.0
    %1855 = vmatpush1.xpose.msra.mxu0 0.0
    %1856 = vmatprep.subr.mxu0 0.0
    %1857 = vmatpush1.xpose.msra.mxu0 0.0
    %1858 = vmatprep.subr.mxu0 0.0
    %1859 = vmatpush1.xpose.msra.mxu0 0.0
    %1860 = vmatprep.subr.mxu0 0.0
    %1861 = vmatpush1.xpose.msra.mxu0 0.0
    %1862 = vmatprep.subr.mxu0 0.0
    %1863 = vmatpush1.xpose.msra.mxu0 0.0
    %1864 = vmatprep.subr.mxu0 0.0
    %1865 = vmatpush1.xpose.msra.mxu0 0.0
    %1866 = vmatprep.subr.mxu0 0.0
    %1867 = vmatpush1.xpose.msra.mxu0 0.0
    %1868 = vmatprep.subr.mxu0 0.0
    %1869 = vmatpush1.xpose.msra.mxu0 0.0
    %1870 = vmatprep.subr.mxu0 0.0
    %1871 = vmatpush1.xpose.msra.mxu0 0.0
    %1872 = vmatprep.subr.mxu0 0.0
    %1873 = vmatpush1.xpose.msra.mxu0 0.0
    %1874 = vmatprep.subr.mxu0 0.0
    %1875 = vmatpush1.xpose.msra.mxu0 0.0
    %1876 = vmatprep.subr.mxu0 0.0
    %1877 = vmatpush1.xpose.msra.mxu0 0.0
    %1878 = vmatprep.subr.mxu0 0.0
    %1879 = vmatpush1.xpose.msra.mxu0 0.0
    %1880 = vmatprep.subr.mxu0 0.0
    %1881 = vmatpush1.xpose.msra.mxu0 0.0
    %1882 = vmatprep.subr.mxu0 0.0
    %1883 = vmatpush1.xpose.msra.mxu0 0.0
    %1884 = vmatprep.subr.mxu0 0.0
    %1885 = vmatpush1.xpose.msra.mxu0 0.0
    %1886 = vmatprep.mubr.f32.mxu0 0.0
    %1887 = vmatmul.mubr.f32.gmra.mrb[0].mxu0 %v1817
    %v1888 = vpop.f32.mrb[0].mxu0
    %v1889 = vadd.f32 0.0, %v1888
    %v1890 = vpop.f32.mrb[0].mxu0
    %1891 = vdwg.mxu0
    %v1893 = vsel %vm139, %v1716, 0
    %v1896 = vsel %vm139, %v1806, 0
    %1898 = vmatprep.subr.mxu0 0.0
    %1899 = vmatpush1.xpose.msra.mxu0 %v1896
    %1900 = vmatprep.subr.mxu0 0.0
    %1901 = vmatpush1.xpose.msra.mxu0 0.0
    %1902 = vmatprep.subr.mxu0 0.0
    %1903 = vmatpush1.xpose.msra.mxu0 0.0
    %1904 = vmatprep.subr.mxu0 0.0
    %1905 = vmatpush1.xpose.msra.mxu0 0.0
    %1906 = vmatprep.subr.mxu0 0.0
    %1907 = vmatpush1.xpose.msra.mxu0 0.0
    %1908 = vmatprep.subr.mxu0 0.0
    %1909 = vmatpush1.xpose.msra.mxu0 0.0
    %1910 = vmatprep.subr.mxu0 0.0
    %1911 = vmatpush1.xpose.msra.mxu0 0.0
    %1912 = vmatprep.subr.mxu0 0.0
    %1913 = vmatpush1.xpose.msra.mxu0 0.0
    %1914 = vmatprep.subr.mxu0 0.0
    %1915 = vmatpush1.xpose.msra.mxu0 0.0
    %1916 = vmatprep.subr.mxu0 0.0
    %1917 = vmatpush1.xpose.msra.mxu0 0.0
    %1918 = vmatprep.subr.mxu0 0.0
    %1919 = vmatpush1.xpose.msra.mxu0 0.0
    %1920 = vmatprep.subr.mxu0 0.0
    %1921 = vmatpush1.xpose.msra.mxu0 0.0
    %1922 = vmatprep.subr.mxu0 0.0
    %1923 = vmatpush1.xpose.msra.mxu0 0.0
    %1924 = vmatprep.subr.mxu0 0.0
    %1925 = vmatpush1.xpose.msra.mxu0 0.0
    %1926 = vmatprep.subr.mxu0 0.0
    %1927 = vmatpush1.xpose.msra.mxu0 0.0
    %1928 = vmatprep.subr.mxu0 0.0
    %1929 = vmatpush1.xpose.msra.mxu0 0.0
    %1930 = vmatprep.subr.mxu0 0.0
    %1931 = vmatpush1.xpose.msra.mxu0 0.0
    %1932 = vmatprep.subr.mxu0 0.0
    %1933 = vmatpush1.xpose.msra.mxu0 0.0
    %1934 = vmatprep.subr.mxu0 0.0
    %1935 = vmatpush1.xpose.msra.mxu0 0.0
    %1936 = vmatprep.subr.mxu0 0.0
    %1937 = vmatpush1.xpose.msra.mxu0 0.0
    %1938 = vmatprep.subr.mxu0 0.0
    %1939 = vmatpush1.xpose.msra.mxu0 0.0
    %1940 = vmatprep.subr.mxu0 0.0
    %1941 = vmatpush1.xpose.msra.mxu0 0.0
    %1942 = vmatprep.subr.mxu0 0.0
    %1943 = vmatpush1.xpose.msra.mxu0 0.0
    %1944 = vmatprep.subr.mxu0 0.0
    %1945 = vmatpush1.xpose.msra.mxu0 0.0
    %1946 = vmatprep.subr.mxu0 0.0
    %1947 = vmatpush1.xpose.msra.mxu0 0.0
    %1948 = vmatprep.subr.mxu0 0.0
    %1949 = vmatpush1.xpose.msra.mxu0 0.0
    %1950 = vmatprep.subr.mxu0 0.0
    %1951 = vmatpush1.xpose.msra.mxu0 0.0
    %1952 = vmatprep.subr.mxu0 0.0
    %1953 = vmatpush1.xpose.msra.mxu0 0.0
    %1954 = vmatprep.subr.mxu0 0.0
    %1955 = vmatpush1.xpose.msra.mxu0 0.0
    %1956 = vmatprep.subr.mxu0 0.0
    %1957 = vmatpush1.xpose.msra.mxu0 0.0
    %1958 = vmatprep.subr.mxu0 0.0
    %1959 = vmatpush1.xpose.msra.mxu0 0.0
    %1960 = vmatprep.subr.mxu0 0.0
    %1961 = vmatpush1.xpose.msra.mxu0 0.0
    %1962 = vmatprep.mubr.f32.mxu0 0.0
    %1963 = vmatmul.mubr.f32.gmra.mrb[0].mxu0 %v1893
    %v1964 = vpop.f32.mrb[0].mxu0
    %v1965 = vadd.f32 0.0, %v1964
    %v1966 = vpop.f32.mrb[0].mxu0
    %1967 = vdwg.mxu0
    %v1968 = vmul.f32 %v1889, 0.35355338
    %v1969 = vmul.f32 %v1965, 0.35355338
    %1972 = vrot.lane.b32.xlu0 %v1809, 120
    %v1973 = vpop.permute.xlu0 %1972
    %1974 = vrot.lane.b32.xlu0 %v1810, 120
    %v1975 = vpop.permute.xlu0 %1974
    %v1978 = vadd.f32 %v1968, %v1973
    %v1979 = vadd.f32 %v1969, %v1975
    %v1980 = vsel %vm139, %v1978, -inf
    %1981 = vmax.xlane.f32.xlu0 %v1980
    %v1982 = vpop.xlane.xlu0 %1981
    %v1983 = vsel %vm139, %v1979, -inf
    %1984 = vmax.xlane.f32.xlu0 %v1983
    %v1985 = vpop.xlane.xlu0 %1984
    %v1986 = vsub.f32 %v1978, %v1982
    %v1987 = vsub.f32 %v1979, %v1985
    %v1988 = vmul.f32 %v1986, 1.442695
    %v1989 = vpow.pop %v1988
    %v1990 = vmul.f32 %v1987, 1.442695
    %v1991 = vpow.pop %v1990
    %v1992 = vsel %vm139, %v1989, 0.0
    %1993 = vadd.xlane.f32.xlu0 %v1992
    %v1994 = vpop.xlane.xlu0 %1993
    %v1995 = vsel %vm139, %v1991, 0.0
    %1996 = vadd.xlane.f32.xlu0 %v1995
    %v1997 = vpop.xlane.xlu0 %1996
    %v1998 = vrcp.pop %v1994
    %v1999 = vrcp.pop %v1997
    %v2000 = vmul.f32 %v1989, %v1998
    %v2001 = vmul.f32 %v1991, %v1999
    %2002 = vrot.lane.b32.xlu0 %v1801, 96
    %v2003 = vpop.permute.xlu0 %2002
    %v2006 = vsel %vm139, %v2000, 0
    %2008 = vmatprep.subr.mxu0 0.0
    %2009 = vmatpush1.msra.mxu0 %v2003
    %2010 = vmatprep.subr.mxu0 0.0
    %2011 = vmatpush1.msra.mxu0 0.0
    %2012 = vmatprep.subr.mxu0 0.0
    %2013 = vmatpush1.msra.mxu0 0.0
    %2014 = vmatprep.subr.mxu0 0.0
    %2015 = vmatpush1.msra.mxu0 0.0
    %2016 = vmatprep.subr.mxu0 0.0
    %2017 = vmatpush1.msra.mxu0 0.0
    %2018 = vmatprep.subr.mxu0 0.0
    %2019 = vmatpush1.msra.mxu0 0.0
    %2020 = vmatprep.subr.mxu0 0.0
    %2021 = vmatpush1.msra.mxu0 0.0
    %2022 = vmatprep.subr.mxu0 0.0
    %2023 = vmatpush1.msra.mxu0 0.0
    %2024 = vmatprep.subr.mxu0 0.0
    %2025 = vmatpush1.msra.mxu0 0.0
    %2026 = vmatprep.subr.mxu0 0.0
    %2027 = vmatpush1.msra.mxu0 0.0
    %2028 = vmatprep.subr.mxu0 0.0
    %2029 = vmatpush1.msra.mxu0 0.0
    %2030 = vmatprep.subr.mxu0 0.0
    %2031 = vmatpush1.msra.mxu0 0.0
    %2032 = vmatprep.subr.mxu0 0.0
    %2033 = vmatpush1.msra.mxu0 0.0
    %2034 = vmatprep.subr.mxu0 0.0
    %2035 = vmatpush1.msra.mxu0 0.0
    %2036 = vmatprep.subr.mxu0 0.0
    %2037 = vmatpush1.msra.mxu0 0.0
    %2038 = vmatprep.subr.mxu0 0.0
    %2039 = vmatpush1.msra.mxu0 0.0
    %2040 = vmatprep.subr.mxu0 0.0
    %2041 = vmatpush1.msra.mxu0 0.0
    %2042 = vmatprep.subr.mxu0 0.0
    %2043 = vmatpush1.msra.mxu0 0.0
    %2044 = vmatprep.subr.mxu0 0.0
    %2045 = vmatpush1.msra.mxu0 0.0
    %2046 = vmatprep.subr.mxu0 0.0
    %2047 = vmatpush1.msra.mxu0 0.0
    %2048 = vmatprep.subr.mxu0 0.0
    %2049 = vmatpush1.msra.mxu0 0.0
    %2050 = vmatprep.subr.mxu0 0.0
    %2051 = vmatpush1.msra.mxu0 0.0
    %2052 = vmatprep.subr.mxu0 0.0
    %2053 = vmatpush1.msra.mxu0 0.0
    %2054 = vmatprep.subr.mxu0 0.0
    %2055 = vmatpush1.msra.mxu0 0.0
    %2056 = vmatprep.subr.mxu0 0.0
    %2057 = vmatpush1.msra.mxu0 0.0
    %2058 = vmatprep.subr.mxu0 0.0
    %2059 = vmatpush1.msra.mxu0 0.0
    %2060 = vmatprep.subr.mxu0 0.0
    %2061 = vmatpush1.msra.mxu0 0.0
    %2062 = vmatprep.subr.mxu0 0.0
    %2063 = vmatpush1.msra.mxu0 0.0
    %2064 = vmatprep.subr.mxu0 0.0
    %2065 = vmatpush1.msra.mxu0 0.0
    %2066 = vmatprep.subr.mxu0 0.0
    %2067 = vmatpush1.msra.mxu0 0.0
    %2068 = vmatprep.subr.mxu0 0.0
    %2069 = vmatpush1.msra.mxu0 0.0
    %2070 = vmatprep.subr.mxu0 0.0
    %2071 = vmatpush1.msra.mxu0 0.0
    %2072 = vmatprep.mubr.f32.mxu0 0.0
    %2073 = vmatmul.mubr.f32.gmra.mrb[0].mxu0 %v2006
    %v2074 = vpop.f32.mrb[0].mxu0
    %v2075 = vadd.f32 0.0, %v2074
    %v2076 = vpop.f32.mrb[0].mxu0
    %2077 = vdwg.mxu0
    %2078 = vrot.lane.b32.xlu0 %v1806, 96
    %v2079 = vpop.permute.xlu0 %2078
    %v2082 = vsel %vm139, %v2001, 0
    %2084 = vmatprep.subr.mxu0 0.0
    %2085 = vmatpush1.msra.mxu0 %v2079
    %2086 = vmatprep.subr.mxu0 0.0
    %2087 = vmatpush1.msra.mxu0 0.0
    %2088 = vmatprep.subr.mxu0 0.0
    %2089 = vmatpush1.msra.mxu0 0.0
    %2090 = vmatprep.subr.mxu0 0.0
    %2091 = vmatpush1.msra.mxu0 0.0
    %2092 = vmatprep.subr.mxu0 0.0
    %2093 = vmatpush1.msra.mxu0 0.0
    %2094 = vmatprep.subr.mxu0 0.0
    %2095 = vmatpush1.msra.mxu0 0.0
    %2096 = vmatprep.subr.mxu0 0.0
    %2097 = vmatpush1.msra.mxu0 0.0
    %2098 = vmatprep.subr.mxu0 0.0
    %2099 = vmatpush1.msra.mxu0 0.0
    %2100 = vmatprep.subr.mxu0 0.0
    %2101 = vmatpush1.msra.mxu0 0.0
    %2102 = vmatprep.subr.mxu0 0.0
    %2103 = vmatpush1.msra.mxu0 0.0
    %2104 = vmatprep.subr.mxu0 0.0
    %2105 = vmatpush1.msra.mxu0 0.0
    %2106 = vmatprep.subr.mxu0 0.0
    %2107 = vmatpush1.msra.mxu0 0.0
    %2108 = vmatprep.subr.mxu0 0.0
    %2109 = vmatpush1.msra.mxu0 0.0
    %2110 = vmatprep.subr.mxu0 0.0
    %2111 = vmatpush1.msra.mxu0 0.0
    %2112 = vmatprep.subr.mxu0 0.0
    %2113 = vmatpush1.msra.mxu0 0.0
    %2114 = vmatprep.subr.mxu0 0.0
    %2115 = vmatpush1.msra.mxu0 0.0
    %2116 = vmatprep.subr.mxu0 0.0
    %2117 = vmatpush1.msra.mxu0 0.0
    %2118 = vmatprep.subr.mxu0 0.0
    %2119 = vmatpush1.msra.mxu0 0.0
    %2120 = vmatprep.subr.mxu0 0.0
    %2121 = vmatpush1.msra.mxu0 0.0
    %2122 = vmatprep.subr.mxu0 0.0
    %2123 = vmatpush1.msra.mxu0 0.0
    %2124 = vmatprep.subr.mxu0 0.0
    %2125 = vmatpush1.msra.mxu0 0.0
    %2126 = vmatprep.subr.mxu0 0.0
    %2127 = vmatpush1.msra.mxu0 0.0
    %2128 = vmatprep.subr.mxu0 0.0
    %2129 = vmatpush1.msra.mxu0 0.0
    %2130 = vmatprep.subr.mxu0 0.0
    %2131 = vmatpush1.msra.mxu0 0.0
    %2132 = vmatprep.subr.mxu0 0.0
    %2133 = vmatpush1.msra.mxu0 0.0
    %2134 = vmatprep.subr.mxu0 0.0
    %2135 = vmatpush1.msra.mxu0 0.0
    %2136 = vmatprep.subr.mxu0 0.0
    %2137 = vmatpush1.msra.mxu0 0.0
    %2138 = vmatprep.subr.mxu0 0.0
    %2139 = vmatpush1.msra.mxu0 0.0
    %2140 = vmatprep.subr.mxu0 0.0
    %2141 = vmatpush1.msra.mxu0 0.0
    %2142 = vmatprep.subr.mxu0 0.0
    %2143 = vmatpush1.msra.mxu0 0.0
    %2144 = vmatprep.subr.mxu0 0.0
    %2145 = vmatpush1.msra.mxu0 0.0
    %2146 = vmatprep.subr.mxu0 0.0
    %2147 = vmatpush1.msra.mxu0 0.0
    %2148 = vmatprep.mubr.f32.mxu0 0.0
    %2149 = vmatmul.mubr.f32.gmra.mrb[0].mxu0 %v2082
    %v2150 = vpop.f32.mrb[0].mxu0
    %v2151 = vadd.f32 0.0, %v2150
    %v2152 = vpop.f32.mrb[0].mxu0
    %2153 = vdwg.mxu0
    %2154 = vrot.lane.b32.xlu0 %v1711, 120
    %v2155 = vpop.permute.xlu0 %2154
    %2156 = vrot.lane.b32.xlu0 %v1801, 120
    %v2157 = vpop.permute.xlu0 %2156
    %v2158 = vsel %vm139, %v2155, 0
    %v2160 = vsel %vm139, %v2157, 0
    %2162 = vmatprep.subr.mxu0 0.0
    %2163 = vmatpush1.xpose.msra.mxu0 %v2160
    %2164 = vmatprep.subr.mxu0 0.0
    %2165 = vmatpush1.xpose.msra.mxu0 0.0
    %2166 = vmatprep.subr.mxu0 0.0
    %2167 = vmatpush1.xpose.msra.mxu0 0.0
    %2168 = vmatprep.subr.mxu0 0.0
    %2169 = vmatpush1.xpose.msra.mxu0 0.0
    %2170 = vmatprep.subr.mxu0 0.0
    %2171 = vmatpush1.xpose.msra.mxu0 0.0
    %2172 = vmatprep.subr.mxu0 0.0
    %2173 = vmatpush1.xpose.msra.mxu0 0.0
    %2174 = vmatprep.subr.mxu0 0.0
    %2175 = vmatpush1.xpose.msra.mxu0 0.0
    %2176 = vmatprep.subr.mxu0 0.0
    %2177 = vmatpush1.xpose.msra.mxu0 0.0
    %2178 = vmatprep.subr.mxu0 0.0
    %2179 = vmatpush1.xpose.msra.mxu0 0.0
    %2180 = vmatprep.subr.mxu0 0.0
    %2181 = vmatpush1.xpose.msra.mxu0 0.0
    %2182 = vmatprep.subr.mxu0 0.0
    %2183 = vmatpush1.xpose.msra.mxu0 0.0
    %2184 = vmatprep.subr.mxu0 0.0
    %2185 = vmatpush1.xpose.msra.mxu0 0.0
    %2186 = vmatprep.subr.mxu0 0.0
    %2187 = vmatpush1.xpose.msra.mxu0 0.0
    %2188 = vmatprep.subr.mxu0 0.0
    %2189 = vmatpush1.xpose.msra.mxu0 0.0
    %2190 = vmatprep.subr.mxu0 0.0
    %2191 = vmatpush1.xpose.msra.mxu0 0.0
    %2192 = vmatprep.subr.mxu0 0.0
    %2193 = vmatpush1.xpose.msra.mxu0 0.0
    %2194 = vmatprep.subr.mxu0 0.0
    %2195 = vmatpush1.xpose.msra.mxu0 0.0
    %2196 = vmatprep.subr.mxu0 0.0
    %2197 = vmatpush1.xpose.msra.mxu0 0.0
    %2198 = vmatprep.subr.mxu0 0.0
    %2199 = vmatpush1.xpose.msra.mxu0 0.0
    %2200 = vmatprep.subr.mxu0 0.0
    %2201 = vmatpush1.xpose.msra.mxu0 0.0
    %2202 = vmatprep.subr.mxu0 0.0
    %2203 = vmatpush1.xpose.msra.mxu0 0.0
    %2204 = vmatprep.subr.mxu0 0.0
    %2205 = vmatpush1.xpose.msra.mxu0 0.0
    %2206 = vmatprep.subr.mxu0 0.0
    %2207 = vmatpush1.xpose.msra.mxu0 0.0
    %2208 = vmatprep.subr.mxu0 0.0
    %2209 = vmatpush1.xpose.msra.mxu0 0.0
    %2210 = vmatprep.subr.mxu0 0.0
    %2211 = vmatpush1.xpose.msra.mxu0 0.0
    %2212 = vmatprep.subr.mxu0 0.0
    %2213 = vmatpush1.xpose.msra.mxu0 0.0
    %2214 = vmatprep.subr.mxu0 0.0
    %2215 = vmatpush1.xpose.msra.mxu0 0.0
    %2216 = vmatprep.subr.mxu0 0.0
    %2217 = vmatpush1.xpose.msra.mxu0 0.0
    %2218 = vmatprep.subr.mxu0 0.0
    %2219 = vmatpush1.xpose.msra.mxu0 0.0
    %2220 = vmatprep.subr.mxu0 0.0
    %2221 = vmatpush1.xpose.msra.mxu0 0.0
    %2222 = vmatprep.subr.mxu0 0.0
    %2223 = vmatpush1.xpose.msra.mxu0 0.0
    %2224 = vmatprep.subr.mxu0 0.0
    %2225 = vmatpush1.xpose.msra.mxu0 0.0
    %2226 = vmatprep.mubr.f32.mxu0 0.0
    %2227 = vmatmul.mubr.f32.gmra.mrb[0].mxu0 %v2158
    %v2228 = vpop.f32.mrb[0].mxu0
    %v2229 = vadd.f32 0.0, %v2228
    %v2230 = vpop.f32.mrb[0].mxu0
    %2231 = vdwg.mxu0
    %2232 = vrot.lane.b32.xlu0 %v1716, 120
    %v2233 = vpop.permute.xlu0 %2232
    %2234 = vrot.lane.b32.xlu0 %v1806, 120
    %v2235 = vpop.permute.xlu0 %2234
    %v2236 = vsel %vm139, %v2233, 0
    %v2238 = vsel %vm139, %v2235, 0
    %2240 = vmatprep.subr.mxu0 0.0
    %2241 = vmatpush1.xpose.msra.mxu0 %v2238
    %2242 = vmatprep.subr.mxu0 0.0
    %2243 = vmatpush1.xpose.msra.mxu0 0.0
    %2244 = vmatprep.subr.mxu0 0.0
    %2245 = vmatpush1.xpose.msra.mxu0 0.0
    %2246 = vmatprep.subr.mxu0 0.0
    %2247 = vmatpush1.xpose.msra.mxu0 0.0
    %2248 = vmatprep.subr.mxu0 0.0
    %2249 = vmatpush1.xpose.msra.mxu0 0.0
    %2250 = vmatprep.subr.mxu0 0.0
    %2251 = vmatpush1.xpose.msra.mxu0 0.0
    %2252 = vmatprep.subr.mxu0 0.0
    %2253 = vmatpush1.xpose.msra.mxu0 0.0
    %2254 = vmatprep.subr.mxu0 0.0
    %2255 = vmatpush1.xpose.msra.mxu0 0.0
    %2256 = vmatprep.subr.mxu0 0.0
    %2257 = vmatpush1.xpose.msra.mxu0 0.0
    %2258 = vmatprep.subr.mxu0 0.0
    %2259 = vmatpush1.xpose.msra.mxu0 0.0
    %2260 = vmatprep.subr.mxu0 0.0
    %2261 = vmatpush1.xpose.msra.mxu0 0.0
    %2262 = vmatprep.subr.mxu0 0.0
    %2263 = vmatpush1.xpose.msra.mxu0 0.0
    %2264 = vmatprep.subr.mxu0 0.0
    %2265 = vmatpush1.xpose.msra.mxu0 0.0
    %2266 = vmatprep.subr.mxu0 0.0
    %2267 = vmatpush1.xpose.msra.mxu0 0.0
    %2268 = vmatprep.subr.mxu0 0.0
    %2269 = vmatpush1.xpose.msra.mxu0 0.0
    %2270 = vmatprep.subr.mxu0 0.0
    %2271 = vmatpush1.xpose.msra.mxu0 0.0
    %2272 = vmatprep.subr.mxu0 0.0
    %2273 = vmatpush1.xpose.msra.mxu0 0.0
    %2274 = vmatprep.subr.mxu0 0.0
    %2275 = vmatpush1.xpose.msra.mxu0 0.0
    %2276 = vmatprep.subr.mxu0 0.0
    %2277 = vmatpush1.xpose.msra.mxu0 0.0
    %2278 = vmatprep.subr.mxu0 0.0
    %2279 = vmatpush1.xpose.msra.mxu0 0.0
    %2280 = vmatprep.subr.mxu0 0.0
    %2281 = vmatpush1.xpose.msra.mxu0 0.0
    %2282 = vmatprep.subr.mxu0 0.0
    %2283 = vmatpush1.xpose.msra.mxu0 0.0
    %2284 = vmatprep.subr.mxu0 0.0
    %2285 = vmatpush1.xpose.msra.mxu0 0.0
    %2286 = vmatprep.subr.mxu0 0.0
    %2287 = vmatpush1.xpose.msra.mxu0 0.0
    %2288 = vmatprep.subr.mxu0 0.0
    %2289 = vmatpush1.xpose.msra.mxu0 0.0
    %2290 = vmatprep.subr.mxu0 0.0
    %2291 = vmatpush1.xpose.msra.mxu0 0.0
    %2292 = vmatprep.subr.mxu0 0.0
    %2293 = vmatpush1.xpose.msra.mxu0 0.0
    %2294 = vmatprep.subr.mxu0 0.0
    %2295 = vmatpush1.xpose.msra.mxu0 0.0
    %2296 = vmatprep.subr.mxu0 0.0
    %2297 = vmatpush1.xpose.msra.mxu0 0.0
    %2298 = vmatprep.subr.mxu0 0.0
    %2299 = vmatpush1.xpose.msra.mxu0 0.0
    %2300 = vmatprep.subr.mxu0 0.0
    %2301 = vmatpush1.xpose.msra.mxu0 0.0
    %2302 = vmatprep.subr.mxu0 0.0
    %2303 = vmatpush1.xpose.msra.mxu0 0.0
    %2304 = vmatprep.mubr.f32.mxu0 0.0
    %2305 = vmatmul.mubr.f32.gmra.mrb[0].mxu0 %v2236
    %v2306 = vpop.f32.mrb[0].mxu0
    %v2307 = vadd.f32 0.0, %v2306
    %v2308 = vpop.f32.mrb[0].mxu0
    %2309 = vdwg.mxu0
    %v2310 = vmul.f32 %v2229, 0.35355338
    %v2311 = vmul.f32 %v2307, 0.35355338
    %v2312 = vadd.f32 %v2310, %v1973
    %v2313 = vadd.f32 %v2311, %v1975
    %v2314 = vsel %vm139, %v2312, -inf
    %2315 = vmax.xlane.f32.xlu0 %v2314
    %v2316 = vpop.xlane.xlu0 %2315
    %v2317 = vsel %vm139, %v2313, -inf
    %2318 = vmax.xlane.f32.xlu0 %v2317
    %v2319 = vpop.xlane.xlu0 %2318
    %v2320 = vsub.f32 %v2312, %v2316
    %v2321 = vsub.f32 %v2313, %v2319
    %v2322 = vmul.f32 %v2320, 1.442695
    %v2323 = vpow.pop %v2322
    %v2324 = vmul.f32 %v2321, 1.442695
    %v2325 = vpow.pop %v2324
    %v2326 = vsel %vm139, %v2323, 0.0
    %2327 = vadd.xlane.f32.xlu0 %v2326
    %v2328 = vpop.xlane.xlu0 %2327
    %v2329 = vsel %vm139, %v2325, 0.0
    %2330 = vadd.xlane.f32.xlu0 %v2329
    %v2331 = vpop.xlane.xlu0 %2330
    %v2332 = vrcp.pop %v2328
    %v2333 = vrcp.pop %v2331
    %v2334 = vmul.f32 %v2323, %v2332
    %v2335 = vmul.f32 %v2325, %v2333
    %2336 = vrot.lane.b32.xlu0 %v1801, 88
    %v2337 = vpop.permute.xlu0 %2336
    %v2340 = vsel %vm139, %v2334, 0
    %2342 = vmatprep.subr.mxu0 0.0
    %2343 = vmatpush1.msra.mxu0 %v2337
    %2344 = vmatprep.subr.mxu0 0.0
    %2345 = vmatpush1.msra.mxu0 0.0
    %2346 = vmatprep.subr.mxu0 0.0
    %2347 = vmatpush1.msra.mxu0 0.0
    %2348 = vmatprep.subr.mxu0 0.0
    %2349 = vmatpush1.msra.mxu0 0.0
    %2350 = vmatprep.subr.mxu0 0.0
    %2351 = vmatpush1.msra.mxu0 0.0
    %2352 = vmatprep.subr.mxu0 0.0
    %2353 = vmatpush1.msra.mxu0 0.0
    %2354 = vmatprep.subr.mxu0 0.0
    %2355 = vmatpush1.msra.mxu0 0.0
    %2356 = vmatprep.subr.mxu0 0.0
    %2357 = vmatpush1.msra.mxu0 0.0
    %2358 = vmatprep.subr.mxu0 0.0
    %2359 = vmatpush1.msra.mxu0 0.0
    %2360 = vmatprep.subr.mxu0 0.0
    %2361 = vmatpush1.msra.mxu0 0.0
    %2362 = vmatprep.subr.mxu0 0.0
    %2363 = vmatpush1.msra.mxu0 0.0
    %2364 = vmatprep.subr.mxu0 0.0
    %2365 = vmatpush1.msra.mxu0 0.0
    %2366 = vmatprep.subr.mxu0 0.0
    %2367 = vmatpush1.msra.mxu0 0.0
    %2368 = vmatprep.subr.mxu0 0.0
    %2369 = vmatpush1.msra.mxu0 0.0
    %2370 = vmatprep.subr.mxu0 0.0
    %2371 = vmatpush1.msra.mxu0 0.0
    %2372 = vmatprep.subr.mxu0 0.0
    %2373 = vmatpush1.msra.mxu0 0.0
    %2374 = vmatprep.subr.mxu0 0.0
    %2375 = vmatpush1.msra.mxu0 0.0
    %2376 = vmatprep.subr.mxu0 0.0
    %2377 = vmatpush1.msra.mxu0 0.0
    %2378 = vmatprep.subr.mxu0 0.0
    %2379 = vmatpush1.msra.mxu0 0.0
    %2380 = vmatprep.subr.mxu0 0.0
    %2381 = vmatpush1.msra.mxu0 0.0
    %2382 = vmatprep.subr.mxu0 0.0
    %2383 = vmatpush1.msra.mxu0 0.0
    %2384 = vmatprep.subr.mxu0 0.0
    %2385 = vmatpush1.msra.mxu0 0.0
    %2386 = vmatprep.subr.mxu0 0.0
    %2387 = vmatpush1.msra.mxu0 0.0
    %2388 = vmatprep.subr.mxu0 0.0
    %2389 = vmatpush1.msra.mxu0 0.0
    %2390 = vmatprep.subr.mxu0 0.0
    %2391 = vmatpush1.msra.mxu0 0.0
    %2392 = vmatprep.subr.mxu0 0.0
    %2393 = vmatpush1.msra.mxu0 0.0
    %2394 = vmatprep.subr.mxu0 0.0
    %2395 = vmatpush1.msra.mxu0 0.0
    %2396 = vmatprep.subr.mxu0 0.0
    %2397 = vmatpush1.msra.mxu0 0.0
    %2398 = vmatprep.subr.mxu0 0.0
    %2399 = vmatpush1.msra.mxu0 0.0
    %2400 = vmatprep.subr.mxu0 0.0
    %2401 = vmatpush1.msra.mxu0 0.0
    %2402 = vmatprep.subr.mxu0 0.0
    %2403 = vmatpush1.msra.mxu0 0.0
    %2404 = vmatprep.subr.mxu0 0.0
    %2405 = vmatpush1.msra.mxu0 0.0
    %2406 = vmatprep.mubr.f32.mxu0 0.0
    %2407 = vmatmul.mubr.f32.gmra.mrb[0].mxu0 %v2340
    %v2408 = vpop.f32.mrb[0].mxu0
    %v2409 = vadd.f32 0.0, %v2408
    %v2410 = vpop.f32.mrb[0].mxu0
    %2411 = vdwg.mxu0
    %2412 = vrot.lane.b32.xlu0 %v1806, 88
    %v2413 = vpop.permute.xlu0 %2412
    %v2416 = vsel %vm139, %v2335, 0
    %2418 = vmatprep.subr.mxu0 0.0
    %2419 = vmatpush1.msra.mxu0 %v2413
    %2420 = vmatprep.subr.mxu0 0.0
    %2421 = vmatpush1.msra.mxu0 0.0
    %2422 = vmatprep.subr.mxu0 0.0
    %2423 = vmatpush1.msra.mxu0 0.0
    %2424 = vmatprep.subr.mxu0 0.0
    %2425 = vmatpush1.msra.mxu0 0.0
    %2426 = vmatprep.subr.mxu0 0.0
    %2427 = vmatpush1.msra.mxu0 0.0
    %2428 = vmatprep.subr.mxu0 0.0
    %2429 = vmatpush1.msra.mxu0 0.0
    %2430 = vmatprep.subr.mxu0 0.0
    %2431 = vmatpush1.msra.mxu0 0.0
    %2432 = vmatprep.subr.mxu0 0.0
    %2433 = vmatpush1.msra.mxu0 0.0
    %2434 = vmatprep.subr.mxu0 0.0
    %2435 = vmatpush1.msra.mxu0 0.0
    %2436 = vmatprep.subr.mxu0 0.0
    %2437 = vmatpush1.msra.mxu0 0.0
    %2438 = vmatprep.subr.mxu0 0.0
    %2439 = vmatpush1.msra.mxu0 0.0
    %2440 = vmatprep.subr.mxu0 0.0
    %2441 = vmatpush1.msra.mxu0 0.0
    %2442 = vmatprep.subr.mxu0 0.0
    %2443 = vmatpush1.msra.mxu0 0.0
    %2444 = vmatprep.subr.mxu0 0.0
    %2445 = vmatpush1.msra.mxu0 0.0
    %2446 = vmatprep.subr.mxu0 0.0
    %2447 = vmatpush1.msra.mxu0 0.0
    %2448 = vmatprep.subr.mxu0 0.0
    %2449 = vmatpush1.msra.mxu0 0.0
    %2450 = vmatprep.subr.mxu0 0.0
    %2451 = vmatpush1.msra.mxu0 0.0
    %2452 = vmatprep.subr.mxu0 0.0
    %2453 = vmatpush1.msra.mxu0 0.0
    %2454 = vmatprep.subr.mxu0 0.0
    %2455 = vmatpush1.msra.mxu0 0.0
    %2456 = vmatprep.subr.mxu0 0.0
    %2457 = vmatpush1.msra.mxu0 0.0
    %2458 = vmatprep.subr.mxu0 0.0
    %2459 = vmatpush1.msra.mxu0 0.0
    %2460 = vmatprep.subr.mxu0 0.0
    %2461 = vmatpush1.msra.mxu0 0.0
    %2462 = vmatprep.subr.mxu0 0.0
    %2463 = vmatpush1.msra.mxu0 0.0
    %2464 = vmatprep.subr.mxu0 0.0
    %2465 = vmatpush1.msra.mxu0 0.0
    %2466 = vmatprep.subr.mxu0 0.0
    %2467 = vmatpush1.msra.mxu0 0.0
    %2468 = vmatprep.subr.mxu0 0.0
    %2469 = vmatpush1.msra.mxu0 0.0
    %2470 = vmatprep.subr.mxu0 0.0
    %2471 = vmatpush1.msra.mxu0 0.0
    %2472 = vmatprep.subr.mxu0 0.0
    %2473 = vmatpush1.msra.mxu0 0.0
    %2474 = vmatprep.subr.mxu0 0.0
    %2475 = vmatpush1.msra.mxu0 0.0
    %2476 = vmatprep.subr.mxu0 0.0
    %2477 = vmatpush1.msra.mxu0 0.0
    %2478 = vmatprep.subr.mxu0 0.0
    %2479 = vmatpush1.msra.mxu0 0.0
    %2480 = vmatprep.subr.mxu0 0.0
    %2481 = vmatpush1.msra.mxu0 0.0
    %2482 = vmatprep.mubr.f32.mxu0 0.0
    %2483 = vmatmul.mubr.f32.gmra.mrb[0].mxu0 %v2416
    %v2484 = vpop.f32.mrb[0].mxu0
    %v2485 = vadd.f32 0.0, %v2484
    %v2486 = vpop.f32.mrb[0].mxu0
    %2487 = vdwg.mxu0
    %2488 = vrot.lane.b32.xlu0 %v1711, 112
    %v2489 = vpop.permute.xlu0 %2488
    %2490 = vrot.lane.b32.xlu0 %v1801, 112
    %v2491 = vpop.permute.xlu0 %2490
    %v2492 = vsel %vm139, %v2489, 0
    %v2494 = vsel %vm139, %v2491, 0
    %2496 = vmatprep.subr.mxu0 0.0
    %2497 = vmatpush1.xpose.msra.mxu0 %v2494
    %2498 = vmatprep.subr.mxu0 0.0
    %2499 = vmatpush1.xpose.msra.mxu0 0.0
    %2500 = vmatprep.subr.mxu0 0.0
    %2501 = vmatpush1.xpose.msra.mxu0 0.0
    %2502 = vmatprep.subr.mxu0 0.0
    %2503 = vmatpush1.xpose.msra.mxu0 0.0
    %2504 = vmatprep.subr.mxu0 0.0
    %2505 = vmatpush1.xpose.msra.mxu0 0.0
    %2506 = vmatprep.subr.mxu0 0.0
    %2507 = vmatpush1.xpose.msra.mxu0 0.0
    %2508 = vmatprep.subr.mxu0 0.0
    %2509 = vmatpush1.xpose.msra.mxu0 0.0
    %2510 = vmatprep.subr.mxu0 0.0
    %2511 = vmatpush1.xpose.msra.mxu0 0.0
    %2512 = vmatprep.subr.mxu0 0.0
    %2513 = vmatpush1.xpose.msra.mxu0 0.0
    %2514 = vmatprep.subr.mxu0 0.0
    %2515 = vmatpush1.xpose.msra.mxu0 0.0
    %2516 = vmatprep.subr.mxu0 0.0
    %2517 = vmatpush1.xpose.msra.mxu0 0.0
    %2518 = vmatprep.subr.mxu0 0.0
    %2519 = vmatpush1.xpose.msra.mxu0 0.0
    %2520 = vmatprep.subr.mxu0 0.0
    %2521 = vmatpush1.xpose.msra.mxu0 0.0
    %2522 = vmatprep.subr.mxu0 0.0
    %2523 = vmatpush1.xpose.msra.mxu0 0.0
    %2524 = vmatprep.subr.mxu0 0.0
    %2525 = vmatpush1.xpose.msra.mxu0 0.0
    %2526 = vmatprep.subr.mxu0 0.0
    %2527 = vmatpush1.xpose.msra.mxu0 0.0
    %2528 = vmatprep.subr.mxu0 0.0
    %2529 = vmatpush1.xpose.msra.mxu0 0.0
    %2530 = vmatprep.subr.mxu0 0.0
    %2531 = vmatpush1.xpose.msra.mxu0 0.0
    %2532 = vmatprep.subr.mxu0 0.0
    %2533 = vmatpush1.xpose.msra.mxu0 0.0
    %2534 = vmatprep.subr.mxu0 0.0
    %2535 = vmatpush1.xpose.msra.mxu0 0.0
    %2536 = vmatprep.subr.mxu0 0.0
    %2537 = vmatpush1.xpose.msra.mxu0 0.0
    %2538 = vmatprep.subr.mxu0 0.0
    %2539 = vmatpush1.xpose.msra.mxu0 0.0
    %2540 = vmatprep.subr.mxu0 0.0
    %2541 = vmatpush1.xpose.msra.mxu0 0.0
    %2542 = vmatprep.subr.mxu0 0.0
    %2543 = vmatpush1.xpose.msra.mxu0 0.0
    %2544 = vmatprep.subr.mxu0 0.0
    %2545 = vmatpush1.xpose.msra.mxu0 0.0
    %2546 = vmatprep.subr.mxu0 0.0
    %2547 = vmatpush1.xpose.msra.mxu0 0.0
    %2548 = vmatprep.subr.mxu0 0.0
    %2549 = vmatpush1.xpose.msra.mxu0 0.0
    %2550 = vmatprep.subr.mxu0 0.0
    %2551 = vmatpush1.xpose.msra.mxu0 0.0
    %2552 = vmatprep.subr.mxu0 0.0
    %2553 = vmatpush1.xpose.msra.mxu0 0.0
    %2554 = vmatprep.subr.mxu0 0.0
    %2555 = vmatpush1.xpose.msra.mxu0 0.0
    %2556 = vmatprep.subr.mxu0 0.0
    %2557 = vmatpush1.xpose.msra.mxu0 0.0
    %2558 = vmatprep.subr.mxu0 0.0
    %2559 = vmatpush1.xpose.msra.mxu0 0.0
    %2560 = vmatprep.mubr.f32.mxu0 0.0
    %2561 = vmatmul.mubr.f32.gmra.mrb[0].mxu0 %v2492
    %v2562 = vpop.f32.mrb[0].mxu0
    %v2563 = vadd.f32 0.0, %v2562
    %v2564 = vpop.f32.mrb[0].mxu0
    %2565 = vdwg.mxu0
    %2566 = vrot.lane.b32.xlu0 %v1716, 112
    %v2567 = vpop.permute.xlu0 %2566
    %2568 = vrot.lane.b32.xlu0 %v1806, 112
    %v2569 = vpop.permute.xlu0 %2568
    %v2570 = vsel %vm139, %v2567, 0
    %v2572 = vsel %vm139, %v2569, 0
    %2574 = vmatprep.subr.mxu0 0.0
    %2575 = vmatpush1.xpose.msra.mxu0 %v2572
    %2576 = vmatprep.subr.mxu0 0.0
    %2577 = vmatpush1.xpose.msra.mxu0 0.0
    %2578 = vmatprep.subr.mxu0 0.0
    %2579 = vmatpush1.xpose.msra.mxu0 0.0
    %2580 = vmatprep.subr.mxu0 0.0
    %2581 = vmatpush1.xpose.msra.mxu0 0.0
    %2582 = vmatprep.subr.mxu0 0.0
    %2583 = vmatpush1.xpose.msra.mxu0 0.0
    %2584 = vmatprep.subr.mxu0 0.0
    %2585 = vmatpush1.xpose.msra.mxu0 0.0
    %2586 = vmatprep.subr.mxu0 0.0
    %2587 = vmatpush1.xpose.msra.mxu0 0.0
    %2588 = vmatprep.subr.mxu0 0.0
    %2589 = vmatpush1.xpose.msra.mxu0 0.0
    %2590 = vmatprep.subr.mxu0 0.0
    %2591 = vmatpush1.xpose.msra.mxu0 0.0
    %2592 = vmatprep.subr.mxu0 0.0
    %2593 = vmatpush1.xpose.msra.mxu0 0.0
    %2594 = vmatprep.subr.mxu0 0.0
    %2595 = vmatpush1.xpose.msra.mxu0 0.0
    %2596 = vmatprep.subr.mxu0 0.0
    %2597 = vmatpush1.xpose.msra.mxu0 0.0
    %2598 = vmatprep.subr.mxu0 0.0
    %2599 = vmatpush1.xpose.msra.mxu0 0.0
    %2600 = vmatprep.subr.mxu0 0.0
    %2601 = vmatpush1.xpose.msra.mxu0 0.0
    %2602 = vmatprep.subr.mxu0 0.0
    %2603 = vmatpush1.xpose.msra.mxu0 0.0
    %2604 = vmatprep.subr.mxu0 0.0
    %2605 = vmatpush1.xpose.msra.mxu0 0.0
    %2606 = vmatprep.subr.mxu0 0.0
    %2607 = vmatpush1.xpose.msra.mxu0 0.0
    %2608 = vmatprep.subr.mxu0 0.0
    %2609 = vmatpush1.xpose.msra.mxu0 0.0
    %2610 = vmatprep.subr.mxu0 0.0
    %2611 = vmatpush1.xpose.msra.mxu0 0.0
    %2612 = vmatprep.subr.mxu0 0.0
    %2613 = vmatpush1.xpose.msra.mxu0 0.0
    %2614 = vmatprep.subr.mxu0 0.0
    %2615 = vmatpush1.xpose.msra.mxu0 0.0
    %2616 = vmatprep.subr.mxu0 0.0
    %2617 = vmatpush1.xpose.msra.mxu0 0.0
    %2618 = vmatprep.subr.mxu0 0.0
    %2619 = vmatpush1.xpose.msra.mxu0 0.0
    %2620 = vmatprep.subr.mxu0 0.0
    %2621 = vmatpush1.xpose.msra.mxu0 0.0
    %2622 = vmatprep.subr.mxu0 0.0
    %2623 = vmatpush1.xpose.msra.mxu0 0.0
    %2624 = vmatprep.subr.mxu0 0.0
    %2625 = vmatpush1.xpose.msra.mxu0 0.0
    %2626 = vmatprep.subr.mxu0 0.0
    %2627 = vmatpush1.xpose.msra.mxu0 0.0
    %2628 = vmatprep.subr.mxu0 0.0
    %2629 = vmatpush1.xpose.msra.mxu0 0.0
    %2630 = vmatprep.subr.mxu0 0.0
    %2631 = vmatpush1.xpose.msra.mxu0 0.0
    %2632 = vmatprep.subr.mxu0 0.0
    %2633 = vmatpush1.xpose.msra.mxu0 0.0
    %2634 = vmatprep.subr.mxu0 0.0
    %2635 = vmatpush1.xpose.msra.mxu0 0.0
    %2636 = vmatprep.subr.mxu0 0.0
    %2637 = vmatpush1.xpose.msra.mxu0 0.0
    %2638 = vmatprep.mubr.f32.mxu0 0.0
    %2639 = vmatmul.mubr.f32.gmra.mrb[0].mxu0 %v2570
    %v2640 = vpop.f32.mrb[0].mxu0
    %v2641 = vadd.f32 0.0, %v2640
    %v2642 = vpop.f32.mrb[0].mxu0
    %2643 = vdwg.mxu0
    %v2644 = vmul.f32 %v2563, 0.35355338
    %v2645 = vmul.f32 %v2641, 0.35355338
    %v2646 = vadd.f32 %v2644, %v1973
    %v2647 = vadd.f32 %v2645, %v1975
    %v2648 = vsel %vm139, %v2646, -inf
    %2649 = vmax.xlane.f32.xlu0 %v2648
    %v2650 = vpop.xlane.xlu0 %2649
    %v2651 = vsel %vm139, %v2647, -inf
    %2652 = vmax.xlane.f32.xlu0 %v2651
    %v2653 = vpop.xlane.xlu0 %2652
    %v2654 = vsub.f32 %v2646, %v2650
    %v2655 = vsub.f32 %v2647, %v2653
    %v2656 = vmul.f32 %v2654, 1.442695
    %v2657 = vpow.pop %v2656
    %v2658 = vmul.f32 %v2655, 1.442695
    %v2659 = vpow.pop %v2658
    %v2660 = vsel %vm139, %v2657, 0.0
    %2661 = vadd.xlane.f32.xlu0 %v2660
    %v2662 = vpop.xlane.xlu0 %2661
    %v2663 = vsel %vm139, %v2659, 0.0
    %2664 = vadd.xlane.f32.xlu0 %v2663
    %v2665 = vpop.xlane.xlu0 %2664
    %v2666 = vrcp.pop %v2662
    %v2667 = vrcp.pop %v2665
    %v2668 = vmul.f32 %v2657, %v2666
    %v2669 = vmul.f32 %v2659, %v2667
    %2670 = vrot.lane.b32.xlu0 %v1801, 80
    %v2671 = vpop.permute.xlu0 %2670
    %v2674 = vsel %vm139, %v2668, 0
    %2676 = vmatprep.subr.mxu0 0.0
    %2677 = vmatpush1.msra.mxu0 %v2671
    %2678 = vmatprep.subr.mxu0 0.0
    %2679 = vmatpush1.msra.mxu0 0.0
    %2680 = vmatprep.subr.mxu0 0.0
    %2681 = vmatpush1.msra.mxu0 0.0
    %2682 = vmatprep.subr.mxu0 0.0
    %2683 = vmatpush1.msra.mxu0 0.0
    %2684 = vmatprep.subr.mxu0 0.0
    %2685 = vmatpush1.msra.mxu0 0.0
    %2686 = vmatprep.subr.mxu0 0.0
    %2687 = vmatpush1.msra.mxu0 0.0
    %2688 = vmatprep.subr.mxu0 0.0
    %2689 = vmatpush1.msra.mxu0 0.0
    %2690 = vmatprep.subr.mxu0 0.0
    %2691 = vmatpush1.msra.mxu0 0.0
    %2692 = vmatprep.subr.mxu0 0.0
    %2693 = vmatpush1.msra.mxu0 0.0
    %2694 = vmatprep.subr.mxu0 0.0
    %2695 = vmatpush1.msra.mxu0 0.0
    %2696 = vmatprep.subr.mxu0 0.0
    %2697 = vmatpush1.msra.mxu0 0.0
    %2698 = vmatprep.subr.mxu0 0.0
    %2699 = vmatpush1.msra.mxu0 0.0
    %2700 = vmatprep.subr.mxu0 0.0
    %2701 = vmatpush1.msra.mxu0 0.0
    %2702 = vmatprep.subr.mxu0 0.0
    %2703 = vmatpush1.msra.mxu0 0.0
    %2704 = vmatprep.subr.mxu0 0.0
    %2705 = vmatpush1.msra.mxu0 0.0
    %2706 = vmatprep.subr.mxu0 0.0
    %2707 = vmatpush1.msra.mxu0 0.0
    %2708 = vmatprep.subr.mxu0 0.0
    %2709 = vmatpush1.msra.mxu0 0.0
    %2710 = vmatprep.subr.mxu0 0.0
    %2711 = vmatpush1.msra.mxu0 0.0
    %2712 = vmatprep.subr.mxu0 0.0
    %2713 = vmatpush1.msra.mxu0 0.0
    %2714 = vmatprep.subr.mxu0 0.0
    %2715 = vmatpush1.msra.mxu0 0.0
    %2716 = vmatprep.subr.mxu0 0.0
    %2717 = vmatpush1.msra.mxu0 0.0
    %2718 = vmatprep.subr.mxu0 0.0
    %2719 = vmatpush1.msra.mxu0 0.0
    %2720 = vmatprep.subr.mxu0 0.0
    %2721 = vmatpush1.msra.mxu0 0.0
    %2722 = vmatprep.subr.mxu0 0.0
    %2723 = vmatpush1.msra.mxu0 0.0
    %2724 = vmatprep.subr.mxu0 0.0
    %2725 = vmatpush1.msra.mxu0 0.0
    %2726 = vmatprep.subr.mxu0 0.0
    %2727 = vmatpush1.msra.mxu0 0.0
    %2728 = vmatprep.subr.mxu0 0.0
    %2729 = vmatpush1.msra.mxu0 0.0
    %2730 = vmatprep.subr.mxu0 0.0
    %2731 = vmatpush1.msra.mxu0 0.0
    %2732 = vmatprep.subr.mxu0 0.0
    %2733 = vmatpush1.msra.mxu0 0.0
    %2734 = vmatprep.subr.mxu0 0.0
    %2735 = vmatpush1.msra.mxu0 0.0
    %2736 = vmatprep.subr.mxu0 0.0
    %2737 = vmatpush1.msra.mxu0 0.0
    %2738 = vmatprep.subr.mxu0 0.0
    %2739 = vmatpush1.msra.mxu0 0.0
    %2740 = vmatprep.mubr.f32.mxu0 0.0
    %2741 = vmatmul.mubr.f32.gmra.mrb[0].mxu0 %v2674
    %v2742 = vpop.f32.mrb[0].mxu0
    %v2743 = vadd.f32 0.0, %v2742
    %v2744 = vpop.f32.mrb[0].mxu0
    %2745 = vdwg.mxu0
    %2746 = vrot.lane.b32.xlu0 %v1806, 80
    %v2747 = vpop.permute.xlu0 %2746
    %v2750 = vsel %vm139, %v2669, 0
    %2752 = vmatprep.subr.mxu0 0.0
    %2753 = vmatpush1.msra.mxu0 %v2747
    %2754 = vmatprep.subr.mxu0 0.0
    %2755 = vmatpush1.msra.mxu0 0.0
    %2756 = vmatprep.subr.mxu0 0.0
    %2757 = vmatpush1.msra.mxu0 0.0
    %2758 = vmatprep.subr.mxu0 0.0
    %2759 = vmatpush1.msra.mxu0 0.0
    %2760 = vmatprep.subr.mxu0 0.0
    %2761 = vmatpush1.msra.mxu0 0.0
    %2762 = vmatprep.subr.mxu0 0.0
    %2763 = vmatpush1.msra.mxu0 0.0
    %2764 = vmatprep.subr.mxu0 0.0
    %2765 = vmatpush1.msra.mxu0 0.0
    %2766 = vmatprep.subr.mxu0 0.0
    %2767 = vmatpush1.msra.mxu0 0.0
    %2768 = vmatprep.subr.mxu0 0.0
    %2769 = vmatpush1.msra.mxu0 0.0
    %2770 = vmatprep.subr.mxu0 0.0
    %2771 = vmatpush1.msra.mxu0 0.0
    %2772 = vmatprep.subr.mxu0 0.0
    %2773 = vmatpush1.msra.mxu0 0.0
    %2774 = vmatprep.subr.mxu0 0.0
    %2775 = vmatpush1.msra.mxu0 0.0
    %2776 = vmatprep.subr.mxu0 0.0
    %2777 = vmatpush1.msra.mxu0 0.0
    %2778 = vmatprep.subr.mxu0 0.0
    %2779 = vmatpush1.msra.mxu0 0.0
    %2780 = vmatprep.subr.mxu0 0.0
    %2781 = vmatpush1.msra.mxu0 0.0
    %2782 = vmatprep.subr.mxu0 0.0
    %2783 = vmatpush1.msra.mxu0 0.0
    %2784 = vmatprep.subr.mxu0 0.0
    %2785 = vmatpush1.msra.mxu0 0.0
    %2786 = vmatprep.subr.mxu0 0.0
    %2787 = vmatpush1.msra.mxu0 0.0
    %2788 = vmatprep.subr.mxu0 0.0
    %2789 = vmatpush1.msra.mxu0 0.0
    %2790 = vmatprep.subr.mxu0 0.0
    %2791 = vmatpush1.msra.mxu0 0.0
    %2792 = vmatprep.subr.mxu0 0.0
    %2793 = vmatpush1.msra.mxu0 0.0
    %2794 = vmatprep.subr.mxu0 0.0
    %2795 = vmatpush1.msra.mxu0 0.0
    %2796 = vmatprep.subr.mxu0 0.0
    %2797 = vmatpush1.msra.mxu0 0.0
    %2798 = vmatprep.subr.mxu0 0.0
    %2799 = vmatpush1.msra.mxu0 0.0
    %2800 = vmatprep.subr.mxu0 0.0
    %2801 = vmatpush1.msra.mxu0 0.0
    %2802 = vmatprep.subr.mxu0 0.0
    %2803 = vmatpush1.msra.mxu0 0.0
    %2804 = vmatprep.subr.mxu0 0.0
    %2805 = vmatpush1.msra.mxu0 0.0
    %2806 = vmatprep.subr.mxu0 0.0
    %2807 = vmatpush1.msra.mxu0 0.0
    %2808 = vmatprep.subr.mxu0 0.0
    %2809 = vmatpush1.msra.mxu0 0.0
    %2810 = vmatprep.subr.mxu0 0.0
    %2811 = vmatpush1.msra.mxu0 0.0
    %2812 = vmatprep.subr.mxu0 0.0
    %2813 = vmatpush1.msra.mxu0 0.0
    %2814 = vmatprep.subr.mxu0 0.0
    %2815 = vmatpush1.msra.mxu0 0.0
    %2816 = vmatprep.mubr.f32.mxu0 0.0
    %2817 = vmatmul.mubr.f32.gmra.mrb[0].mxu0 %v2750
    %v2818 = vpop.f32.mrb[0].mxu0
    %v2819 = vadd.f32 0.0, %v2818
    %v2820 = vpop.f32.mrb[0].mxu0
    %2821 = vdwg.mxu0
    %2822 = vrot.lane.b32.xlu0 %v1711, 104
    %v2823 = vpop.permute.xlu0 %2822
    %2824 = vrot.lane.b32.xlu0 %v1801, 104
    %v2825 = vpop.permute.xlu0 %2824
    %v2826 = vsel %vm139, %v2823, 0
    %v2828 = vsel %vm139, %v2825, 0
    %2830 = vmatprep.subr.mxu0 0.0
    %2831 = vmatpush1.xpose.msra.mxu0 %v2828
    %2832 = vmatprep.subr.mxu0 0.0
    %2833 = vmatpush1.xpose.msra.mxu0 0.0
    %2834 = vmatprep.subr.mxu0 0.0
    %2835 = vmatpush1.xpose.msra.mxu0 0.0
    %2836 = vmatprep.subr.mxu0 0.0
    %2837 = vmatpush1.xpose.msra.mxu0 0.0
    %2838 = vmatprep.subr.mxu0 0.0
    %2839 = vmatpush1.xpose.msra.mxu0 0.0
    %2840 = vmatprep.subr.mxu0 0.0
    %2841 = vmatpush1.xpose.msra.mxu0 0.0
    %2842 = vmatprep.subr.mxu0 0.0
    %2843 = vmatpush1.xpose.msra.mxu0 0.0
    %2844 = vmatprep.subr.mxu0 0.0
    %2845 = vmatpush1.xpose.msra.mxu0 0.0
    %2846 = vmatprep.subr.mxu0 0.0
    %2847 = vmatpush1.xpose.msra.mxu0 0.0
    %2848 = vmatprep.subr.mxu0 0.0
    %2849 = vmatpush1.xpose.msra.mxu0 0.0
    %2850 = vmatprep.subr.mxu0 0.0
    %2851 = vmatpush1.xpose.msra.mxu0 0.0
    %2852 = vmatprep.subr.mxu0 0.0
    %2853 = vmatpush1.xpose.msra.mxu0 0.0
    %2854 = vmatprep.subr.mxu0 0.0
    %2855 = vmatpush1.xpose.msra.mxu0 0.0
    %2856 = vmatprep.subr.mxu0 0.0
    %2857 = vmatpush1.xpose.msra.mxu0 0.0
    %2858 = vmatprep.subr.mxu0 0.0
    %2859 = vmatpush1.xpose.msra.mxu0 0.0
    %2860 = vmatprep.subr.mxu0 0.0
    %2861 = vmatpush1.xpose.msra.mxu0 0.0
    %2862 = vmatprep.subr.mxu0 0.0
    %2863 = vmatpush1.xpose.msra.mxu0 0.0
    %2864 = vmatprep.subr.mxu0 0.0
    %2865 = vmatpush1.xpose.msra.mxu0 0.0
    %2866 = vmatprep.subr.mxu0 0.0
    %2867 = vmatpush1.xpose.msra.mxu0 0.0
    %2868 = vmatprep.subr.mxu0 0.0
    %2869 = vmatpush1.xpose.msra.mxu0 0.0
    %2870 = vmatprep.subr.mxu0 0.0
    %2871 = vmatpush1.xpose.msra.mxu0 0.0
    %2872 = vmatprep.subr.mxu0 0.0
    %2873 = vmatpush1.xpose.msra.mxu0 0.0
    %2874 = vmatprep.subr.mxu0 0.0
    %2875 = vmatpush1.xpose.msra.mxu0 0.0
    %2876 = vmatprep.subr.mxu0 0.0
    %2877 = vmatpush1.xpose.msra.mxu0 0.0
    %2878 = vmatprep.subr.mxu0 0.0
    %2879 = vmatpush1.xpose.msra.mxu0 0.0
    %2880 = vmatprep.subr.mxu0 0.0
    %2881 = vmatpush1.xpose.msra.mxu0 0.0
    %2882 = vmatprep.subr.mxu0 0.0
    %2883 = vmatpush1.xpose.msra.mxu0 0.0
    %2884 = vmatprep.subr.mxu0 0.0
    %2885 = vmatpush1.xpose.msra.mxu0 0.0
    %2886 = vmatprep.subr.mxu0 0.0
    %2887 = vmatpush1.xpose.msra.mxu0 0.0
    %2888 = vmatprep.subr.mxu0 0.0
    %2889 = vmatpush1.xpose.msra.mxu0 0.0
    %2890 = vmatprep.subr.mxu0 0.0
    %2891 = vmatpush1.xpose.msra.mxu0 0.0
    %2892 = vmatprep.subr.mxu0 0.0
    %2893 = vmatpush1.xpose.msra.mxu0 0.0
    %2894 = vmatprep.mubr.f32.mxu0 0.0
    %2895 = vmatmul.mubr.f32.gmra.mrb[0].mxu0 %v2826
    %v2896 = vpop.f32.mrb[0].mxu0
    %v2897 = vadd.f32 0.0, %v2896
    %v2898 = vpop.f32.mrb[0].mxu0
    %2899 = vdwg.mxu0
    %2900 = vrot.lane.b32.xlu0 %v1716, 104
    %v2901 = vpop.permute.xlu0 %2900
    %2902 = vrot.lane.b32.xlu0 %v1806, 104
    %v2903 = vpop.permute.xlu0 %2902
    %v2904 = vsel %vm139, %v2901, 0
    %v2906 = vsel %vm139, %v2903, 0
    %2908 = vmatprep.subr.mxu0 0.0
    %2909 = vmatpush1.xpose.msra.mxu0 %v2906
    %2910 = vmatprep.subr.mxu0 0.0
    %2911 = vmatpush1.xpose.msra.mxu0 0.0
    %2912 = vmatprep.subr.mxu0 0.0
    %2913 = vmatpush1.xpose.msra.mxu0 0.0
    %2914 = vmatprep.subr.mxu0 0.0
    %2915 = vmatpush1.xpose.msra.mxu0 0.0
    %2916 = vmatprep.subr.mxu0 0.0
    %2917 = vmatpush1.xpose.msra.mxu0 0.0
    %2918 = vmatprep.subr.mxu0 0.0
    %2919 = vmatpush1.xpose.msra.mxu0 0.0
    %2920 = vmatprep.subr.mxu0 0.0
    %2921 = vmatpush1.xpose.msra.mxu0 0.0
    %2922 = vmatprep.subr.mxu0 0.0
    %2923 = vmatpush1.xpose.msra.mxu0 0.0
    %2924 = vmatprep.subr.mxu0 0.0
    %2925 = vmatpush1.xpose.msra.mxu0 0.0
    %2926 = vmatprep.subr.mxu0 0.0
    %2927 = vmatpush1.xpose.msra.mxu0 0.0
    %2928 = vmatprep.subr.mxu0 0.0
    %2929 = vmatpush1.xpose.msra.mxu0 0.0
    %2930 = vmatprep.subr.mxu0 0.0
    %2931 = vmatpush1.xpose.msra.mxu0 0.0
    %2932 = vmatprep.subr.mxu0 0.0
    %2933 = vmatpush1.xpose.msra.mxu0 0.0
    %2934 = vmatprep.subr.mxu0 0.0
    %2935 = vmatpush1.xpose.msra.mxu0 0.0
    %2936 = vmatprep.subr.mxu0 0.0
    %2937 = vmatpush1.xpose.msra.mxu0 0.0
    %2938 = vmatprep.subr.mxu0 0.0
    %2939 = vmatpush1.xpose.msra.mxu0 0.0
    %2940 = vmatprep.subr.mxu0 0.0
    %2941 = vmatpush1.xpose.msra.mxu0 0.0
    %2942 = vmatprep.subr.mxu0 0.0
    %2943 = vmatpush1.xpose.msra.mxu0 0.0
    %2944 = vmatprep.subr.mxu0 0.0
    %2945 = vmatpush1.xpose.msra.mxu0 0.0
    %2946 = vmatprep.subr.mxu0 0.0
    %2947 = vmatpush1.xpose.msra.mxu0 0.0
    %2948 = vmatprep.subr.mxu0 0.0
    %2949 = vmatpush1.xpose.msra.mxu0 0.0
    %2950 = vmatprep.subr.mxu0 0.0
    %2951 = vmatpush1.xpose.msra.mxu0 0.0
    %2952 = vmatprep.subr.mxu0 0.0
    %2953 = vmatpush1.xpose.msra.mxu0 0.0
    %2954 = vmatprep.subr.mxu0 0.0
    %2955 = vmatpush1.xpose.msra.mxu0 0.0
    %2956 = vmatprep.subr.mxu0 0.0
    %2957 = vmatpush1.xpose.msra.mxu0 0.0
    %2958 = vmatprep.subr.mxu0 0.0
    %2959 = vmatpush1.xpose.msra.mxu0 0.0
    %2960 = vmatprep.subr.mxu0 0.0
    %2961 = vmatpush1.xpose.msra.mxu0 0.0
    %2962 = vmatprep.subr.mxu0 0.0
    %2963 = vmatpush1.xpose.msra.mxu0 0.0
    %2964 = vmatprep.subr.mxu0 0.0
    %2965 = vmatpush1.xpose.msra.mxu0 0.0
    %2966 = vmatprep.subr.mxu0 0.0
    %2967 = vmatpush1.xpose.msra.mxu0 0.0
    %2968 = vmatprep.subr.mxu0 0.0
    %2969 = vmatpush1.xpose.msra.mxu0 0.0
    %2970 = vmatprep.subr.mxu0 0.0
    %2971 = vmatpush1.xpose.msra.mxu0 0.0
    %2972 = vmatprep.mubr.f32.mxu0 0.0
    %2973 = vmatmul.mubr.f32.gmra.mrb[0].mxu0 %v2904
    %v2974 = vpop.f32.mrb[0].mxu0
    %v2975 = vadd.f32 0.0, %v2974
    %v2976 = vpop.f32.mrb[0].mxu0
    %2977 = vdwg.mxu0
    %v2978 = vmul.f32 %v2897, 0.35355338
    %v2979 = vmul.f32 %v2975, 0.35355338
    %v2980 = vadd.f32 %v2978, %v1973
    %v2981 = vadd.f32 %v2979, %v1975
    %v2982 = vsel %vm139, %v2980, -inf
    %2983 = vmax.xlane.f32.xlu0 %v2982
    %v2984 = vpop.xlane.xlu0 %2983
    %v2985 = vsel %vm139, %v2981, -inf
    %2986 = vmax.xlane.f32.xlu0 %v2985
    %v2987 = vpop.xlane.xlu0 %2986
    %v2988 = vsub.f32 %v2980, %v2984
    %v2989 = vsub.f32 %v2981, %v2987
    %v2990 = vmul.f32 %v2988, 1.442695
    %v2991 = vpow.pop %v2990
    %v2992 = vmul.f32 %v2989, 1.442695
    %v2993 = vpow.pop %v2992
    %v2994 = vsel %vm139, %v2991, 0.0
    %2995 = vadd.xlane.f32.xlu0 %v2994
    %v2996 = vpop.xlane.xlu0 %2995
    %v2997 = vsel %vm139, %v2993, 0.0
    %2998 = vadd.xlane.f32.xlu0 %v2997
    %v2999 = vpop.xlane.xlu0 %2998
    %v3000 = vrcp.pop %v2996
    %v3001 = vrcp.pop %v2999
    %v3002 = vmul.f32 %v2991, %v3000
    %v3003 = vmul.f32 %v2993, %v3001
    %3004 = vrot.lane.b32.xlu0 %v1801, 72
    %v3005 = vpop.permute.xlu0 %3004
    %v3008 = vsel %vm139, %v3002, 0
    %3010 = vmatprep.subr.mxu0 0.0
    %3011 = vmatpush1.msra.mxu0 %v3005
    %3012 = vmatprep.subr.mxu0 0.0
    %3013 = vmatpush1.msra.mxu0 0.0
    %3014 = vmatprep.subr.mxu0 0.0
    %3015 = vmatpush1.msra.mxu0 0.0
    %3016 = vmatprep.subr.mxu0 0.0
    %3017 = vmatpush1.msra.mxu0 0.0
    %3018 = vmatprep.subr.mxu0 0.0
    %3019 = vmatpush1.msra.mxu0 0.0
    %3020 = vmatprep.subr.mxu0 0.0
    %3021 = vmatpush1.msra.mxu0 0.0
    %3022 = vmatprep.subr.mxu0 0.0
    %3023 = vmatpush1.msra.mxu0 0.0
    %3024 = vmatprep.subr.mxu0 0.0
    %3025 = vmatpush1.msra.mxu0 0.0
    %3026 = vmatprep.subr.mxu0 0.0
    %3027 = vmatpush1.msra.mxu0 0.0
    %3028 = vmatprep.subr.mxu0 0.0
    %3029 = vmatpush1.msra.mxu0 0.0
    %3030 = vmatprep.subr.mxu0 0.0
    %3031 = vmatpush1.msra.mxu0 0.0
    %3032 = vmatprep.subr.mxu0 0.0
    %3033 = vmatpush1.msra.mxu0 0.0
    %3034 = vmatprep.subr.mxu0 0.0
    %3035 = vmatpush1.msra.mxu0 0.0
    %3036 = vmatprep.subr.mxu0 0.0
    %3037 = vmatpush1.msra.mxu0 0.0
    %3038 = vmatprep.subr.mxu0 0.0
    %3039 = vmatpush1.msra.mxu0 0.0
    %3040 = vmatprep.subr.mxu0 0.0
    %3041 = vmatpush1.msra.mxu0 0.0
    %3042 = vmatprep.subr.mxu0 0.0
    %3043 = vmatpush1.msra.mxu0 0.0
    %3044 = vmatprep.subr.mxu0 0.0
    %3045 = vmatpush1.msra.mxu0 0.0
    %3046 = vmatprep.subr.mxu0 0.0
    %3047 = vmatpush1.msra.mxu0 0.0
    %3048 = vmatprep.subr.mxu0 0.0
    %3049 = vmatpush1.msra.mxu0 0.0
    %3050 = vmatprep.subr.mxu0 0.0
    %3051 = vmatpush1.msra.mxu0 0.0
    %3052 = vmatprep.subr.mxu0 0.0
    %3053 = vmatpush1.msra.mxu0 0.0
    %3054 = vmatprep.subr.mxu0 0.0
    %3055 = vmatpush1.msra.mxu0 0.0
    %3056 = vmatprep.subr.mxu0 0.0
    %3057 = vmatpush1.msra.mxu0 0.0
    %3058 = vmatprep.subr.mxu0 0.0
    %3059 = vmatpush1.msra.mxu0 0.0
    %3060 = vmatprep.subr.mxu0 0.0
    %3061 = vmatpush1.msra.mxu0 0.0
    %3062 = vmatprep.subr.mxu0 0.0
    %3063 = vmatpush1.msra.mxu0 0.0
    %3064 = vmatprep.subr.mxu0 0.0
    %3065 = vmatpush1.msra.mxu0 0.0
    %3066 = vmatprep.subr.mxu0 0.0
    %3067 = vmatpush1.msra.mxu0 0.0
    %3068 = vmatprep.subr.mxu0 0.0
    %3069 = vmatpush1.msra.mxu0 0.0
    %3070 = vmatprep.subr.mxu0 0.0
    %3071 = vmatpush1.msra.mxu0 0.0
    %3072 = vmatprep.subr.mxu0 0.0
    %3073 = vmatpush1.msra.mxu0 0.0
    %3074 = vmatprep.mubr.f32.mxu0 0.0
    %3075 = vmatmul.mubr.f32.gmra.mrb[0].mxu0 %v3008
    %v3076 = vpop.f32.mrb[0].mxu0
    %v3077 = vadd.f32 0.0, %v3076
    %v3078 = vpop.f32.mrb[0].mxu0
    %3079 = vdwg.mxu0
    %3080 = vrot.lane.b32.xlu0 %v1806, 72
    %v3081 = vpop.permute.xlu0 %3080
    %v3084 = vsel %vm139, %v3003, 0
    %3086 = vmatprep.subr.mxu0 0.0
    %3087 = vmatpush1.msra.mxu0 %v3081
    %3088 = vmatprep.subr.mxu0 0.0
    %3089 = vmatpush1.msra.mxu0 0.0
    %3090 = vmatprep.subr.mxu0 0.0
    %3091 = vmatpush1.msra.mxu0 0.0
    %3092 = vmatprep.subr.mxu0 0.0
    %3093 = vmatpush1.msra.mxu0 0.0
    %3094 = vmatprep.subr.mxu0 0.0
    %3095 = vmatpush1.msra.mxu0 0.0
    %3096 = vmatprep.subr.mxu0 0.0
    %3097 = vmatpush1.msra.mxu0 0.0
    %3098 = vmatprep.subr.mxu0 0.0
    %3099 = vmatpush1.msra.mxu0 0.0
    %3100 = vmatprep.subr.mxu0 0.0
    %3101 = vmatpush1.msra.mxu0 0.0
    %3102 = vmatprep.subr.mxu0 0.0
    %3103 = vmatpush1.msra.mxu0 0.0
    %3104 = vmatprep.subr.mxu0 0.0
    %3105 = vmatpush1.msra.mxu0 0.0
    %3106 = vmatprep.subr.mxu0 0.0
    %3107 = vmatpush1.msra.mxu0 0.0
    %3108 = vmatprep.subr.mxu0 0.0
    %3109 = vmatpush1.msra.mxu0 0.0
    %3110 = vmatprep.subr.mxu0 0.0
    %3111 = vmatpush1.msra.mxu0 0.0
    %3112 = vmatprep.subr.mxu0 0.0
    %3113 = vmatpush1.msra.mxu0 0.0
    %3114 = vmatprep.subr.mxu0 0.0
    %3115 = vmatpush1.msra.mxu0 0.0
    %3116 = vmatprep.subr.mxu0 0.0
    %3117 = vmatpush1.msra.mxu0 0.0
    %3118 = vmatprep.subr.mxu0 0.0
    %3119 = vmatpush1.msra.mxu0 0.0
    %3120 = vmatprep.subr.mxu0 0.0
    %3121 = vmatpush1.msra.mxu0 0.0
    %3122 = vmatprep.subr.mxu0 0.0
    %3123 = vmatpush1.msra.mxu0 0.0
    %3124 = vmatprep.subr.mxu0 0.0
    %3125 = vmatpush1.msra.mxu0 0.0
    %3126 = vmatprep.subr.mxu0 0.0
    %3127 = vmatpush1.msra.mxu0 0.0
    %3128 = vmatprep.subr.mxu0 0.0
    %3129 = vmatpush1.msra.mxu0 0.0
    %3130 = vmatprep.subr.mxu0 0.0
    %3131 = vmatpush1.msra.mxu0 0.0
    %3132 = vmatprep.subr.mxu0 0.0
    %3133 = vmatpush1.msra.mxu0 0.0
    %3134 = vmatprep.subr.mxu0 0.0
    %3135 = vmatpush1.msra.mxu0 0.0
    %3136 = vmatprep.subr.mxu0 0.0
    %3137 = vmatpush1.msra.mxu0 0.0
    %3138 = vmatprep.subr.mxu0 0.0
    %3139 = vmatpush1.msra.mxu0 0.0
    %3140 = vmatprep.subr.mxu0 0.0
    %3141 = vmatpush1.msra.mxu0 0.0
    %3142 = vmatprep.subr.mxu0 0.0
    %3143 = vmatpush1.msra.mxu0 0.0
    %3144 = vmatprep.subr.mxu0 0.0
    %3145 = vmatpush1.msra.mxu0 0.0
    %3146 = vmatprep.subr.mxu0 0.0
    %3147 = vmatpush1.msra.mxu0 0.0
    %3148 = vmatprep.subr.mxu0 0.0
    %3149 = vmatpush1.msra.mxu0 0.0
    %3150 = vmatprep.mubr.f32.mxu0 0.0
    %3151 = vmatmul.mubr.f32.gmra.mrb[0].mxu0 %v3084
    %v3152 = vpop.f32.mrb[0].mxu0
    %v3153 = vadd.f32 0.0, %v3152
    %v3154 = vpop.f32.mrb[0].mxu0
    %3155 = vdwg.mxu0
    %3158 = vrot.lane.b32.xlu0 %v2409, 8
    %v3159 = vpop.permute.xlu0 %3158
    %3160 = vrot.lane.b32.xlu0 %v2485, 8
    %v3161 = vpop.permute.xlu0 %3160
    %3166 = vrot.lane.b32.xlu0 %v2743, 16
    %v3167 = vpop.permute.xlu0 %3166
    %3168 = vrot.lane.b32.xlu0 %v2819, 16
    %v3169 = vpop.permute.xlu0 %3168
    %3174 = vrot.lane.b32.xlu0 %v3077, 24
    %v3175 = vpop.permute.xlu0 %3174
    %3176 = vrot.lane.b32.xlu0 %v3153, 24
    %v3177 = vpop.permute.xlu0 %3176
    %v3180 = vsel %vm139, %v2075, %v3159
    %v3181 = vsel %vm139, %v2151, %v3161
    %v3182 = vsel %vm1497, %v3180, %v3167
    %v3183 = vsel %vm1497, %v3181, %v3169
    %v3184 = vsel %vm1500, %v3182, %v3175
    %v3185 = vsel %vm1500, %v3183, %v3177
    %v3186 = vlaneseq
    %v3187 = vshrl.u32 %v3186, 7
    %v3188 = vsub.s32 0, %v3187
    %v3189 = vrot.slane %v1815, %v3188
    %v3191 = vsel %vm47, %v3184, 0
    %v3194 = vsel %vm47, %v3185, 0
    %3196 = vmatprep.subr.mxu0 0.0
    %3197 = vmatpush1.msra.mxu0 %v1811
    %3198 = vmatprep.subr.mxu0 0.0
    %3199 = vmatpush1.msra.mxu0 %v1812
    %3200 = vmatprep.subr.mxu0 0.0
    %3201 = vmatpush1.msra.mxu0 %v1813
    %3202 = vmatprep.subr.mxu0 0.0
    %3203 = vmatpush1.msra.mxu0 %v1814
    %3204 = vmatprep.subr.mxu0 0.0
    %3205 = vmatpush1.msra.mxu0 0.0
    %3206 = vmatprep.subr.mxu0 0.0
    %3207 = vmatpush1.msra.mxu0 0.0
    %3208 = vmatprep.subr.mxu0 0.0
    %3209 = vmatpush1.msra.mxu0 0.0
    %3210 = vmatprep.subr.mxu0 0.0
    %3211 = vmatpush1.msra.mxu0 0.0
    %3212 = vmatprep.subr.mxu0 0.0
    %3213 = vmatpush1.msra.mxu0 0.0
    %3214 = vmatprep.subr.mxu0 0.0
    %3215 = vmatpush1.msra.mxu0 0.0
    %3216 = vmatprep.subr.mxu0 0.0
    %3217 = vmatpush1.msra.mxu0 0.0
    %3218 = vmatprep.subr.mxu0 0.0
    %3219 = vmatpush1.msra.mxu0 0.0
    %3220 = vmatprep.subr.mxu0 0.0
    %3221 = vmatpush1.msra.mxu0 0.0
    %3222 = vmatprep.subr.mxu0 0.0
    %3223 = vmatpush1.msra.mxu0 0.0
    %3224 = vmatprep.subr.mxu0 0.0
    %3225 = vmatpush1.msra.mxu0 0.0
    %3226 = vmatprep.subr.mxu0 0.0
    %3227 = vmatpush1.msra.mxu0 0.0
    %3228 = vmatprep.subr.mxu0 0.0
    %3229 = vmatpush1.msra.mxu0 0.0
    %3230 = vmatprep.subr.mxu0 0.0
    %3231 = vmatpush1.msra.mxu0 0.0
    %3232 = vmatprep.subr.mxu0 0.0
    %3233 = vmatpush1.msra.mxu0 0.0
    %3234 = vmatprep.subr.mxu0 0.0
    %3235 = vmatpush1.msra.mxu0 0.0
    %3236 = vmatprep.subr.mxu0 0.0
    %3237 = vmatpush1.msra.mxu0 0.0
    %3238 = vmatprep.subr.mxu0 0.0
    %3239 = vmatpush1.msra.mxu0 0.0
    %3240 = vmatprep.subr.mxu0 0.0
    %3241 = vmatpush1.msra.mxu0 0.0
    %3242 = vmatprep.subr.mxu0 0.0
    %3243 = vmatpush1.msra.mxu0 0.0
    %3244 = vmatprep.subr.mxu0 0.0
    %3245 = vmatpush1.msra.mxu0 0.0
    %3246 = vmatprep.subr.mxu0 0.0
    %3247 = vmatpush1.msra.mxu0 0.0
    %3248 = vmatprep.subr.mxu0 0.0
    %3249 = vmatpush1.msra.mxu0 0.0
    %3250 = vmatprep.subr.mxu0 0.0
    %3251 = vmatpush1.msra.mxu0 0.0
    %3252 = vmatprep.subr.mxu0 0.0
    %3253 = vmatpush1.msra.mxu0 0.0
    %3254 = vmatprep.subr.mxu0 0.0
    %3255 = vmatpush1.msra.mxu0 0.0
    %3256 = vmatprep.subr.mxu0 0.0
    %3257 = vmatpush1.msra.mxu0 0.0
    %3258 = vmatprep.subr.mxu0 0.0
    %3259 = vmatpush1.msra.mxu0 0.0
    %3260 = vmatprep.mubr.f32.mxu0 0.0
    %3261 = vmatmul.mubr.f32.gmra.mrb[0].mxu0 %v3191
    %v3262 = vpop.f32.mrb[0].mxu0
    %v3263 = vadd.f32 %v3189, %v3262
    %v3264 = vpop.f32.mrb[0].mxu0
    %3265 = vmatprep.mubr.f32.mxu0 0.0
    %3266 = vmatmul.mubr.f32.gmra.mrb[0].mxu0 %v3194
    %v3267 = vpop.f32.mrb[0].mxu0
    %v3268 = vadd.f32 %v3189, %v3267
    %v3269 = vpop.f32.mrb[0].mxu0
    %3270 = vdwg.mxu0
    %v3271 = vadd.f32 %v1627, %v3263
    %v3272 = vadd.f32 %v1628, %v3268
    %v3273 = vsel %vm47, %v3271, 0.0
    %3274 = vadd.xlane.f32.xlu0 %v3273
    %v3275 = vpop.xlane.xlu0 %3274
    %v3276 = vsel %vm47, %v3272, 0.0
    %3277 = vadd.xlane.f32.xlu0 %v3276
    %v3278 = vpop.xlane.xlu0 %3277
    %v3279 = vmul.f32 %v3275, %v1596
    %v3280 = vmul.f32 %v3278, %v1596
    %v3281 = vsub.f32 %v3271, %v3279
    %v3282 = vsub.f32 %v3272, %v3280
    %v3283 = vmul.f32 %v3281, %v3281
    %v3284 = vmul.f32 %v3282, %v3282
    %v3285 = vsel %vm47, %v3283, 0.0
    %3286 = vadd.xlane.f32.xlu0 %v3285
    %v3287 = vpop.xlane.xlu0 %3286
    %v3288 = vsel %vm47, %v3284, 0.0
    %3289 = vadd.xlane.f32.xlu0 %v3288
    %v3290 = vpop.xlane.xlu0 %3289
    %v3291 = vmul.f32 %v3287, %v1596
    %v3292 = vmul.f32 %v3290, %v1596
    %v3293 = vadd.f32 %v3291, 1e-05
    %v3294 = vadd.f32 %v3292, 1e-05
    %v3295 = vrsqrt.pop %v3293
    %v3296 = vrsqrt.pop %v3294
    %v3297 = vmul.f32 %v3281, %v3295
    %v3298 = vmul.f32 %v3282, %v3296
    %v3299 = vmul.f32 %v3297, %v1620
    %v3300 = vmul.f32 %v3298, %v1620
    %v3301 = vadd.f32 %v3299, %v1626
    %v3302 = vadd.f32 %v3300, %v1626
    %v3303 = vld [vmem:[#allocation2 + $0xa0] sm:$0xff]
    %v3304 = vld [vmem:[#allocation2 + $0xa8] sm:$0xff]
    %v3305 = vld [vmem:[#allocation2 + $0xb0] sm:$0xff]
    %v3306 = vld [vmem:[#allocation2 + $0xb8] sm:$0xff]
    %v3307 = vld [vmem:[%s2 + $0x28] sm:$0x1]
    %v3308 = vlaneseq
    %v3309 = vshrl.u32 %v3308, 7
    %v3310 = vsub.s32 0, %v3309
    %v3311 = vrot.slane %v3307, %v3310
    %v3313 = vsel %vm47, %v3301, 0
    %v3316 = vsel %vm47, %v3302, 0
    %3318 = vmatprep.subr.mxu0 0.0
    %3319 = vmatpush1.msra.mxu0 %v3303
    %3320 = vmatprep.subr.mxu0 0.0
    %3321 = vmatpush1.msra.mxu0 %v3304
    %3322 = vmatprep.subr.mxu0 0.0
    %3323 = vmatpush1.msra.mxu0 %v3305
    %3324 = vmatprep.subr.mxu0 0.0
    %3325 = vmatpush1.msra.mxu0 %v3306
    %3326 = vmatprep.subr.mxu0 0.0
    %3327 = vmatpush1.msra.mxu0 0.0
    %3328 = vmatprep.subr.mxu0 0.0
    %3329 = vmatpush1.msra.mxu0 0.0
    %3330 = vmatprep.subr.mxu0 0.0
    %3331 = vmatpush1.msra.mxu0 0.0
    %3332 = vmatprep.subr.mxu0 0.0
    %3333 = vmatpush1.msra.mxu0 0.0
    %3334 = vmatprep.subr.mxu0 0.0
    %3335 = vmatpush1.msra.mxu0 0.0
    %3336 = vmatprep.subr.mxu0 0.0
    %3337 = vmatpush1.msra.mxu0 0.0
    %3338 = vmatprep.subr.mxu0 0.0
    %3339 = vmatpush1.msra.mxu0 0.0
    %3340 = vmatprep.subr.mxu0 0.0
    %3341 = vmatpush1.msra.mxu0 0.0
    %3342 = vmatprep.subr.mxu0 0.0
    %3343 = vmatpush1.msra.mxu0 0.0
    %3344 = vmatprep.subr.mxu0 0.0
    %3345 = vmatpush1.msra.mxu0 0.0
    %3346 = vmatprep.subr.mxu0 0.0
    %3347 = vmatpush1.msra.mxu0 0.0
    %3348 = vmatprep.subr.mxu0 0.0
    %3349 = vmatpush1.msra.mxu0 0.0
    %3350 = vmatprep.subr.mxu0 0.0
    %3351 = vmatpush1.msra.mxu0 0.0
    %3352 = vmatprep.subr.mxu0 0.0
    %3353 = vmatpush1.msra.mxu0 0.0
    %3354 = vmatprep.subr.mxu0 0.0
    %3355 = vmatpush1.msra.mxu0 0.0
    %3356 = vmatprep.subr.mxu0 0.0
    %3357 = vmatpush1.msra.mxu0 0.0
    %3358 = vmatprep.subr.mxu0 0.0
    %3359 = vmatpush1.msra.mxu0 0.0
    %3360 = vmatprep.subr.mxu0 0.0
    %3361 = vmatpush1.msra.mxu0 0.0
    %3362 = vmatprep.subr.mxu0 0.0
    %3363 = vmatpush1.msra.mxu0 0.0
    %3364 = vmatprep.subr.mxu0 0.0
    %3365 = vmatpush1.msra.mxu0 0.0
    %3366 = vmatprep.subr.mxu0 0.0
    %3367 = vmatpush1.msra.mxu0 0.0
    %3368 = vmatprep.subr.mxu0 0.0
    %3369 = vmatpush1.msra.mxu0 0.0
    %3370 = vmatprep.subr.mxu0 0.0
    %3371 = vmatpush1.msra.mxu0 0.0
    %3372 = vmatprep.subr.mxu0 0.0
    %3373 = vmatpush1.msra.mxu0 0.0
    %3374 = vmatprep.subr.mxu0 0.0
    %3375 = vmatpush1.msra.mxu0 0.0
    %3376 = vmatprep.subr.mxu0 0.0
    %3377 = vmatpush1.msra.mxu0 0.0
    %3378 = vmatprep.subr.mxu0 0.0
    %3379 = vmatpush1.msra.mxu0 0.0
    %3380 = vmatprep.subr.mxu0 0.0
    %3381 = vmatpush1.msra.mxu0 0.0
    %3382 = vmatprep.mubr.f32.mxu0 0.0
    %3383 = vmatmul.mubr.f32.gmra.mrb[0].mxu0 %v3313
    %v3384 = vpop.f32.mrb[0].mxu0
    %v3385 = vadd.f32 %v3311, %v3384
    %v3386 = vpop.f32.mrb[0].mxu0
    %3387 = vmatprep.mubr.f32.mxu0 0.0
    %3388 = vmatmul.mubr.f32.gmra.mrb[0].mxu0 %v3316
    %v3389 = vpop.f32.mrb[0].mxu0
    %v3390 = vadd.f32 %v3311, %v3389
    %v3391 = vpop.f32.mrb[0].mxu0
    %3392 = vdwg.mxu0
    %v3393 = vmax.f32 %v3385, 0.0
    %v3394 = vmax.f32 %v3390, 0.0
    %v3395 = vld [vmem:[#allocation2 + $0xc0] sm:$0xff]
    %v3396 = vld [vmem:[#allocation2 + $0xc8] sm:$0xff]
    %v3397 = vld [vmem:[#allocation2 + $0xd0] sm:$0xff]
    %v3398 = vld [vmem:[#allocation2 + $0xd8] sm:$0xff]
    %v3399 = vld [vmem:[#allocation2 + $0xe0] sm:$0xff]
    %v3400 = vld [vmem:[#allocation2 + $0xe8] sm:$0xff]
    %v3401 = vld [vmem:[#allocation2 + $0xf0] sm:$0xff]
    %v3402 = vld [vmem:[#allocation2 + $0xf8] sm:$0xff]
    %v3403 = vld [vmem:[%s2 + $0x30] sm:$0x1]
    %v3404 = vlaneseq
    %v3405 = vshrl.u32 %v3404, 7
    %v3406 = vsub.s32 0, %v3405
    %v3407 = vrot.slane %v3403, %v3406
    %vm3408 = vcmask 523264
    %v3410 = vsel %vm3408, %v3393, 0
    %v3413 = vsel %vm3408, %v3394, 0
    %3415 = vmatprep.subr.mxu0 0.0
    %3416 = vmatpush1.msra.mxu0 %v3395
    %3417 = vmatprep.subr.mxu0 0.0
    %3418 = vmatpush1.msra.mxu0 %v3396
    %3419 = vmatprep.subr.mxu0 0.0
    %3420 = vmatpush1.msra.mxu0 %v3397
    %3421 = vmatprep.subr.mxu0 0.0
    %3422 = vmatpush1.msra.mxu0 %v3398
    %3423 = vmatprep.subr.mxu0 0.0
    %3424 = vmatpush1.msra.mxu0 %v3399
    %3425 = vmatprep.subr.mxu0 0.0
    %3426 = vmatpush1.msra.mxu0 %v3400
    %3427 = vmatprep.subr.mxu0 0.0
    %3428 = vmatpush1.msra.mxu0 %v3401
    %3429 = vmatprep.subr.mxu0 0.0
    %3430 = vmatpush1.msra.mxu0 %v3402
    %3431 = vmatprep.subr.mxu0 0.0
    %3432 = vmatpush1.msra.mxu0 0.0
    %3433 = vmatprep.subr.mxu0 0.0
    %3434 = vmatpush1.msra.mxu0 0.0
    %3435 = vmatprep.subr.mxu0 0.0
    %3436 = vmatpush1.msra.mxu0 0.0
    %3437 = vmatprep.subr.mxu0 0.0
    %3438 = vmatpush1.msra.mxu0 0.0
    %3439 = vmatprep.subr.mxu0 0.0
    %3440 = vmatpush1.msra.mxu0 0.0
    %3441 = vmatprep.subr.mxu0 0.0
    %3442 = vmatpush1.msra.mxu0 0.0
    %3443 = vmatprep.subr.mxu0 0.0
    %3444 = vmatpush1.msra.mxu0 0.0
    %3445 = vmatprep.subr.mxu0 0.0
    %3446 = vmatpush1.msra.mxu0 0.0
    %3447 = vmatprep.subr.mxu0 0.0
    %3448 = vmatpush1.msra.mxu0 0.0
    %3449 = vmatprep.subr.mxu0 0.0
    %3450 = vmatpush1.msra.mxu0 0.0
    %3451 = vmatprep.subr.mxu0 0.0
    %3452 = vmatpush1.msra.mxu0 0.0
    %3453 = vmatprep.subr.mxu0 0.0
    %3454 = vmatpush1.msra.mxu0 0.0
    %3455 = vmatprep.subr.mxu0 0.0
    %3456 = vmatpush1.msra.mxu0 0.0
    %3457 = vmatprep.subr.mxu0 0.0
    %3458 = vmatpush1.msra.mxu0 0.0
    %3459 = vmatprep.subr.mxu0 0.0
    %3460 = vmatpush1.msra.mxu0 0.0
    %3461 = vmatprep.subr.mxu0 0.0
    %3462 = vmatpush1.msra.mxu0 0.0
    %3463 = vmatprep.subr.mxu0 0.0
    %3464 = vmatpush1.msra.mxu0 0.0
    %3465 = vmatprep.subr.mxu0 0.0
    %3466 = vmatpush1.msra.mxu0 0.0
    %3467 = vmatprep.subr.mxu0 0.0
    %3468 = vmatpush1.msra.mxu0 0.0
    %3469 = vmatprep.subr.mxu0 0.0
    %3470 = vmatpush1.msra.mxu0 0.0
    %3471 = vmatprep.subr.mxu0 0.0
    %3472 = vmatpush1.msra.mxu0 0.0
    %3473 = vmatprep.subr.mxu0 0.0
    %3474 = vmatpush1.msra.mxu0 0.0
    %3475 = vmatprep.subr.mxu0 0.0
    %3476 = vmatpush1.msra.mxu0 0.0
    %3477 = vmatprep.subr.mxu0 0.0
    %3478 = vmatpush1.msra.mxu0 0.0
    %3479 = vmatprep.mubr.f32.mxu0 0.0
    %3480 = vmatmul.mubr.f32.gmra.mrb[0].mxu0 %v3410
    %v3481 = vpop.f32.mrb[0].mxu0
    %v3482 = vadd.f32 %v3407, %v3481
    %v3483 = vpop.f32.mrb[0].mxu0
    %3484 = vmatprep.mubr.f32.mxu0 0.0
    %3485 = vmatmul.mubr.f32.gmra.mrb[0].mxu0 %v3413
    %v3486 = vpop.f32.mrb[0].mxu0
    %v3487 = vadd.f32 %v3407, %v3486
    %v3488 = vpop.f32.mrb[0].mxu0
    %3489 = vdwg.mxu0
    %v3490 = vadd.f32 %v3301, %v3482
    %v3491 = vadd.f32 %v3302, %v3487
    %v3492 = vsel %vm47, %v3490, 0.0
    %3493 = vadd.xlane.f32.xlu0 %v3492
    %v3494 = vpop.xlane.xlu0 %3493
    %v3495 = vsel %vm47, %v3491, 0.0
    %3496 = vadd.xlane.f32.xlu0 %v3495
    %v3497 = vpop.xlane.xlu0 %3496
    %v3498 = vmul.f32 %v3494, %v1596
    %v3499 = vmul.f32 %v3497, %v1596
    %v3500 = vsub.f32 %v3490, %v3498
    %v3501 = vsub.f32 %v3491, %v3499
    %v3502 = vmul.f32 %v3500, %v3500
    %v3503 = vmul.f32 %v3501, %v3501
    %v3504 = vsel %vm47, %v3502, 0.0
    %3505 = vadd.xlane.f32.xlu0 %v3504
    %v3506 = vpop.xlane.xlu0 %3505
    %v3507 = vsel %vm47, %v3503, 0.0
    %3508 = vadd.xlane.f32.xlu0 %v3507
    %v3509 = vpop.xlane.xlu0 %3508
    %v3510 = vmul.f32 %v3506, %v1596
    %v3511 = vmul.f32 %v3509, %v1596
    %v3512 = vadd.f32 %v3510, 1e-05
    %v3513 = vadd.f32 %v3511, 1e-05
    %v3514 = vrsqrt.pop %v3512
    %v3515 = vrsqrt.pop %v3513
    %v3516 = vmul.f32 %v3500, %v3514
    %v3517 = vmul.f32 %v3501, %v3515
    %v3518 = vmul.f32 %v3516, %v1620
    %v3519 = vmul.f32 %v3517, %v1620
    %v3520 = vadd.f32 %v3518, %v1626
    %v3521 = vadd.f32 %v3519, %v1626
    %3522 = vst.msk [vmem:[#allocation5] sm:$0xff] %vm47, %v3520
    %3523 = vst.msk [vmem:[#allocation5 + $0x8] sm:$0xff] %vm47, %v3521
    // Predicated region
    $region22: #{decoder_layer.1} parent=1 // pred_check
      _
    $region23: #{decoder_layer.1} parent=1 // pred_check_branch
      %3525 = sbr.rel (0) target = $region25
    $region24: #{decoder_layer.1} parent=1 // pred_region
      %s3527 = ssub.s32 256, 256
      %3528 = vsyncadd [#allocation4], %s3527
      %s3529 = sshll.u32 [#allocation5], 4
      %s3530 = int_to_ptr.vmem [resolvable:$true] %s3529
      %3535 = dma.vmem_to_hbm [thread:$0]  %s3530, 256, %s4, [#allocation4], 128, 128, 8
    $region25: #{decoder_layer.1} parent=1 // pred_fallthru
      _
    // Predicated region
    $region26: #{decoder_layer.1} parent=1 // pred_check
      _
    $region27: #{decoder_layer.1} parent=1 // pred_check_branch
      %3537 = sbr.rel (0) target = $region29
    $region28: #{decoder_layer.1} parent=1 // pred_region
      %3538 = dma.done [#allocation4], 256
    $region29: #{decoder_layer.1} parent=1 // pred_fallthru
      _
    %3539 = vsyncpa [#allocation3], 1
    %3540 = vsyncpa [#allocation4], 1

</llo_original>
